<compile_context>
chip_gen: v6e
topology: v6e:2x2x1
jax: 0.10.0
libtpu: 0.0.40
codegen_flags: <defaults>
</compile_context>

<pallas_src>
import functools

import jax
import jax.numpy as jnp
from jax import lax
from jax.experimental import pallas as pl
from jax.experimental.pallas import tpu as pltpu


# ----------------------------- Pallas kernel -------------------------------

def _mm(a, b):
    # (M, K) @ (K, N): bf16 operands, f32 accumulation.
    return lax.dot_general(a, b, (((1,), (0,)), ((), ())),
                           preferred_element_type=jnp.float32)


def _mm_nt(a, b):
    # (M, K) x (N, K) contracting the last dims of both (a @ b.T without a
    # materialized transpose).
    return lax.dot_general(a, b, (((1,), (1,)), ((), ())),
                           preferred_element_type=jnp.float32)


def _fused_lora_mha_kernel(
        xq_ref, xk_ref, xv_ref,            # (NB*L, E) / (NB*Sp, E) bf16
        wq_ref, wk_ref, wv_ref,            # (H, E, d) bf16  (per-head, (in, d))
        wo_ref,                            # (H, d, Ep) bf16 (lane-padded out-proj)
        bq_ref, bk_ref, bv_ref,            # (H, 1, d) f32
        bo_ref,                            # (1, Ep) f32
        out_ref, w_ref,                    # (NB, L, Ep) f32, (NB, L, Sp) f32
        *, src_len):
    bf16 = jnp.bfloat16
    nb, L, e_pad = out_ref.shape
    s_pad = w_ref.shape[-1]
    H = wq_ref.shape[0]

    xq = xq_ref[...]                       # flattened rows fill the MXU M dim
    xk = xk_ref[...]
    xv = xv_ref[...]

    # Per-head projections for all NB batches at once.  LoRA + Q in-proj +
    # 1/sqrt(d) are already folded into wq, so the query path is one matmul.
    qs, ks, vs, wos = [], [], [], []
    for h in range(H):                     # H is tiny -> static unroll
        qs.append((_mm(xq, wq_ref[h]) + bq_ref[h]).astype(bf16))   # (NB*L, d)
        ks.append((_mm(xk, wk_ref[h]) + bk_ref[h]).astype(bf16))   # (NB*Sp, d)
        vs.append((_mm(xv, wv_ref[h]) + bv_ref[h]).astype(bf16))
        wos.append(wo_ref[h])                                      # (d, Ep)

    if s_pad > src_len:                    # zero-padded key positions
        col = lax.broadcasted_iota(jnp.int32, (L, s_pad), 1)
        pad_mask = col >= src_len

    bo = bo_ref[...]                       # (1, Ep)
    inv_h = 1.0 / H

    for b in range(nb):                    # NB is a small static int
        out_b = jnp.zeros((L, e_pad), jnp.float32)
        w_b = jnp.zeros((L, s_pad), jnp.float32)
        for h in range(H):
            # Aligned sublane (row) slices only -- no lane slicing.
            qb = qs[h][b * L:(b + 1) * L, :]                        # (L, d)
            kb = ks[h][b * s_pad:(b + 1) * s_pad, :]                # (Sp, d)
            vb = vs[h][b * s_pad:(b + 1) * s_pad, :]

            s = _mm_nt(qb, kb)                                      # (L, Sp) f32
            if s_pad > src_len:
                s = jnp.where(pad_mask, -1e30, s)
            m = jnp.max(s, axis=-1, keepdims=True)
            e = jnp.exp(s - m)
            # Exact reciprocal of the (L,1) denominator: negligible cost and
            # keeps the returned attention weights at f32 softmax accuracy.
            p = e * (1.0 / jnp.sum(e, axis=-1, keepdims=True))
            w_b = w_b + p

            oh = _mm(p.astype(bf16), vb)                            # (L, d) f32
            # Fold this head straight into the lane-padded output projection
            # (rows h*d:(h+1)*d of W_out^T) instead of concatenating heads.
            out_b = out_b + _mm(oh.astype(bf16), wos[h])            # (L, Ep)

        out_ref[b] = out_b + bo
        w_ref[b] = w_b * inv_h


# ----------------------------- wrapper --------------------------------------

def _round_up(x, m):
    return ((x + m - 1) // m) * m


def _pick_batch_block(n, q_rows, kv_rows):
    # Largest divisor of n that keeps the Q-projection row block <= 256 and
    # the K/V row block modest (VMEM / live-value bound).
    nb = 1
    for cand in range(1, n + 1):
        if n % cand == 0 and cand * q_rows <= 256 and cand * kv_rows <= 2048:
            nb = cand
    return nb


def lora_mha_forward(query, key, value, params, num_heads):
    L, N, E = query.shape
    S = key.shape[0]
    assert E % num_heads == 0
    d = E // num_heads
    scaling = 1.0 / float(d) ** 0.5
    bf16, f32 = jnp.bfloat16, jnp.float32

    e_pad = _round_up(E, 128)              # lane-dense output block
    s_pad = _round_up(S, 128)              # lane-dense attn-weights block
    nb = _pick_batch_block(N, L, s_pad)
    steps = N // nb
    # TODO(synk): if steps == 1 on v7x, split L as a second "parallel" grid
    # axis so both TensorCores are used.

    # ---- one-time weight prep (f32, outside the kernel) ----
    # LoRA merged into the base q projection, then folded with the Q
    # in-projection and the 1/sqrt(d) scaling:
    #   q = ((x @ Wm^T + b_m) @ Wq^T + bq) * s  ==  x @ Wqf + bqf
    wm = params["q_lora_w"] + params["lora_scale"] * (params["A"] @ params["B"])
    wq, wk, wv = jnp.split(params["in_proj_weight"], 3, axis=0)
    bq, bk, bv = jnp.split(params["in_proj_bias"], 3, axis=0)
    wq_fold = (wm.T @ wq.T) * scaling                          # (E_in, E_out)
    bq_fold = (params["q_lora_b"] @ wq.T + bq) * scaling       # (E,)

    def _heads_in_out(w_in_out):           # (E, E) (in,out) -> (H, E, d)
        return jnp.transpose(w_in_out.reshape(E, num_heads, d), (1, 0, 2))

    wq_h = _heads_in_out(wq_fold).astype(bf16)
    wk_h = _heads_in_out(wk.T).astype(bf16)
    wv_h = _heads_in_out(wv.T).astype(bf16)

    # Output projection: (in, out) layout, out dim zero-padded to e_pad lanes,
    # split per head along the "in" axis.
    wo_t = params["out_proj_w"].T                              # (E, E)
    bo = params["out_proj_b"]
    if e_pad > E:
        wo_t = jnp.pad(wo_t, ((0, 0), (0, e_pad - E)))
        bo = jnp.pad(bo, (0, e_pad - E))
    wo_h = wo_t.reshape(num_heads, d, e_pad).astype(bf16)

    bq_h = bq_fold.reshape(num_heads, 1, d).astype(f32)
    bk_h = bk.reshape(num_heads, 1, d).astype(f32)
    bv_h = bv.reshape(num_heads, 1, d).astype(f32)
    bo_r = bo.reshape(1, e_pad).astype(f32)

    # ---- input layout: batch-major, bf16, K/V zero-padded along S, flattened
    xq = jnp.transpose(query, (1, 0, 2)).astype(bf16).reshape(N * L, E)
    xk3 = jnp.transpose(key, (1, 0, 2)).astype(bf16)           # (N, S, E)
    xv3 = jnp.transpose(value, (1, 0, 2)).astype(bf16)
    if s_pad > S:
        pad = ((0, 0), (0, s_pad - S), (0, 0))
        xk3 = jnp.pad(xk3, pad)
        xv3 = jnp.pad(xv3, pad)
    xk = xk3.reshape(N * s_pad, E)
    xv = xv3.reshape(N * s_pad, E)

    kernel = functools.partial(_fused_lora_mha_kernel, src_len=S)

    rows_q, rows_kv = nb * L, nb * s_pad
    flops = steps * num_heads * (
        2 * rows_q * E * d + 4 * rows_kv * E * d               # Q / K / V proj
        + 4 * nb * L * s_pad * d                               # scores + PV
        + 2 * rows_q * d * e_pad)                              # out-proj fold
    cost = pl.CostEstimate(
        flops=flops,
        transcendentals=N * num_heads * L * s_pad,
        bytes_accessed=((N * L * E + 2 * N * s_pad * E) * 2
                        + (3 * num_heads * E * d + num_heads * d * e_pad) * 2
                        + (3 * E + e_pad) * 4
                        + (N * L * e_pad + N * L * s_pad) * 4),
    )

    head_w_spec = pl.BlockSpec((num_heads, E, d), lambda i: (0, 0, 0))
    head_b_spec = pl.BlockSpec((num_heads, 1, d), lambda i: (0, 0, 0))

    out_p, attn_p = pl.pallas_call(
        kernel,
        grid=(steps,),
        in_specs=[
            pl.BlockSpec((nb * L, E), lambda i: (i, 0)),
            pl.BlockSpec((nb * s_pad, E), lambda i: (i, 0)),
            pl.BlockSpec((nb * s_pad, E), lambda i: (i, 0)),
            head_w_spec, head_w_spec, head_w_spec,
            pl.BlockSpec((num_heads, d, e_pad), lambda i: (0, 0, 0)),
            head_b_spec, head_b_spec, head_b_spec,
            pl.BlockSpec((1, e_pad), lambda i: (0, 0)),
        ],
        out_specs=(
            pl.BlockSpec((nb, L, e_pad), lambda i: (i, 0, 0)),
            pl.BlockSpec((nb, L, s_pad), lambda i: (i, 0, 0)),
        ),
        out_shape=(
            jax.ShapeDtypeStruct((N, L, e_pad), f32),
            jax.ShapeDtypeStruct((N, L, s_pad), f32),
        ),
        compiler_params=pltpu.CompilerParams(
            dimension_semantics=("parallel",),
            vmem_limit_bytes=64 * 1024 * 1024),
        cost_estimate=cost,
    )(xq, xk, xv, wq_h, wk_h, wv_h, wo_h, bq_h, bk_h, bv_h, bo_r)

    out = out_p[..., :E] if e_pad > E else out_p               # (N, L, E)
    attn = attn_p[..., :S] if s_pad > S else attn_p            # (N, L, S)
    # PyTorch MHA layout: (L, N, E), (N, L, S)
    return jnp.transpose(out, (1, 0, 2)), attn


# ----------------------------- pure-JAX reference ----------------------------

def _reference_forward(query, key, value, params, num_heads):
    E = query.shape[-1]
    d = E // num_heads
    scaling = 1.0 / float(d) ** 0.5
    wm = params["q_lora_w"] + params["lora_scale"] * (params["A"] @ params["B"])
    q_in = query @ wm.T + params["q_lora_b"]
    wq, wk, wv = jnp.split(params["in_proj_weight"], 3, axis=0)
    bq, bk, bv = jnp.split(params["in_proj_bias"], 3, axis=0)
    q = (q_in @ wq.T + bq) * scaling
    k = key @ wk.T + bk
    v = value @ wv.T + bv
    L, N, _ = q.shape
    S = k.shape[0]
    qh = jnp.transpose(q.reshape(L, N * num_heads, d), (1, 0, 2))
    kh = jnp.transpose(k.reshape(S, N * num_heads, d), (1, 0, 2))
    vh = jnp.transpose(v.reshape(S, N * num_heads, d), (1, 0, 2))
    attn = jax.nn.softmax(jnp.einsum("bld,bsd->bls", qh, kh), axis=-1)
    ctx = jnp.einsum("bls,bsd->bld", attn, vh)                 # (N*H, L, d)
    out = jnp.transpose(ctx, (1, 0, 2)).reshape(L, N, E)
    out = out @ params["out_proj_w"].T + params["out_proj_b"]
    attn_avg = attn.reshape(N, num_heads, L, S).mean(axis=1)
    return out, attn_avg


# ----------------------------- main ------------------------------------------

if __name__ == "__main__":
    L, S, N = 8, 8, 2          # tgt len, src len, batch
    E, H = 32, 4               # embed dim, num heads
    rank, alpha = 4, 1.0

    keys = jax.random.split(jax.random.PRNGKey(0), 12)
    params = {
        "q_lora_w": jax.random.normal(keys[0], (E, E), jnp.float32) * 0.05,
        "q_lora_b": jax.random.normal(keys[1], (E,), jnp.float32) * 0.05,
        "A": jax.random.normal(keys[2], (E, rank), jnp.float32) * 0.01,
        "B": jax.random.normal(keys[3], (rank, E), jnp.float32) * 0.01,
        "lora_scale": alpha / rank,
        "in_proj_weight": jax.random.normal(keys[4], (3 * E, E), jnp.float32) * 0.05,
        "in_proj_bias": jax.random.normal(keys[5], (3 * E,), jnp.float32) * 0.05,
        "out_proj_w": jax.random.normal(keys[6], (E, E), jnp.float32) * 0.05,
        "out_proj_b": jax.random.normal(keys[7], (E,), jnp.float32) * 0.05,
    }

    query = jax.random.normal(keys[8], (L, N, E), jnp.float32)
    key = jax.random.normal(keys[9], (S, N, E), jnp.float32)
    value = jax.random.normal(keys[10], (S, N, E), jnp.float32)

    forward = jax.jit(lora_mha_forward, static_argnames=("num_heads",))
    out, attn_w = forward(query, key, value, params, num_heads=H)
    jax.block_until_ready((out, attn_w))

    assert out.shape == (L, N, E), out.shape
    assert attn_w.shape == (N, L, S), attn_w.shape

    ref_out, ref_w = _reference_forward(query, key, value, params, H)
    assert jnp.allclose(out, ref_out, atol=2e-2, rtol=2e-2), (
        float(jnp.max(jnp.abs(out - ref_out))))
    assert jnp.allclose(attn_w, ref_w, atol=5e-3, rtol=5e-2), (
        float(jnp.max(jnp.abs(attn_w - ref_w))))

    print("KERNEL_OK")
</pallas_src>

<mosaic_0001>
module attributes {stable_mosaic.version = 11 : i64} {
  func.func @_fused_lora_mha_kernel(%arg0: i32, %arg1: memref<16x32xbf16, #tpu.memory_space<vmem>>, %arg2: memref<256x32xbf16, #tpu.memory_space<vmem>>, %arg3: memref<256x32xbf16, #tpu.memory_space<vmem>>, %arg4: memref<4x32x8xbf16, #tpu.memory_space<vmem>>, %arg5: memref<4x32x8xbf16, #tpu.memory_space<vmem>>, %arg6: memref<4x32x8xbf16, #tpu.memory_space<vmem>>, %arg7: memref<4x8x128xbf16, #tpu.memory_space<vmem>>, %arg8: memref<4x1x8xf32, #tpu.memory_space<vmem>>, %arg9: memref<4x1x8xf32, #tpu.memory_space<vmem>>, %arg10: memref<4x1x8xf32, #tpu.memory_space<vmem>>, %arg11: memref<1x128xf32, #tpu.memory_space<vmem>>, %arg12: memref<2x8x128xf32, #tpu.memory_space<vmem>>, %arg13: memref<2x8x128xf32, #tpu.memory_space<vmem>>) attributes {dimension_semantics = [#tpu.dimension_semantics<parallel>], iteration_bounds = array<i64: 1>, scalar_prefetch = 0 : i64, scratch_operands = 0 : i64, tpu.core_type = #tpu.core_type<tc>, window_params = [{transform_indices = @transform_0, window_bounds = array<i64: 16, 32>}, {transform_indices = @transform_1, window_bounds = array<i64: 256, 32>}, {transform_indices = @transform_2, window_bounds = array<i64: 256, 32>}, {pipeline_mode = #tpu.pipeline_mode<synchronous>, transform_indices = @transform_3, window_bounds = array<i64: 4, 32, 8>}, {pipeline_mode = #tpu.pipeline_mode<synchronous>, transform_indices = @transform_4, window_bounds = array<i64: 4, 32, 8>}, {pipeline_mode = #tpu.pipeline_mode<synchronous>, transform_indices = @transform_5, window_bounds = array<i64: 4, 32, 8>}, {pipeline_mode = #tpu.pipeline_mode<synchronous>, transform_indices = @transform_6, window_bounds = array<i64: 4, 8, 128>}, {pipeline_mode = #tpu.pipeline_mode<synchronous>, transform_indices = @transform_7, window_bounds = array<i64: 4, 1, 8>}, {pipeline_mode = #tpu.pipeline_mode<synchronous>, transform_indices = @transform_8, window_bounds = array<i64: 4, 1, 8>}, {pipeline_mode = #tpu.pipeline_mode<synchronous>, transform_indices = @transform_9, window_bounds = array<i64: 4, 1, 8>}, {pipeline_mode = #tpu.pipeline_mode<synchronous>, transform_indices = @transform_10, window_bounds = array<i64: 1, 128>}, {transform_indices = @transform_11, window_bounds = array<i64: 2, 8, 128>}, {transform_indices = @transform_12, window_bounds = array<i64: 2, 8, 128>}]} {
    %c0 = arith.constant 0 : index
    %c0_0 = arith.constant 0 : index
    %0 = vector.load %arg1[%c0, %c0_0] : memref<16x32xbf16, #tpu.memory_space<vmem>>, vector<16x32xbf16>
    %c0_1 = arith.constant 0 : index
    %c0_2 = arith.constant 0 : index
    %1 = vector.load %arg2[%c0_1, %c0_2] : memref<256x32xbf16, #tpu.memory_space<vmem>>, vector<256x32xbf16>
    %c0_3 = arith.constant 0 : index
    %c0_4 = arith.constant 0 : index
    %2 = vector.load %arg3[%c0_3, %c0_4] : memref<256x32xbf16, #tpu.memory_space<vmem>>, vector<256x32xbf16>
    %c0_5 = arith.constant 0 : index
    %c0_6 = arith.constant 0 : index
    %c0_7 = arith.constant 0 : index
    %3 = vector.load %arg4[%c0_5, %c0_6, %c0_7] : memref<4x32x8xbf16, #tpu.memory_space<vmem>>, vector<1x32x8xbf16>
    %4 = vector.shape_cast %3 : vector<1x32x8xbf16> to vector<32x8xbf16>
    %cst = arith.constant dense<0.000000e+00> : vector<16x8xf32>
    %5 = tpu.matmul %0, %4, %cst {dimension_numbers = #tpu.dot_dimension_numbers<[1], [0], [0], [1], [0, 0, 1, 1], [], []>} : vector<16x32xbf16>, vector<32x8xbf16>, vector<16x8xf32> -> vector<16x8xf32>
    %c0_8 = arith.constant 0 : index
    %c0_9 = arith.constant 0 : index
    %c0_10 = arith.constant 0 : index
    %6 = vector.load %arg8[%c0_8, %c0_9, %c0_10] : memref<4x1x8xf32, #tpu.memory_space<vmem>>, vector<1x1x8xf32>
    %7 = vector.shape_cast %6 : vector<1x1x8xf32> to vector<1x8xf32>
    %8 = vector.broadcast %7 : vector<1x8xf32> to vector<16x8xf32>
    %9 = arith.addf %5, %8 : vector<16x8xf32>
    %10 = arith.truncf %9 : vector<16x8xf32> to vector<16x8xbf16>
    %c0_11 = arith.constant 0 : index
    %c0_12 = arith.constant 0 : index
    %c0_13 = arith.constant 0 : index
    %11 = vector.load %arg5[%c0_11, %c0_12, %c0_13] : memref<4x32x8xbf16, #tpu.memory_space<vmem>>, vector<1x32x8xbf16>
    %12 = vector.shape_cast %11 : vector<1x32x8xbf16> to vector<32x8xbf16>
    %cst_14 = arith.constant dense<0.000000e+00> : vector<256x8xf32>
    %13 = tpu.matmul %1, %12, %cst_14 {dimension_numbers = #tpu.dot_dimension_numbers<[1], [0], [0], [1], [0, 0, 1, 1], [], []>} : vector<256x32xbf16>, vector<32x8xbf16>, vector<256x8xf32> -> vector<256x8xf32>
    %c0_15 = arith.constant 0 : index
    %c0_16 = arith.constant 0 : index
    %c0_17 = arith.constant 0 : index
    %14 = vector.load %arg9[%c0_15, %c0_16, %c0_17] : memref<4x1x8xf32, #tpu.memory_space<vmem>>, vector<1x1x8xf32>
    %15 = vector.shape_cast %14 : vector<1x1x8xf32> to vector<1x8xf32>
    %16 = vector.broadcast %15 : vector<1x8xf32> to vector<256x8xf32>
    %17 = arith.addf %13, %16 : vector<256x8xf32>
    %18 = arith.truncf %17 : vector<256x8xf32> to vector<256x8xbf16>
    %c0_18 = arith.constant 0 : index
    %c0_19 = arith.constant 0 : index
    %c0_20 = arith.constant 0 : index
    %19 = vector.load %arg6[%c0_18, %c0_19, %c0_20] : memref<4x32x8xbf16, #tpu.memory_space<vmem>>, vector<1x32x8xbf16>
    %20 = vector.shape_cast %19 : vector<1x32x8xbf16> to vector<32x8xbf16>
    %cst_21 = arith.constant dense<0.000000e+00> : vector<256x8xf32>
    %21 = tpu.matmul %2, %20, %cst_21 {dimension_numbers = #tpu.dot_dimension_numbers<[1], [0], [0], [1], [0, 0, 1, 1], [], []>} : vector<256x32xbf16>, vector<32x8xbf16>, vector<256x8xf32> -> vector<256x8xf32>
    %c0_22 = arith.constant 0 : index
    %c0_23 = arith.constant 0 : index
    %c0_24 = arith.constant 0 : index
    %22 = vector.load %arg10[%c0_22, %c0_23, %c0_24] : memref<4x1x8xf32, #tpu.memory_space<vmem>>, vector<1x1x8xf32>
    %23 = vector.shape_cast %22 : vector<1x1x8xf32> to vector<1x8xf32>
    %24 = vector.broadcast %23 : vector<1x8xf32> to vector<256x8xf32>
    %25 = arith.addf %21, %24 : vector<256x8xf32>
    %26 = arith.truncf %25 : vector<256x8xf32> to vector<256x8xbf16>
    %c0_25 = arith.constant 0 : index
    %c0_26 = arith.constant 0 : index
    %c0_27 = arith.constant 0 : index
    %27 = vector.load %arg7[%c0_25, %c0_26, %c0_27] : memref<4x8x128xbf16, #tpu.memory_space<vmem>>, vector<1x8x128xbf16>
    %28 = vector.shape_cast %27 : vector<1x8x128xbf16> to vector<8x128xbf16>
    %c1 = arith.constant 1 : index
    %c0_28 = arith.constant 0 : index
    %c0_29 = arith.constant 0 : index
    %29 = vector.load %arg4[%c1, %c0_28, %c0_29] : memref<4x32x8xbf16, #tpu.memory_space<vmem>>, vector<1x32x8xbf16>
    %30 = vector.shape_cast %29 : vector<1x32x8xbf16> to vector<32x8xbf16>
    %cst_30 = arith.constant dense<0.000000e+00> : vector<16x8xf32>
    %31 = tpu.matmul %0, %30, %cst_30 {dimension_numbers = #tpu.dot_dimension_numbers<[1], [0], [0], [1], [0, 0, 1, 1], [], []>} : vector<16x32xbf16>, vector<32x8xbf16>, vector<16x8xf32> -> vector<16x8xf32>
    %c1_31 = arith.constant 1 : index
    %c0_32 = arith.constant 0 : index
    %c0_33 = arith.constant 0 : index
    %32 = vector.load %arg8[%c1_31, %c0_32, %c0_33] : memref<4x1x8xf32, #tpu.memory_space<vmem>>, vector<1x1x8xf32>
    %33 = vector.shape_cast %32 : vector<1x1x8xf32> to vector<1x8xf32>
    %34 = vector.broadcast %33 : vector<1x8xf32> to vector<16x8xf32>
    %35 = arith.addf %31, %34 : vector<16x8xf32>
    %36 = arith.truncf %35 : vector<16x8xf32> to vector<16x8xbf16>
    %c1_34 = arith.constant 1 : index
    %c0_35 = arith.constant 0 : index
    %c0_36 = arith.constant 0 : index
    %37 = vector.load %arg5[%c1_34, %c0_35, %c0_36] : memref<4x32x8xbf16, #tpu.memory_space<vmem>>, vector<1x32x8xbf16>
    %38 = vector.shape_cast %37 : vector<1x32x8xbf16> to vector<32x8xbf16>
    %cst_37 = arith.constant dense<0.000000e+00> : vector<256x8xf32>
    %39 = tpu.matmul %1, %38, %cst_37 {dimension_numbers = #tpu.dot_dimension_numbers<[1], [0], [0], [1], [0, 0, 1, 1], [], []>} : vector<256x32xbf16>, vector<32x8xbf16>, vector<256x8xf32> -> vector<256x8xf32>
    %c1_38 = arith.constant 1 : index
    %c0_39 = arith.constant 0 : index
    %c0_40 = arith.constant 0 : index
    %40 = vector.load %arg9[%c1_38, %c0_39, %c0_40] : memref<4x1x8xf32, #tpu.memory_space<vmem>>, vector<1x1x8xf32>
    %41 = vector.shape_cast %40 : vector<1x1x8xf32> to vector<1x8xf32>
    %42 = vector.broadcast %41 : vector<1x8xf32> to vector<256x8xf32>
    %43 = arith.addf %39, %42 : vector<256x8xf32>
    %44 = arith.truncf %43 : vector<256x8xf32> to vector<256x8xbf16>
    %c1_41 = arith.constant 1 : index
    %c0_42 = arith.constant 0 : index
    %c0_43 = arith.constant 0 : index
    %45 = vector.load %arg6[%c1_41, %c0_42, %c0_43] : memref<4x32x8xbf16, #tpu.memory_space<vmem>>, vector<1x32x8xbf16>
    %46 = vector.shape_cast %45 : vector<1x32x8xbf16> to vector<32x8xbf16>
    %cst_44 = arith.constant dense<0.000000e+00> : vector<256x8xf32>
    %47 = tpu.matmul %2, %46, %cst_44 {dimension_numbers = #tpu.dot_dimension_numbers<[1], [0], [0], [1], [0, 0, 1, 1], [], []>} : vector<256x32xbf16>, vector<32x8xbf16>, vector<256x8xf32> -> vector<256x8xf32>
    %c1_45 = arith.constant 1 : index
    %c0_46 = arith.constant 0 : index
    %c0_47 = arith.constant 0 : index
    %48 = vector.load %arg10[%c1_45, %c0_46, %c0_47] : memref<4x1x8xf32, #tpu.memory_space<vmem>>, vector<1x1x8xf32>
    %49 = vector.shape_cast %48 : vector<1x1x8xf32> to vector<1x8xf32>
    %50 = vector.broadcast %49 : vector<1x8xf32> to vector<256x8xf32>
    %51 = arith.addf %47, %50 : vector<256x8xf32>
    %52 = arith.truncf %51 : vector<256x8xf32> to vector<256x8xbf16>
    %c1_48 = arith.constant 1 : index
    %c0_49 = arith.constant 0 : index
    %c0_50 = arith.constant 0 : index
    %53 = vector.load %arg7[%c1_48, %c0_49, %c0_50] : memref<4x8x128xbf16, #tpu.memory_space<vmem>>, vector<1x8x128xbf16>
    %54 = vector.shape_cast %53 : vector<1x8x128xbf16> to vector<8x128xbf16>
    %c2 = arith.constant 2 : index
    %c0_51 = arith.constant 0 : index
    %c0_52 = arith.constant 0 : index
    %55 = vector.load %arg4[%c2, %c0_51, %c0_52] : memref<4x32x8xbf16, #tpu.memory_space<vmem>>, vector<1x32x8xbf16>
    %56 = vector.shape_cast %55 : vector<1x32x8xbf16> to vector<32x8xbf16>
    %cst_53 = arith.constant dense<0.000000e+00> : vector<16x8xf32>
    %57 = tpu.matmul %0, %56, %cst_53 {dimension_numbers = #tpu.dot_dimension_numbers<[1], [0], [0], [1], [0, 0, 1, 1], [], []>} : vector<16x32xbf16>, vector<32x8xbf16>, vector<16x8xf32> -> vector<16x8xf32>
    %c2_54 = arith.constant 2 : index
    %c0_55 = arith.constant 0 : index
    %c0_56 = arith.constant 0 : index
    %58 = vector.load %arg8[%c2_54, %c0_55, %c0_56] : memref<4x1x8xf32, #tpu.memory_space<vmem>>, vector<1x1x8xf32>
    %59 = vector.shape_cast %58 : vector<1x1x8xf32> to vector<1x8xf32>
    %60 = vector.broadcast %59 : vector<1x8xf32> to vector<16x8xf32>
    %61 = arith.addf %57, %60 : vector<16x8xf32>
    %62 = arith.truncf %61 : vector<16x8xf32> to vector<16x8xbf16>
    %c2_57 = arith.constant 2 : index
    %c0_58 = arith.constant 0 : index
    %c0_59 = arith.constant 0 : index
    %63 = vector.load %arg5[%c2_57, %c0_58, %c0_59] : memref<4x32x8xbf16, #tpu.memory_space<vmem>>, vector<1x32x8xbf16>
    %64 = vector.shape_cast %63 : vector<1x32x8xbf16> to vector<32x8xbf16>
    %cst_60 = arith.constant dense<0.000000e+00> : vector<256x8xf32>
    %65 = tpu.matmul %1, %64, %cst_60 {dimension_numbers = #tpu.dot_dimension_numbers<[1], [0], [0], [1], [0, 0, 1, 1], [], []>} : vector<256x32xbf16>, vector<32x8xbf16>, vector<256x8xf32> -> vector<256x8xf32>
    %c2_61 = arith.constant 2 : index
    %c0_62 = arith.constant 0 : index
    %c0_63 = arith.constant 0 : index
    %66 = vector.load %arg9[%c2_61, %c0_62, %c0_63] : memref<4x1x8xf32, #tpu.memory_space<vmem>>, vector<1x1x8xf32>
    %67 = vector.shape_cast %66 : vector<1x1x8xf32> to vector<1x8xf32>
    %68 = vector.broadcast %67 : vector<1x8xf32> to vector<256x8xf32>
    %69 = arith.addf %65, %68 : vector<256x8xf32>
    %70 = arith.truncf %69 : vector<256x8xf32> to vector<256x8xbf16>
    %c2_64 = arith.constant 2 : index
    %c0_65 = arith.constant 0 : index
    %c0_66 = arith.constant 0 : index
    %71 = vector.load %arg6[%c2_64, %c0_65, %c0_66] : memref<4x32x8xbf16, #tpu.memory_space<vmem>>, vector<1x32x8xbf16>
    %72 = vector.shape_cast %71 : vector<1x32x8xbf16> to vector<32x8xbf16>
    %cst_67 = arith.constant dense<0.000000e+00> : vector<256x8xf32>
    %73 = tpu.matmul %2, %72, %cst_67 {dimension_numbers = #tpu.dot_dimension_numbers<[1], [0], [0], [1], [0, 0, 1, 1], [], []>} : vector<256x32xbf16>, vector<32x8xbf16>, vector<256x8xf32> -> vector<256x8xf32>
    %c2_68 = arith.constant 2 : index
    %c0_69 = arith.constant 0 : index
    %c0_70 = arith.constant 0 : index
    %74 = vector.load %arg10[%c2_68, %c0_69, %c0_70] : memref<4x1x8xf32, #tpu.memory_space<vmem>>, vector<1x1x8xf32>
    %75 = vector.shape_cast %74 : vector<1x1x8xf32> to vector<1x8xf32>
    %76 = vector.broadcast %75 : vector<1x8xf32> to vector<256x8xf32>
    %77 = arith.addf %73, %76 : vector<256x8xf32>
    %78 = arith.truncf %77 : vector<256x8xf32> to vector<256x8xbf16>
    %c2_71 = arith.constant 2 : index
    %c0_72 = arith.constant 0 : index
    %c0_73 = arith.constant 0 : index
    %79 = vector.load %arg7[%c2_71, %c0_72, %c0_73] : memref<4x8x128xbf16, #tpu.memory_space<vmem>>, vector<1x8x128xbf16>
    %80 = vector.shape_cast %79 : vector<1x8x128xbf16> to vector<8x128xbf16>
    %c3 = arith.constant 3 : index
    %c0_74 = arith.constant 0 : index
    %c0_75 = arith.constant 0 : index
    %81 = vector.load %arg4[%c3, %c0_74, %c0_75] : memref<4x32x8xbf16, #tpu.memory_space<vmem>>, vector<1x32x8xbf16>
    %82 = vector.shape_cast %81 : vector<1x32x8xbf16> to vector<32x8xbf16>
    %cst_76 = arith.constant dense<0.000000e+00> : vector<16x8xf32>
    %83 = tpu.matmul %0, %82, %cst_76 {dimension_numbers = #tpu.dot_dimension_numbers<[1], [0], [0], [1], [0, 0, 1, 1], [], []>} : vector<16x32xbf16>, vector<32x8xbf16>, vector<16x8xf32> -> vector<16x8xf32>
    %c3_77 = arith.constant 3 : index
    %c0_78 = arith.constant 0 : index
    %c0_79 = arith.constant 0 : index
    %84 = vector.load %arg8[%c3_77, %c0_78, %c0_79] : memref<4x1x8xf32, #tpu.memory_space<vmem>>, vector<1x1x8xf32>
    %85 = vector.shape_cast %84 : vector<1x1x8xf32> to vector<1x8xf32>
    %86 = vector.broadcast %85 : vector<1x8xf32> to vector<16x8xf32>
    %87 = arith.addf %83, %86 : vector<16x8xf32>
    %88 = arith.truncf %87 : vector<16x8xf32> to vector<16x8xbf16>
    %c3_80 = arith.constant 3 : index
    %c0_81 = arith.constant 0 : index
    %c0_82 = arith.constant 0 : index
    %89 = vector.load %arg5[%c3_80, %c0_81, %c0_82] : memref<4x32x8xbf16, #tpu.memory_space<vmem>>, vector<1x32x8xbf16>
    %90 = vector.shape_cast %89 : vector<1x32x8xbf16> to vector<32x8xbf16>
    %cst_83 = arith.constant dense<0.000000e+00> : vector<256x8xf32>
    %91 = tpu.matmul %1, %90, %cst_83 {dimension_numbers = #tpu.dot_dimension_numbers<[1], [0], [0], [1], [0, 0, 1, 1], [], []>} : vector<256x32xbf16>, vector<32x8xbf16>, vector<256x8xf32> -> vector<256x8xf32>
    %c3_84 = arith.constant 3 : index
    %c0_85 = arith.constant 0 : index
    %c0_86 = arith.constant 0 : index
    %92 = vector.load %arg9[%c3_84, %c0_85, %c0_86] : memref<4x1x8xf32, #tpu.memory_space<vmem>>, vector<1x1x8xf32>
    %93 = vector.shape_cast %92 : vector<1x1x8xf32> to vector<1x8xf32>
    %94 = vector.broadcast %93 : vector<1x8xf32> to vector<256x8xf32>
    %95 = arith.addf %91, %94 : vector<256x8xf32>
    %96 = arith.truncf %95 : vector<256x8xf32> to vector<256x8xbf16>
    %c3_87 = arith.constant 3 : index
    %c0_88 = arith.constant 0 : index
    %c0_89 = arith.constant 0 : index
    %97 = vector.load %arg6[%c3_87, %c0_88, %c0_89] : memref<4x32x8xbf16, #tpu.memory_space<vmem>>, vector<1x32x8xbf16>
    %98 = vector.shape_cast %97 : vector<1x32x8xbf16> to vector<32x8xbf16>
    %cst_90 = arith.constant dense<0.000000e+00> : vector<256x8xf32>
    %99 = tpu.matmul %2, %98, %cst_90 {dimension_numbers = #tpu.dot_dimension_numbers<[1], [0], [0], [1], [0, 0, 1, 1], [], []>} : vector<256x32xbf16>, vector<32x8xbf16>, vector<256x8xf32> -> vector<256x8xf32>
    %c3_91 = arith.constant 3 : index
    %c0_92 = arith.constant 0 : index
    %c0_93 = arith.constant 0 : index
    %100 = vector.load %arg10[%c3_91, %c0_92, %c0_93] : memref<4x1x8xf32, #tpu.memory_space<vmem>>, vector<1x1x8xf32>
    %101 = vector.shape_cast %100 : vector<1x1x8xf32> to vector<1x8xf32>
    %102 = vector.broadcast %101 : vector<1x8xf32> to vector<256x8xf32>
    %103 = arith.addf %99, %102 : vector<256x8xf32>
    %104 = arith.truncf %103 : vector<256x8xf32> to vector<256x8xbf16>
    %c3_94 = arith.constant 3 : index
    %c0_95 = arith.constant 0 : index
    %c0_96 = arith.constant 0 : index
    %105 = vector.load %arg7[%c3_94, %c0_95, %c0_96] : memref<4x8x128xbf16, #tpu.memory_space<vmem>>, vector<1x8x128xbf16>
    %106 = vector.shape_cast %105 : vector<1x8x128xbf16> to vector<8x128xbf16>
    %107 = tpu.iota {dimensions = array<i32: 1>} : vector<8x128xi32>
    %c8_i32 = arith.constant 8 : i32
    %108 = vector.broadcast %c8_i32 : i32 to vector<8x128xi32>
    %109 = arith.cmpi sge, %107, %108 : vector<8x128xi32>
    %c0_97 = arith.constant 0 : index
    %c0_98 = arith.constant 0 : index
    %110 = vector.load %arg11[%c0_97, %c0_98] : memref<1x128xf32, #tpu.memory_space<vmem>>, vector<1x128xf32>
    %cst_99 = arith.constant 0.000000e+00 : f32
    %111 = vector.broadcast %cst_99 : f32 to vector<8x128xf32>
    %cst_100 = arith.constant 0.000000e+00 : f32
    %112 = vector.broadcast %cst_100 : f32 to vector<8x128xf32>
    %113 = vector.extract_strided_slice %10 {offsets = [0, 0], sizes = [8, 8], strides = [1, 1]} : vector<16x8xbf16> to vector<8x8xbf16>
    %114 = vector.extract_strided_slice %18 {offsets = [0, 0], sizes = [128, 8], strides = [1, 1]} : vector<256x8xbf16> to vector<128x8xbf16>
    %115 = vector.extract_strided_slice %26 {offsets = [0, 0], sizes = [128, 8], strides = [1, 1]} : vector<256x8xbf16> to vector<128x8xbf16>
    %cst_101 = arith.constant dense<0.000000e+00> : vector<8x128xf32>
    %116 = tpu.matmul %113, %114, %cst_101 {dimension_numbers = #tpu.dot_dimension_numbers<[1], [1], [0], [0], [0, 0, 1, 0], [], []>} : vector<8x8xbf16>, vector<128x8xbf16>, vector<8x128xf32> -> vector<8x128xf32>
    %cst_102 = arith.constant -1.000000e+30 : f32
    %117 = vector.broadcast %cst_102 : f32 to vector<8x128xf32>
    %118 = arith.select %109, %117, %116 : vector<8x128xi1>, vector<8x128xf32>
    %cst_103 = arith.constant dense<0xFF800000> : vector<8xf32>
    %119 = vector.multi_reduction <maximumf>, %118, %cst_103 [1] : vector<8x128xf32> to vector<8xf32>
    %120 = vector.shape_cast %119 : vector<8xf32> to vector<8x1xf32>
    %121 = vector.broadcast %120 : vector<8x1xf32> to vector<8x128xf32>
    %122 = arith.subf %118, %121 : vector<8x128xf32>
    %123 = math.exp %122 : vector<8x128xf32>
    %cst_104 = arith.constant dense<0.000000e+00> : vector<8xf32>
    %124 = vector.multi_reduction <add>, %123, %cst_104 [1] : vector<8x128xf32> to vector<8xf32>
    %125 = vector.shape_cast %124 : vector<8xf32> to vector<8x1xf32>
    %cst_105 = arith.constant 1.000000e+00 : f32
    %126 = vector.broadcast %cst_105 : f32 to vector<8x1xf32>
    %127 = arith.divf %126, %125 : vector<8x1xf32>
    %128 = vector.broadcast %127 : vector<8x1xf32> to vector<8x128xf32>
    %129 = arith.mulf %123, %128 : vector<8x128xf32>
    %130 = arith.addf %112, %129 : vector<8x128xf32>
    %131 = arith.truncf %129 : vector<8x128xf32> to vector<8x128xbf16>
    %cst_106 = arith.constant dense<0.000000e+00> : vector<8x8xf32>
    %132 = tpu.matmul %131, %115, %cst_106 {dimension_numbers = #tpu.dot_dimension_numbers<[1], [0], [0], [1], [0, 0, 1, 1], [], []>} : vector<8x128xbf16>, vector<128x8xbf16>, vector<8x8xf32> -> vector<8x8xf32>
    %133 = arith.truncf %132 : vector<8x8xf32> to vector<8x8xbf16>
    %cst_107 = arith.constant dense<0.000000e+00> : vector<8x128xf32>
    %134 = tpu.matmul %133, %28, %cst_107 {dimension_numbers = #tpu.dot_dimension_numbers<[1], [0], [0], [1], [0, 0, 1, 1], [], []>} : vector<8x8xbf16>, vector<8x128xbf16>, vector<8x128xf32> -> vector<8x128xf32>
    %135 = arith.addf %111, %134 : vector<8x128xf32>
    %136 = vector.extract_strided_slice %36 {offsets = [0, 0], sizes = [8, 8], strides = [1, 1]} : vector<16x8xbf16> to vector<8x8xbf16>
    %137 = vector.extract_strided_slice %44 {offsets = [0, 0], sizes = [128, 8], strides = [1, 1]} : vector<256x8xbf16> to vector<128x8xbf16>
    %138 = vector.extract_strided_slice %52 {offsets = [0, 0], sizes = [128, 8], strides = [1, 1]} : vector<256x8xbf16> to vector<128x8xbf16>
    %cst_108 = arith.constant dense<0.000000e+00> : vector<8x128xf32>
    %139 = tpu.matmul %136, %137, %cst_108 {dimension_numbers = #tpu.dot_dimension_numbers<[1], [1], [0], [0], [0, 0, 1, 0], [], []>} : vector<8x8xbf16>, vector<128x8xbf16>, vector<8x128xf32> -> vector<8x128xf32>
    %cst_109 = arith.constant -1.000000e+30 : f32
    %140 = vector.broadcast %cst_109 : f32 to vector<8x128xf32>
    %141 = arith.select %109, %140, %139 : vector<8x128xi1>, vector<8x128xf32>
    %cst_110 = arith.constant dense<0xFF800000> : vector<8xf32>
    %142 = vector.multi_reduction <maximumf>, %141, %cst_110 [1] : vector<8x128xf32> to vector<8xf32>
    %143 = vector.shape_cast %142 : vector<8xf32> to vector<8x1xf32>
    %144 = vector.broadcast %143 : vector<8x1xf32> to vector<8x128xf32>
    %145 = arith.subf %141, %144 : vector<8x128xf32>
    %146 = math.exp %145 : vector<8x128xf32>
    %cst_111 = arith.constant dense<0.000000e+00> : vector<8xf32>
    %147 = vector.multi_reduction <add>, %146, %cst_111 [1] : vector<8x128xf32> to vector<8xf32>
    %148 = vector.shape_cast %147 : vector<8xf32> to vector<8x1xf32>
    %cst_112 = arith.constant 1.000000e+00 : f32
    %149 = vector.broadcast %cst_112 : f32 to vector<8x1xf32>
    %150 = arith.divf %149, %148 : vector<8x1xf32>
    %151 = vector.broadcast %150 : vector<8x1xf32> to vector<8x128xf32>
    %152 = arith.mulf %146, %151 : vector<8x128xf32>
    %153 = arith.addf %130, %152 : vector<8x128xf32>
    %154 = arith.truncf %152 : vector<8x128xf32> to vector<8x128xbf16>
    %cst_113 = arith.constant dense<0.000000e+00> : vector<8x8xf32>
    %155 = tpu.matmul %154, %138, %cst_113 {dimension_numbers = #tpu.dot_dimension_numbers<[1], [0], [0], [1], [0, 0, 1, 1], [], []>} : vector<8x128xbf16>, vector<128x8xbf16>, vector<8x8xf32> -> vector<8x8xf32>
    %156 = arith.truncf %155 : vector<8x8xf32> to vector<8x8xbf16>
    %cst_114 = arith.constant dense<0.000000e+00> : vector<8x128xf32>
    %157 = tpu.matmul %156, %54, %cst_114 {dimension_numbers = #tpu.dot_dimension_numbers<[1], [0], [0], [1], [0, 0, 1, 1], [], []>} : vector<8x8xbf16>, vector<8x128xbf16>, vector<8x128xf32> -> vector<8x128xf32>
    %158 = arith.addf %135, %157 : vector<8x128xf32>
    %159 = vector.extract_strided_slice %62 {offsets = [0, 0], sizes = [8, 8], strides = [1, 1]} : vector<16x8xbf16> to vector<8x8xbf16>
    %160 = vector.extract_strided_slice %70 {offsets = [0, 0], sizes = [128, 8], strides = [1, 1]} : vector<256x8xbf16> to vector<128x8xbf16>
    %161 = vector.extract_strided_slice %78 {offsets = [0, 0], sizes = [128, 8], strides = [1, 1]} : vector<256x8xbf16> to vector<128x8xbf16>
    %cst_115 = arith.constant dense<0.000000e+00> : vector<8x128xf32>
    %162 = tpu.matmul %159, %160, %cst_115 {dimension_numbers = #tpu.dot_dimension_numbers<[1], [1], [0], [0], [0, 0, 1, 0], [], []>} : vector<8x8xbf16>, vector<128x8xbf16>, vector<8x128xf32> -> vector<8x128xf32>
    %cst_116 = arith.constant -1.000000e+30 : f32
    %163 = vector.broadcast %cst_116 : f32 to vector<8x128xf32>
    %164 = arith.select %109, %163, %162 : vector<8x128xi1>, vector<8x128xf32>
    %cst_117 = arith.constant dense<0xFF800000> : vector<8xf32>
    %165 = vector.multi_reduction <maximumf>, %164, %cst_117 [1] : vector<8x128xf32> to vector<8xf32>
    %166 = vector.shape_cast %165 : vector<8xf32> to vector<8x1xf32>
    %167 = vector.broadcast %166 : vector<8x1xf32> to vector<8x128xf32>
    %168 = arith.subf %164, %167 : vector<8x128xf32>
    %169 = math.exp %168 : vector<8x128xf32>
    %cst_118 = arith.constant dense<0.000000e+00> : vector<8xf32>
    %170 = vector.multi_reduction <add>, %169, %cst_118 [1] : vector<8x128xf32> to vector<8xf32>
    %171 = vector.shape_cast %170 : vector<8xf32> to vector<8x1xf32>
    %cst_119 = arith.constant 1.000000e+00 : f32
    %172 = vector.broadcast %cst_119 : f32 to vector<8x1xf32>
    %173 = arith.divf %172, %171 : vector<8x1xf32>
    %174 = vector.broadcast %173 : vector<8x1xf32> to vector<8x128xf32>
    %175 = arith.mulf %169, %174 : vector<8x128xf32>
    %176 = arith.addf %153, %175 : vector<8x128xf32>
    %177 = arith.truncf %175 : vector<8x128xf32> to vector<8x128xbf16>
    %cst_120 = arith.constant dense<0.000000e+00> : vector<8x8xf32>
    %178 = tpu.matmul %177, %161, %cst_120 {dimension_numbers = #tpu.dot_dimension_numbers<[1], [0], [0], [1], [0, 0, 1, 1], [], []>} : vector<8x128xbf16>, vector<128x8xbf16>, vector<8x8xf32> -> vector<8x8xf32>
    %179 = arith.truncf %178 : vector<8x8xf32> to vector<8x8xbf16>
    %cst_121 = arith.constant dense<0.000000e+00> : vector<8x128xf32>
    %180 = tpu.matmul %179, %80, %cst_121 {dimension_numbers = #tpu.dot_dimension_numbers<[1], [0], [0], [1], [0, 0, 1, 1], [], []>} : vector<8x8xbf16>, vector<8x128xbf16>, vector<8x128xf32> -> vector<8x128xf32>
    %181 = arith.addf %158, %180 : vector<8x128xf32>
    %182 = vector.extract_strided_slice %88 {offsets = [0, 0], sizes = [8, 8], strides = [1, 1]} : vector<16x8xbf16> to vector<8x8xbf16>
    %183 = vector.extract_strided_slice %96 {offsets = [0, 0], sizes = [128, 8], strides = [1, 1]} : vector<256x8xbf16> to vector<128x8xbf16>
    %184 = vector.extract_strided_slice %104 {offsets = [0, 0], sizes = [128, 8], strides = [1, 1]} : vector<256x8xbf16> to vector<128x8xbf16>
    %cst_122 = arith.constant dense<0.000000e+00> : vector<8x128xf32>
    %185 = tpu.matmul %182, %183, %cst_122 {dimension_numbers = #tpu.dot_dimension_numbers<[1], [1], [0], [0], [0, 0, 1, 0], [], []>} : vector<8x8xbf16>, vector<128x8xbf16>, vector<8x128xf32> -> vector<8x128xf32>
    %cst_123 = arith.constant -1.000000e+30 : f32
    %186 = vector.broadcast %cst_123 : f32 to vector<8x128xf32>
    %187 = arith.select %109, %186, %185 : vector<8x128xi1>, vector<8x128xf32>
    %cst_124 = arith.constant dense<0xFF800000> : vector<8xf32>
    %188 = vector.multi_reduction <maximumf>, %187, %cst_124 [1] : vector<8x128xf32> to vector<8xf32>
    %189 = vector.shape_cast %188 : vector<8xf32> to vector<8x1xf32>
    %190 = vector.broadcast %189 : vector<8x1xf32> to vector<8x128xf32>
    %191 = arith.subf %187, %190 : vector<8x128xf32>
    %192 = math.exp %191 : vector<8x128xf32>
    %cst_125 = arith.constant dense<0.000000e+00> : vector<8xf32>
    %193 = vector.multi_reduction <add>, %192, %cst_125 [1] : vector<8x128xf32> to vector<8xf32>
    %194 = vector.shape_cast %193 : vector<8xf32> to vector<8x1xf32>
    %cst_126 = arith.constant 1.000000e+00 : f32
    %195 = vector.broadcast %cst_126 : f32 to vector<8x1xf32>
    %196 = arith.divf %195, %194 : vector<8x1xf32>
    %197 = vector.broadcast %196 : vector<8x1xf32> to vector<8x128xf32>
    %198 = arith.mulf %192, %197 : vector<8x128xf32>
    %199 = arith.addf %176, %198 : vector<8x128xf32>
    %200 = arith.truncf %198 : vector<8x128xf32> to vector<8x128xbf16>
    %cst_127 = arith.constant dense<0.000000e+00> : vector<8x8xf32>
    %201 = tpu.matmul %200, %184, %cst_127 {dimension_numbers = #tpu.dot_dimension_numbers<[1], [0], [0], [1], [0, 0, 1, 1], [], []>} : vector<8x128xbf16>, vector<128x8xbf16>, vector<8x8xf32> -> vector<8x8xf32>
    %202 = arith.truncf %201 : vector<8x8xf32> to vector<8x8xbf16>
    %cst_128 = arith.constant dense<0.000000e+00> : vector<8x128xf32>
    %203 = tpu.matmul %202, %106, %cst_128 {dimension_numbers = #tpu.dot_dimension_numbers<[1], [0], [0], [1], [0, 0, 1, 1], [], []>} : vector<8x8xbf16>, vector<8x128xbf16>, vector<8x128xf32> -> vector<8x128xf32>
    %204 = arith.addf %181, %203 : vector<8x128xf32>
    %205 = vector.broadcast %110 : vector<1x128xf32> to vector<8x128xf32>
    %206 = arith.addf %204, %205 : vector<8x128xf32>
    %c0_129 = arith.constant 0 : index
    %c0_130 = arith.constant 0 : index
    %c0_131 = arith.constant 0 : index
    %207 = vector.load %arg12[%c0_129, %c0_130, %c0_131] : memref<2x8x128xf32, #tpu.memory_space<vmem>>, vector<1x8x128xf32>
    %208 = vector.shape_cast %207 : vector<1x8x128xf32> to vector<8x128xf32>
    %209 = vector.shape_cast %206 : vector<8x128xf32> to vector<1x8x128xf32>
    tpu.vector_store %arg12[%c0_129, %c0_130, %c0_131], %209 {strides = array<i32>} : memref<2x8x128xf32, #tpu.memory_space<vmem>>, vector<1x8x128xf32>,
    %cst_132 = arith.constant 2.500000e-01 : f32
    %210 = vector.broadcast %cst_132 : f32 to vector<8x128xf32>
    %211 = arith.mulf %199, %210 : vector<8x128xf32>
    %c0_133 = arith.constant 0 : index
    %c0_134 = arith.constant 0 : index
    %c0_135 = arith.constant 0 : index
    %212 = vector.load %arg13[%c0_133, %c0_134, %c0_135] : memref<2x8x128xf32, #tpu.memory_space<vmem>>, vector<1x8x128xf32>
    %213 = vector.shape_cast %212 : vector<1x8x128xf32> to vector<8x128xf32>
    %214 = vector.shape_cast %211 : vector<8x128xf32> to vector<1x8x128xf32>
    tpu.vector_store %arg13[%c0_133, %c0_134, %c0_135], %214 {strides = array<i32>} : memref<2x8x128xf32, #tpu.memory_space<vmem>>, vector<1x8x128xf32>,
    %cst_136 = arith.constant 0.000000e+00 : f32
    %215 = vector.broadcast %cst_136 : f32 to vector<8x128xf32>
    %cst_137 = arith.constant 0.000000e+00 : f32
    %216 = vector.broadcast %cst_137 : f32 to vector<8x128xf32>
    %217 = vector.extract_strided_slice %10 {offsets = [8, 0], sizes = [8, 8], strides = [1, 1]} : vector<16x8xbf16> to vector<8x8xbf16>
    %218 = vector.extract_strided_slice %18 {offsets = [128, 0], sizes = [128, 8], strides = [1, 1]} : vector<256x8xbf16> to vector<128x8xbf16>
    %219 = vector.extract_strided_slice %26 {offsets = [128, 0], sizes = [128, 8], strides = [1, 1]} : vector<256x8xbf16> to vector<128x8xbf16>
    %cst_138 = arith.constant dense<0.000000e+00> : vector<8x128xf32>
    %220 = tpu.matmul %217, %218, %cst_138 {dimension_numbers = #tpu.dot_dimension_numbers<[1], [1], [0], [0], [0, 0, 1, 0], [], []>} : vector<8x8xbf16>, vector<128x8xbf16>, vector<8x128xf32> -> vector<8x128xf32>
    %cst_139 = arith.constant -1.000000e+30 : f32
    %221 = vector.broadcast %cst_139 : f32 to vector<8x128xf32>
    %222 = arith.select %109, %221, %220 : vector<8x128xi1>, vector<8x128xf32>
    %cst_140 = arith.constant dense<0xFF800000> : vector<8xf32>
    %223 = vector.multi_reduction <maximumf>, %222, %cst_140 [1] : vector<8x128xf32> to vector<8xf32>
    %224 = vector.shape_cast %223 : vector<8xf32> to vector<8x1xf32>
    %225 = vector.broadcast %224 : vector<8x1xf32> to vector<8x128xf32>
    %226 = arith.subf %222, %225 : vector<8x128xf32>
    %227 = math.exp %226 : vector<8x128xf32>
    %cst_141 = arith.constant dense<0.000000e+00> : vector<8xf32>
    %228 = vector.multi_reduction <add>, %227, %cst_141 [1] : vector<8x128xf32> to vector<8xf32>
    %229 = vector.shape_cast %228 : vector<8xf32> to vector<8x1xf32>
    %cst_142 = arith.constant 1.000000e+00 : f32
    %230 = vector.broadcast %cst_142 : f32 to vector<8x1xf32>
    %231 = arith.divf %230, %229 : vector<8x1xf32>
    %232 = vector.broadcast %231 : vector<8x1xf32> to vector<8x128xf32>
    %233 = arith.mulf %227, %232 : vector<8x128xf32>
    %234 = arith.addf %216, %233 : vector<8x128xf32>
    %235 = arith.truncf %233 : vector<8x128xf32> to vector<8x128xbf16>
    %cst_143 = arith.constant dense<0.000000e+00> : vector<8x8xf32>
    %236 = tpu.matmul %235, %219, %cst_143 {dimension_numbers = #tpu.dot_dimension_numbers<[1], [0], [0], [1], [0, 0, 1, 1], [], []>} : vector<8x128xbf16>, vector<128x8xbf16>, vector<8x8xf32> -> vector<8x8xf32>
    %237 = arith.truncf %236 : vector<8x8xf32> to vector<8x8xbf16>
    %cst_144 = arith.constant dense<0.000000e+00> : vector<8x128xf32>
    %238 = tpu.matmul %237, %28, %cst_144 {dimension_numbers = #tpu.dot_dimension_numbers<[1], [0], [0], [1], [0, 0, 1, 1], [], []>} : vector<8x8xbf16>, vector<8x128xbf16>, vector<8x128xf32> -> vector<8x128xf32>
    %239 = arith.addf %215, %238 : vector<8x128xf32>
    %240 = vector.extract_strided_slice %36 {offsets = [8, 0], sizes = [8, 8], strides = [1, 1]} : vector<16x8xbf16> to vector<8x8xbf16>
    %241 = vector.extract_strided_slice %44 {offsets = [128, 0], sizes = [128, 8], strides = [1, 1]} : vector<256x8xbf16> to vector<128x8xbf16>
    %242 = vector.extract_strided_slice %52 {offsets = [128, 0], sizes = [128, 8], strides = [1, 1]} : vector<256x8xbf16> to vector<128x8xbf16>
    %cst_145 = arith.constant dense<0.000000e+00> : vector<8x128xf32>
    %243 = tpu.matmul %240, %241, %cst_145 {dimension_numbers = #tpu.dot_dimension_numbers<[1], [1], [0], [0], [0, 0, 1, 0], [], []>} : vector<8x8xbf16>, vector<128x8xbf16>, vector<8x128xf32> -> vector<8x128xf32>
    %cst_146 = arith.constant -1.000000e+30 : f32
    %244 = vector.broadcast %cst_146 : f32 to vector<8x128xf32>
    %245 = arith.select %109, %244, %243 : vector<8x128xi1>, vector<8x128xf32>
    %cst_147 = arith.constant dense<0xFF800000> : vector<8xf32>
    %246 = vector.multi_reduction <maximumf>, %245, %cst_147 [1] : vector<8x128xf32> to vector<8xf32>
    %247 = vector.shape_cast %246 : vector<8xf32> to vector<8x1xf32>
    %248 = vector.broadcast %247 : vector<8x1xf32> to vector<8x128xf32>
    %249 = arith.subf %245, %248 : vector<8x128xf32>
    %250 = math.exp %249 : vector<8x128xf32>
    %cst_148 = arith.constant dense<0.000000e+00> : vector<8xf32>
    %251 = vector.multi_reduction <add>, %250, %cst_148 [1] : vector<8x128xf32> to vector<8xf32>
    %252 = vector.shape_cast %251 : vector<8xf32> to vector<8x1xf32>
    %cst_149 = arith.constant 1.000000e+00 : f32
    %253 = vector.broadcast %cst_149 : f32 to vector<8x1xf32>
    %254 = arith.divf %253, %252 : vector<8x1xf32>
    %255 = vector.broadcast %254 : vector<8x1xf32> to vector<8x128xf32>
    %256 = arith.mulf %250, %255 : vector<8x128xf32>
    %257 = arith.addf %234, %256 : vector<8x128xf32>
    %258 = arith.truncf %256 : vector<8x128xf32> to vector<8x128xbf16>
    %cst_150 = arith.constant dense<0.000000e+00> : vector<8x8xf32>
    %259 = tpu.matmul %258, %242, %cst_150 {dimension_numbers = #tpu.dot_dimension_numbers<[1], [0], [0], [1], [0, 0, 1, 1], [], []>} : vector<8x128xbf16>, vector<128x8xbf16>, vector<8x8xf32> -> vector<8x8xf32>
    %260 = arith.truncf %259 : vector<8x8xf32> to vector<8x8xbf16>
    %cst_151 = arith.constant dense<0.000000e+00> : vector<8x128xf32>
    %261 = tpu.matmul %260, %54, %cst_151 {dimension_numbers = #tpu.dot_dimension_numbers<[1], [0], [0], [1], [0, 0, 1, 1], [], []>} : vector<8x8xbf16>, vector<8x128xbf16>, vector<8x128xf32> -> vector<8x128xf32>
    %262 = arith.addf %239, %261 : vector<8x128xf32>
    %263 = vector.extract_strided_slice %62 {offsets = [8, 0], sizes = [8, 8], strides = [1, 1]} : vector<16x8xbf16> to vector<8x8xbf16>
    %264 = vector.extract_strided_slice %70 {offsets = [128, 0], sizes = [128, 8], strides = [1, 1]} : vector<256x8xbf16> to vector<128x8xbf16>
    %265 = vector.extract_strided_slice %78 {offsets = [128, 0], sizes = [128, 8], strides = [1, 1]} : vector<256x8xbf16> to vector<128x8xbf16>
    %cst_152 = arith.constant dense<0.000000e+00> : vector<8x128xf32>
    %266 = tpu.matmul %263, %264, %cst_152 {dimension_numbers = #tpu.dot_dimension_numbers<[1], [1], [0], [0], [0, 0, 1, 0], [], []>} : vector<8x8xbf16>, vector<128x8xbf16>, vector<8x128xf32> -> vector<8x128xf32>
    %cst_153 = arith.constant -1.000000e+30 : f32
    %267 = vector.broadcast %cst_153 : f32 to vector<8x128xf32>
    %268 = arith.select %109, %267, %266 : vector<8x128xi1>, vector<8x128xf32>
    %cst_154 = arith.constant dense<0xFF800000> : vector<8xf32>
    %269 = vector.multi_reduction <maximumf>, %268, %cst_154 [1] : vector<8x128xf32> to vector<8xf32>
    %270 = vector.shape_cast %269 : vector<8xf32> to vector<8x1xf32>
    %271 = vector.broadcast %270 : vector<8x1xf32> to vector<8x128xf32>
    %272 = arith.subf %268, %271 : vector<8x128xf32>
    %273 = math.exp %272 : vector<8x128xf32>
    %cst_155 = arith.constant dense<0.000000e+00> : vector<8xf32>
    %274 = vector.multi_reduction <add>, %273, %cst_155 [1] : vector<8x128xf32> to vector<8xf32>
    %275 = vector.shape_cast %274 : vector<8xf32> to vector<8x1xf32>
    %cst_156 = arith.constant 1.000000e+00 : f32
    %276 = vector.broadcast %cst_156 : f32 to vector<8x1xf32>
    %277 = arith.divf %276, %275 : vector<8x1xf32>
    %278 = vector.broadcast %277 : vector<8x1xf32> to vector<8x128xf32>
    %279 = arith.mulf %273, %278 : vector<8x128xf32>
    %280 = arith.addf %257, %279 : vector<8x128xf32>
    %281 = arith.truncf %279 : vector<8x128xf32> to vector<8x128xbf16>
    %cst_157 = arith.constant dense<0.000000e+00> : vector<8x8xf32>
    %282 = tpu.matmul %281, %265, %cst_157 {dimension_numbers = #tpu.dot_dimension_numbers<[1], [0], [0], [1], [0, 0, 1, 1], [], []>} : vector<8x128xbf16>, vector<128x8xbf16>, vector<8x8xf32> -> vector<8x8xf32>
    %283 = arith.truncf %282 : vector<8x8xf32> to vector<8x8xbf16>
    %cst_158 = arith.constant dense<0.000000e+00> : vector<8x128xf32>
    %284 = tpu.matmul %283, %80, %cst_158 {dimension_numbers = #tpu.dot_dimension_numbers<[1], [0], [0], [1], [0, 0, 1, 1], [], []>} : vector<8x8xbf16>, vector<8x128xbf16>, vector<8x128xf32> -> vector<8x128xf32>
    %285 = arith.addf %262, %284 : vector<8x128xf32>
    %286 = vector.extract_strided_slice %88 {offsets = [8, 0], sizes = [8, 8], strides = [1, 1]} : vector<16x8xbf16> to vector<8x8xbf16>
    %287 = vector.extract_strided_slice %96 {offsets = [128, 0], sizes = [128, 8], strides = [1, 1]} : vector<256x8xbf16> to vector<128x8xbf16>
    %288 = vector.extract_strided_slice %104 {offsets = [128, 0], sizes = [128, 8], strides = [1, 1]} : vector<256x8xbf16> to vector<128x8xbf16>
    %cst_159 = arith.constant dense<0.000000e+00> : vector<8x128xf32>
    %289 = tpu.matmul %286, %287, %cst_159 {dimension_numbers = #tpu.dot_dimension_numbers<[1], [1], [0], [0], [0, 0, 1, 0], [], []>} : vector<8x8xbf16>, vector<128x8xbf16>, vector<8x128xf32> -> vector<8x128xf32>
    %cst_160 = arith.constant -1.000000e+30 : f32
    %290 = vector.broadcast %cst_160 : f32 to vector<8x128xf32>
    %291 = arith.select %109, %290, %289 : vector<8x128xi1>, vector<8x128xf32>
    %cst_161 = arith.constant dense<0xFF800000> : vector<8xf32>
    %292 = vector.multi_reduction <maximumf>, %291, %cst_161 [1] : vector<8x128xf32> to vector<8xf32>
    %293 = vector.shape_cast %292 : vector<8xf32> to vector<8x1xf32>
    %294 = vector.broadcast %293 : vector<8x1xf32> to vector<8x128xf32>
    %295 = arith.subf %291, %294 : vector<8x128xf32>
    %296 = math.exp %295 : vector<8x128xf32>
    %cst_162 = arith.constant dense<0.000000e+00> : vector<8xf32>
    %297 = vector.multi_reduction <add>, %296, %cst_162 [1] : vector<8x128xf32> to vector<8xf32>
    %298 = vector.shape_cast %297 : vector<8xf32> to vector<8x1xf32>
    %cst_163 = arith.constant 1.000000e+00 : f32
    %299 = vector.broadcast %cst_163 : f32 to vector<8x1xf32>
    %300 = arith.divf %299, %298 : vector<8x1xf32>
    %301 = vector.broadcast %300 : vector<8x1xf32> to vector<8x128xf32>
    %302 = arith.mulf %296, %301 : vector<8x128xf32>
    %303 = arith.addf %280, %302 : vector<8x128xf32>
    %304 = arith.truncf %302 : vector<8x128xf32> to vector<8x128xbf16>
    %cst_164 = arith.constant dense<0.000000e+00> : vector<8x8xf32>
    %305 = tpu.matmul %304, %288, %cst_164 {dimension_numbers = #tpu.dot_dimension_numbers<[1], [0], [0], [1], [0, 0, 1, 1], [], []>} : vector<8x128xbf16>, vector<128x8xbf16>, vector<8x8xf32> -> vector<8x8xf32>
    %306 = arith.truncf %305 : vector<8x8xf32> to vector<8x8xbf16>
    %cst_165 = arith.constant dense<0.000000e+00> : vector<8x128xf32>
    %307 = tpu.matmul %306, %106, %cst_165 {dimension_numbers = #tpu.dot_dimension_numbers<[1], [0], [0], [1], [0, 0, 1, 1], [], []>} : vector<8x8xbf16>, vector<8x128xbf16>, vector<8x128xf32> -> vector<8x128xf32>
    %308 = arith.addf %285, %307 : vector<8x128xf32>
    %309 = vector.broadcast %110 : vector<1x128xf32> to vector<8x128xf32>
    %310 = arith.addf %308, %309 : vector<8x128xf32>
    %c1_166 = arith.constant 1 : index
    %c0_167 = arith.constant 0 : index
    %c0_168 = arith.constant 0 : index
    %311 = vector.load %arg12[%c1_166, %c0_167, %c0_168] : memref<2x8x128xf32, #tpu.memory_space<vmem>>, vector<1x8x128xf32>
    %312 = vector.shape_cast %311 : vector<1x8x128xf32> to vector<8x128xf32>
    %313 = vector.shape_cast %310 : vector<8x128xf32> to vector<1x8x128xf32>
    tpu.vector_store %arg12[%c1_166, %c0_167, %c0_168], %313 {strides = array<i32>} : memref<2x8x128xf32, #tpu.memory_space<vmem>>, vector<1x8x128xf32>,
    %cst_169 = arith.constant 2.500000e-01 : f32
    %314 = vector.broadcast %cst_169 : f32 to vector<8x128xf32>
    %315 = arith.mulf %303, %314 : vector<8x128xf32>
    %c1_170 = arith.constant 1 : index
    %c0_171 = arith.constant 0 : index
    %c0_172 = arith.constant 0 : index
    %316 = vector.load %arg13[%c1_170, %c0_171, %c0_172] : memref<2x8x128xf32, #tpu.memory_space<vmem>>, vector<1x8x128xf32>
    %317 = vector.shape_cast %316 : vector<1x8x128xf32> to vector<8x128xf32>
    %318 = vector.shape_cast %315 : vector<8x128xf32> to vector<1x8x128xf32>
    tpu.vector_store %arg13[%c1_170, %c0_171, %c0_172], %318 {strides = array<i32>} : memref<2x8x128xf32, #tpu.memory_space<vmem>>, vector<1x8x128xf32>,
    return
  }
  func.func @transform_0(%arg0: i32) -> (i32, i32) {
    %c0_i32 = arith.constant 0 : i32
    %c0_i32_0 = arith.constant 0 : i32
    return %arg0, %c0_i32 : i32, i32
  }
  func.func @transform_1(%arg0: i32) -> (i32, i32) {
    %c0_i32 = arith.constant 0 : i32
    %c0_i32_0 = arith.constant 0 : i32
    return %arg0, %c0_i32 : i32, i32
  }
  func.func @transform_2(%arg0: i32) -> (i32, i32) {
    %c0_i32 = arith.constant 0 : i32
    %c0_i32_0 = arith.constant 0 : i32
    return %arg0, %c0_i32 : i32, i32
  }
  func.func @transform_3(%arg0: i32) -> (i32, i32, i32) {
    %c0_i32 = arith.constant 0 : i32
    %c0_i32_0 = arith.constant 0 : i32
    %c0_i32_1 = arith.constant 0 : i32
    %c0_i32_2 = arith.constant 0 : i32
    return %c0_i32, %c0_i32_0, %c0_i32_1 : i32, i32, i32
  }
  func.func @transform_4(%arg0: i32) -> (i32, i32, i32) {
    %c0_i32 = arith.constant 0 : i32
    %c0_i32_0 = arith.constant 0 : i32
    %c0_i32_1 = arith.constant 0 : i32
    %c0_i32_2 = arith.constant 0 : i32
    return %c0_i32, %c0_i32_0, %c0_i32_1 : i32, i32, i32
  }
  func.func @transform_5(%arg0: i32) -> (i32, i32, i32) {
    %c0_i32 = arith.constant 0 : i32
    %c0_i32_0 = arith.constant 0 : i32
    %c0_i32_1 = arith.constant 0 : i32
    %c0_i32_2 = arith.constant 0 : i32
    return %c0_i32, %c0_i32_0, %c0_i32_1 : i32, i32, i32
  }
  func.func @transform_6(%arg0: i32) -> (i32, i32, i32) {
    %c0_i32 = arith.constant 0 : i32
    %c0_i32_0 = arith.constant 0 : i32
    %c0_i32_1 = arith.constant 0 : i32
    %c0_i32_2 = arith.constant 0 : i32
    return %c0_i32, %c0_i32_0, %c0_i32_1 : i32, i32, i32
  }
  func.func @transform_7(%arg0: i32) -> (i32, i32, i32) {
    %c0_i32 = arith.constant 0 : i32
    %c0_i32_0 = arith.constant 0 : i32
    %c0_i32_1 = arith.constant 0 : i32
    %c0_i32_2 = arith.constant 0 : i32
    return %c0_i32, %c0_i32_0, %c0_i32_1 : i32, i32, i32
  }
  func.func @transform_8(%arg0: i32) -> (i32, i32, i32) {
    %c0_i32 = arith.constant 0 : i32
    %c0_i32_0 = arith.constant 0 : i32
    %c0_i32_1 = arith.constant 0 : i32
    %c0_i32_2 = arith.constant 0 : i32
    return %c0_i32, %c0_i32_0, %c0_i32_1 : i32, i32, i32
  }
  func.func @transform_9(%arg0: i32) -> (i32, i32, i32) {
    %c0_i32 = arith.constant 0 : i32
    %c0_i32_0 = arith.constant 0 : i32
    %c0_i32_1 = arith.constant 0 : i32
    %c0_i32_2 = arith.constant 0 : i32
    return %c0_i32, %c0_i32_0, %c0_i32_1 : i32, i32, i32
  }
  func.func @transform_10(%arg0: i32) -> (i32, i32) {
    %c0_i32 = arith.constant 0 : i32
    %c0_i32_0 = arith.constant 0 : i32
    %c0_i32_1 = arith.constant 0 : i32
    return %c0_i32, %c0_i32_0 : i32, i32
  }
  func.func @transform_11(%arg0: i32) -> (i32, i32, i32) {
    %c0_i32 = arith.constant 0 : i32
    %c0_i32_0 = arith.constant 0 : i32
    %c0_i32_1 = arith.constant 0 : i32
    return %arg0, %c0_i32, %c0_i32_0 : i32, i32, i32
  }
  func.func @transform_12(%arg0: i32) -> (i32, i32, i32) {
    %c0_i32 = arith.constant 0 : i32
    %c0_i32_0 = arith.constant 0 : i32
    %c0_i32_1 = arith.constant 0 : i32
    return %arg0, %c0_i32, %c0_i32_0 : i32, i32, i32
  }
}

</mosaic_0001>

<llo_original>
// kernel: lora_mha_forward.1
$region0: #{lora_mha_forward.1}
  #allocation0 [shape = 'u32[]', space=smem, size = 0x4, offset = 0x4, fixed_abs, tag = 'smem constant byte address 0x4 - core index']
  #allocation1 [shape = 'u32[144,128]{1,0:T(1,128)}', space=vmem, size = 0x12000, scoped, tag = 'internal scratch']
  %s0 = inlined_call_operand.vmem [shape: bf16[16,32], index: 0, kind: input, shape index: {}]
  %s1 = inlined_call_operand.vmem [shape: bf16[256,32], index: 1, kind: input, shape index: {}]
  %s2 = inlined_call_operand.vmem [shape: bf16[256,32], index: 2, kind: input, shape index: {}]
  %s3 = inlined_call_operand.vmem [shape: bf16[4,32,8], index: 3, kind: input, shape index: {}]
  %s4 = inlined_call_operand.vmem [shape: bf16[4,32,8], index: 4, kind: input, shape index: {}]
  %s5 = inlined_call_operand.vmem [shape: bf16[4,32,8], index: 5, kind: input, shape index: {}]
  %s6 = inlined_call_operand.vmem [shape: bf16[4,8,128], index: 6, kind: input, shape index: {}]
  %s7 = inlined_call_operand.vmem [shape: f32[4,1,8], index: 7, kind: input, shape index: {}]
  %s8 = inlined_call_operand.vmem [shape: f32[4,1,8], index: 8, kind: input, shape index: {}]
  %s9 = inlined_call_operand.vmem [shape: f32[4,1,8], index: 9, kind: input, shape index: {}]
  %s10 = inlined_call_operand.vmem [shape: f32[1,128], index: 10, kind: input, shape index: {}]
  %s11 = inlined_call_operand.vmem [shape: f32[2,8,128], index: 11, kind: output, shape index: {0}]
  %s12 = inlined_call_operand.hbm [shape: f32[2,8,128], index: 12, kind: output, shape index: {1}]
  %13 = xla_tuple %s11, %s12
  %s14 = sld [smem:[#allocation0]]
  $region62: #{lora_mha_forward.1} parent=0
    _
  %s16 = ssub.s32 1, %s14
  %s17 = scalar_select 0, %s16, %s14
  $region1: #{lora_mha_forward.1} parent=0
    #allocation2 [shape = 'u8[8192]{0}', space=vmem, size = 0x2000, scoped, tag = 'output window, operand 1, single buffered']
    #allocation3 [shape = 's32[1]{0}', space=sflag, size = 0x4, scoped, tag = 'scoped memory for lora_mha_forward.1']
    %18 = vsyncpa [#allocation3], 0
    // Predicated region
    $region2: #{lora_mha_forward.1} parent=1 // pred_check
      _
    $region3: #{lora_mha_forward.1} parent=1 // pred_check_branch
      %20 = sbr.rel (0) target = $region5
    $region4: #{lora_mha_forward.1} parent=1 // pred_region
      _
    $region5: #{lora_mha_forward.1} parent=1 // pred_fallthru
      _
    // Predicated region
    $region6: #{lora_mha_forward.1} parent=1 // pred_check
      _
    $region7: #{lora_mha_forward.1} parent=1 // pred_check_branch
      %22 = sbr.rel (0) target = $region9
    $region8: #{lora_mha_forward.1} parent=1 // pred_region
      _
    $region9: #{lora_mha_forward.1} parent=1 // pred_fallthru
      _
    // Predicated region
    $region10: #{lora_mha_forward.1} parent=1 // pred_check
      _
    $region11: #{lora_mha_forward.1} parent=1 // pred_check_branch
      %24 = sbr.rel (0) target = $region13
    $region12: #{lora_mha_forward.1} parent=1 // pred_region
      _
    $region13: #{lora_mha_forward.1} parent=1 // pred_fallthru
      _
    // Predicated region
    $region14: #{lora_mha_forward.1} parent=1 // pred_check
      _
    $region15: #{lora_mha_forward.1} parent=1 // pred_check_branch
      %26 = sbr.rel (0) target = $region17
    $region16: #{lora_mha_forward.1} parent=1 // pred_region
      _
    $region17: #{lora_mha_forward.1} parent=1 // pred_fallthru
      _
    // Predicated region
    $region18: #{lora_mha_forward.1} parent=1 // pred_check
      _
    $region19: #{lora_mha_forward.1} parent=1 // pred_check_branch
      %28 = sbr.rel (0) target = $region21
    $region20: #{lora_mha_forward.1} parent=1 // pred_region
      _
    $region21: #{lora_mha_forward.1} parent=1 // pred_fallthru
      _
    // Predicated region
    $region22: #{lora_mha_forward.1} parent=1 // pred_check
      _
    $region23: #{lora_mha_forward.1} parent=1 // pred_check_branch
      %30 = sbr.rel (0) target = $region25
    $region24: #{lora_mha_forward.1} parent=1 // pred_region
      _
    $region25: #{lora_mha_forward.1} parent=1 // pred_fallthru
      _
    // Predicated region
    $region26: #{lora_mha_forward.1} parent=1 // pred_check
      _
    $region27: #{lora_mha_forward.1} parent=1 // pred_check_branch
      %32 = sbr.rel (0) target = $region29
    $region28: #{lora_mha_forward.1} parent=1 // pred_region
      _
    $region29: #{lora_mha_forward.1} parent=1 // pred_fallthru
      _
    // Predicated region
    $region30: #{lora_mha_forward.1} parent=1 // pred_check
      _
    $region31: #{lora_mha_forward.1} parent=1 // pred_check_branch
      %34 = sbr.rel (0) target = $region33
    $region32: #{lora_mha_forward.1} parent=1 // pred_region
      _
    $region33: #{lora_mha_forward.1} parent=1 // pred_fallthru
      _
    // Predicated region
    $region34: #{lora_mha_forward.1} parent=1 // pred_check
      _
    $region35: #{lora_mha_forward.1} parent=1 // pred_check_branch
      %36 = sbr.rel (0) target = $region37
    $region36: #{lora_mha_forward.1} parent=1 // pred_region
      _
    $region37: #{lora_mha_forward.1} parent=1 // pred_fallthru
      _
    // Predicated region
    $region38: #{lora_mha_forward.1} parent=1 // pred_check
      _
    $region39: #{lora_mha_forward.1} parent=1 // pred_check_branch
      %38 = sbr.rel (0) target = $region41
    $region40: #{lora_mha_forward.1} parent=1 // pred_region
      _
    $region41: #{lora_mha_forward.1} parent=1 // pred_fallthru
      _
    // Predicated region
    $region42: #{lora_mha_forward.1} parent=1 // pred_check
      _
    $region43: #{lora_mha_forward.1} parent=1 // pred_check_branch
      %40 = sbr.rel (0) target = $region45
    $region44: #{lora_mha_forward.1} parent=1 // pred_region
      _
    $region45: #{lora_mha_forward.1} parent=1 // pred_fallthru
      _
    %v42 = vld [vmem:[%s0] sm:$0xf]
    %v43 = vld [vmem:[%s0 + $0x4] sm:$0xf]
    %v44 = vld [vmem:[%s1] sm:$0xf]
    %v45 = vld [vmem:[%s1 + $0x4] sm:$0xf]
    %v46 = vld [vmem:[%s1 + $0x8] sm:$0xf]
    %v47 = vld [vmem:[%s1 + $0xc] sm:$0xf]
    %v48 = vld [vmem:[%s1 + $0x10] sm:$0xf]
    %v49 = vld [vmem:[%s1 + $0x14] sm:$0xf]
    %v50 = vld [vmem:[%s1 + $0x18] sm:$0xf]
    %v51 = vld [vmem:[%s1 + $0x1c] sm:$0xf]
    %v52 = vld [vmem:[%s1 + $0x20] sm:$0xf]
    %v53 = vld [vmem:[%s1 + $0x24] sm:$0xf]
    %v54 = vld [vmem:[%s1 + $0x28] sm:$0xf]
    %v55 = vld [vmem:[%s1 + $0x2c] sm:$0xf]
    %v56 = vld [vmem:[%s1 + $0x30] sm:$0xf]
    %v57 = vld [vmem:[%s1 + $0x34] sm:$0xf]
    %v58 = vld [vmem:[%s1 + $0x38] sm:$0xf]
    %v59 = vld [vmem:[%s1 + $0x3c] sm:$0xf]
    %v60 = vld [vmem:[%s1 + $0x40] sm:$0xf]
    %v61 = vld [vmem:[%s1 + $0x44] sm:$0xf]
    %v62 = vld [vmem:[%s1 + $0x48] sm:$0xf]
    %v63 = vld [vmem:[%s1 + $0x4c] sm:$0xf]
    %v64 = vld [vmem:[%s1 + $0x50] sm:$0xf]
    %v65 = vld [vmem:[%s1 + $0x54] sm:$0xf]
    %v66 = vld [vmem:[%s1 + $0x58] sm:$0xf]
    %v67 = vld [vmem:[%s1 + $0x5c] sm:$0xf]
    %v68 = vld [vmem:[%s1 + $0x60] sm:$0xf]
    %v69 = vld [vmem:[%s1 + $0x64] sm:$0xf]
    %v70 = vld [vmem:[%s1 + $0x68] sm:$0xf]
    %v71 = vld [vmem:[%s1 + $0x6c] sm:$0xf]
    %v72 = vld [vmem:[%s1 + $0x70] sm:$0xf]
    %v73 = vld [vmem:[%s1 + $0x74] sm:$0xf]
    %v74 = vld [vmem:[%s1 + $0x78] sm:$0xf]
    %v75 = vld [vmem:[%s1 + $0x7c] sm:$0xf]
    %v76 = vld [vmem:[%s2] sm:$0xf]
    %v77 = vld [vmem:[%s2 + $0x4] sm:$0xf]
    %v78 = vld [vmem:[%s2 + $0x8] sm:$0xf]
    %v79 = vld [vmem:[%s2 + $0xc] sm:$0xf]
    %v80 = vld [vmem:[%s2 + $0x10] sm:$0xf]
    %v81 = vld [vmem:[%s2 + $0x14] sm:$0xf]
    %v82 = vld [vmem:[%s2 + $0x18] sm:$0xf]
    %v83 = vld [vmem:[%s2 + $0x1c] sm:$0xf]
    %v84 = vld [vmem:[%s2 + $0x20] sm:$0xf]
    %v85 = vld [vmem:[%s2 + $0x24] sm:$0xf]
    %v86 = vld [vmem:[%s2 + $0x28] sm:$0xf]
    %v87 = vld [vmem:[%s2 + $0x2c] sm:$0xf]
    %v88 = vld [vmem:[%s2 + $0x30] sm:$0xf]
    %v89 = vld [vmem:[%s2 + $0x34] sm:$0xf]
    %v90 = vld [vmem:[%s2 + $0x38] sm:$0xf]
    %v91 = vld [vmem:[%s2 + $0x3c] sm:$0xf]
    %v92 = vld [vmem:[%s2 + $0x40] sm:$0xf]
    %v93 = vld [vmem:[%s2 + $0x44] sm:$0xf]
    %v94 = vld [vmem:[%s2 + $0x48] sm:$0xf]
    %v95 = vld [vmem:[%s2 + $0x4c] sm:$0xf]
    %v96 = vld [vmem:[%s2 + $0x50] sm:$0xf]
    %v97 = vld [vmem:[%s2 + $0x54] sm:$0xf]
    %v98 = vld [vmem:[%s2 + $0x58] sm:$0xf]
    %v99 = vld [vmem:[%s2 + $0x5c] sm:$0xf]
    %v100 = vld [vmem:[%s2 + $0x60] sm:$0xf]
    %v101 = vld [vmem:[%s2 + $0x64] sm:$0xf]
    %v102 = vld [vmem:[%s2 + $0x68] sm:$0xf]
    %v103 = vld [vmem:[%s2 + $0x6c] sm:$0xf]
    %v104 = vld [vmem:[%s2 + $0x70] sm:$0xf]
    %v105 = vld [vmem:[%s2 + $0x74] sm:$0xf]
    %v106 = vld [vmem:[%s2 + $0x78] sm:$0xf]
    %v107 = vld [vmem:[%s2 + $0x7c] sm:$0xf]
    %v108 = vld [vmem:[%s3] sm:$0xf]
    %v109 = vld [vmem:[%s3 + $0x4] sm:$0xf]
    %v110 = vld [vmem:[%s3 + $0x8] sm:$0xf]
    %v111 = vld [vmem:[%s3 + $0xc] sm:$0xf]
    %v112 = vld [vmem:[%s7] sm:$0x1]
    %v114 = vlaneseq
    %v115 = vshrl.u32 %v114, 7
    %v116 = vsub.s32 0, %v115
    %v117 = vrot.slane %v112, %v116
    %v121 = vunpack.c.l.b16 %v42
    %v122 = vunpack.c.l.b16 %v43
    %v123 = vpack.c.b16 %v122, %v121
    %v128 = vunpack.c.l.b16 %v108
    %v129 = vunpack.c.l.b16 %v109
    %v130 = vunpack.c.l.b16 %v110
    %v131 = vunpack.c.l.b16 %v111
    %v132 = vpack.c.b16 %v129, %v128
    %v133 = vpack.c.b16 %v131, %v130
    %vm136 = vcmask 261120
    %v138 = vsel %vm136, %v123, 0
    %140 = vmatprep.subr.bf16.mxu0 0
    %141 = vmatpush1.bf16.msra.mxu0 0
    %142 = vmatprep.subr.bf16.mxu0 0
    %143 = vmatpush1.bf16.msra.mxu0 0
    %144 = vmatprep.subr.bf16.mxu0 0
    %145 = vmatpush1.bf16.msra.mxu0 0
    %146 = vmatprep.subr.bf16.mxu0 0
    %147 = vmatpush1.bf16.msra.mxu0 0
    %148 = vmatprep.subr.bf16.mxu0 0
    %149 = vmatpush1.bf16.msra.mxu0 0
    %150 = vmatprep.subr.bf16.mxu0 0
    %151 = vmatpush1.bf16.msra.mxu0 0
    %152 = vmatprep.subr.bf16.mxu0 0
    %153 = vmatpush1.bf16.msra.mxu0 %v133
    %154 = vmatprep.subr.bf16.mxu0 0
    %155 = vmatpush1.bf16.msra.mxu0 %v132
    %156 = vmatprep.subr.bf16.mxu0 0
    %157 = vmatpush2.bf16.msra.mxu0 0
    %158 = vmatprep.subr.bf16.mxu0 0
    %159 = vmatpush2.bf16.msra.mxu0 0
    %160 = vmatprep.subr.bf16.mxu0 0
    %161 = vmatpush2.bf16.msra.mxu0 0
    %162 = vmatprep.subr.bf16.mxu0 0
    %163 = vmatpush2.bf16.msra.mxu0 0
    %164 = vmatprep.subr.bf16.mxu0 0
    %165 = vmatpush2.bf16.msra.mxu0 0
    %166 = vmatprep.subr.bf16.mxu0 0
    %167 = vmatpush2.bf16.msra.mxu0 0
    %168 = vmatprep.subr.bf16.mxu0 0
    %169 = vmatpush2.bf16.msra.mxu0 0
    %170 = vmatprep.subr.bf16.mxu0 0
    %171 = vmatpush2.bf16.msra.mxu0 0
    %172 = vmatprep.mubr.bf16.mxu0 0
    %173 = vmatmul.mubr.bf16.gmra.mxu0 %v138
    %v174 = vpop.f32.mrf.mxu0
    %v175 = vadd.f32 %v117, %v174
    %v176 = vpop.f32.mrf.mxu0
    %v177 = vpop.f32.mrf.mxu0
    %v178 = vadd.f32 %v117, %v177
    %v179 = vpop.f32.mrf.mxu0
    %180 = vdwg.mxu0
    %v181 = vpack.c.bf16 %v178, %v175
    %v182 = vld [vmem:[%s4] sm:$0xf]
    %v183 = vld [vmem:[%s4 + $0x4] sm:$0xf]
    %v184 = vld [vmem:[%s4 + $0x8] sm:$0xf]
    %v185 = vld [vmem:[%s4 + $0xc] sm:$0xf]
    %v186 = vld [vmem:[%s8] sm:$0x1]
    %v188 = vlaneseq
    %v189 = vshrl.u32 %v188, 7
    %v190 = vsub.s32 0, %v189
    %v191 = vrot.slane %v186, %v190
    %v225 = vunpack.c.l.b16 %v44
    %v226 = vunpack.c.l.b16 %v45
    %v227 = vunpack.c.l.b16 %v46
    %v228 = vunpack.c.l.b16 %v47
    %v229 = vunpack.c.l.b16 %v48
    %v230 = vunpack.c.l.b16 %v49
    %v231 = vunpack.c.l.b16 %v50
    %v232 = vunpack.c.l.b16 %v51
    %v233 = vunpack.c.l.b16 %v52
    %v234 = vunpack.c.l.b16 %v53
    %v235 = vunpack.c.l.b16 %v54
    %v236 = vunpack.c.l.b16 %v55
    %v237 = vunpack.c.l.b16 %v56
    %v238 = vunpack.c.l.b16 %v57
    %v239 = vunpack.c.l.b16 %v58
    %v240 = vunpack.c.l.b16 %v59
    %v241 = vunpack.c.l.b16 %v60
    %v242 = vunpack.c.l.b16 %v61
    %v243 = vunpack.c.l.b16 %v62
    %v244 = vunpack.c.l.b16 %v63
    %v245 = vunpack.c.l.b16 %v64
    %v246 = vunpack.c.l.b16 %v65
    %v247 = vunpack.c.l.b16 %v66
    %v248 = vunpack.c.l.b16 %v67
    %v249 = vunpack.c.l.b16 %v68
    %v250 = vunpack.c.l.b16 %v69
    %v251 = vunpack.c.l.b16 %v70
    %v252 = vunpack.c.l.b16 %v71
    %v253 = vunpack.c.l.b16 %v72
    %v254 = vunpack.c.l.b16 %v73
    %v255 = vunpack.c.l.b16 %v74
    %v256 = vunpack.c.l.b16 %v75
    %v257 = vpack.c.b16 %v226, %v225
    %v258 = vpack.c.b16 %v228, %v227
    %v259 = vpack.c.b16 %v230, %v229
    %v260 = vpack.c.b16 %v232, %v231
    %v261 = vpack.c.b16 %v234, %v233
    %v262 = vpack.c.b16 %v236, %v235
    %v263 = vpack.c.b16 %v238, %v237
    %v264 = vpack.c.b16 %v240, %v239
    %v265 = vpack.c.b16 %v242, %v241
    %v266 = vpack.c.b16 %v244, %v243
    %v267 = vpack.c.b16 %v246, %v245
    %v268 = vpack.c.b16 %v248, %v247
    %v269 = vpack.c.b16 %v250, %v249
    %v270 = vpack.c.b16 %v252, %v251
    %v271 = vpack.c.b16 %v254, %v253
    %v272 = vpack.c.b16 %v256, %v255
    %v277 = vunpack.c.l.b16 %v182
    %v278 = vunpack.c.l.b16 %v183
    %v279 = vunpack.c.l.b16 %v184
    %v280 = vunpack.c.l.b16 %v185
    %v281 = vpack.c.b16 %v278, %v277
    %v282 = vpack.c.b16 %v280, %v279
    %v286 = vsel %vm136, %v257, 0
    %v289 = vsel %vm136, %v258, 0
    %v292 = vsel %vm136, %v259, 0
    %v295 = vsel %vm136, %v260, 0
    %v298 = vsel %vm136, %v261, 0
    %v301 = vsel %vm136, %v262, 0
    %v304 = vsel %vm136, %v263, 0
    %v307 = vsel %vm136, %v264, 0
    %v310 = vsel %vm136, %v265, 0
    %v313 = vsel %vm136, %v266, 0
    %v316 = vsel %vm136, %v267, 0
    %v319 = vsel %vm136, %v268, 0
    %v322 = vsel %vm136, %v269, 0
    %v325 = vsel %vm136, %v270, 0
    %v328 = vsel %vm136, %v271, 0
    %v331 = vsel %vm136, %v272, 0
    %333 = vmatprep.subr.bf16.mxu0 0
    %334 = vmatpush1.bf16.msra.mxu0 0
    %335 = vmatprep.subr.bf16.mxu0 0
    %336 = vmatpush1.bf16.msra.mxu0 0
    %337 = vmatprep.subr.bf16.mxu0 0
    %338 = vmatpush1.bf16.msra.mxu0 0
    %339 = vmatprep.subr.bf16.mxu0 0
    %340 = vmatpush1.bf16.msra.mxu0 0
    %341 = vmatprep.subr.bf16.mxu0 0
    %342 = vmatpush1.bf16.msra.mxu0 0
    %343 = vmatprep.subr.bf16.mxu0 0
    %344 = vmatpush1.bf16.msra.mxu0 0
    %345 = vmatprep.subr.bf16.mxu0 0
    %346 = vmatpush1.bf16.msra.mxu0 %v282
    %347 = vmatprep.subr.bf16.mxu0 0
    %348 = vmatpush1.bf16.msra.mxu0 %v281
    %349 = vmatprep.subr.bf16.mxu0 0
    %350 = vmatpush2.bf16.msra.mxu0 0
    %351 = vmatprep.subr.bf16.mxu0 0
    %352 = vmatpush2.bf16.msra.mxu0 0
    %353 = vmatprep.subr.bf16.mxu0 0
    %354 = vmatpush2.bf16.msra.mxu0 0
    %355 = vmatprep.subr.bf16.mxu0 0
    %356 = vmatpush2.bf16.msra.mxu0 0
    %357 = vmatprep.subr.bf16.mxu0 0
    %358 = vmatpush2.bf16.msra.mxu0 0
    %359 = vmatprep.subr.bf16.mxu0 0
    %360 = vmatpush2.bf16.msra.mxu0 0
    %361 = vmatprep.subr.bf16.mxu0 0
    %362 = vmatpush2.bf16.msra.mxu0 0
    %363 = vmatprep.subr.bf16.mxu0 0
    %364 = vmatpush2.bf16.msra.mxu0 0
    %365 = vmatprep.mubr.bf16.mxu0 0
    %366 = vmatmul.mubr.bf16.gmra.mxu0 %v286
    %v367 = vpop.f32.mrf.mxu0
    %v368 = vadd.f32 %v191, %v367
    %v369 = vpop.f32.mrf.mxu0
    %v370 = vpop.f32.mrf.mxu0
    %v371 = vadd.f32 %v191, %v370
    %v372 = vpop.f32.mrf.mxu0
    %373 = vmatprep.mubr.bf16.mxu0 0
    %374 = vmatmul.mubr.bf16.gmra.mxu0 %v289
    %v375 = vpop.f32.mrf.mxu0
    %v376 = vadd.f32 %v191, %v375
    %v377 = vpop.f32.mrf.mxu0
    %v378 = vpop.f32.mrf.mxu0
    %v379 = vadd.f32 %v191, %v378
    %v380 = vpop.f32.mrf.mxu0
    %381 = vmatprep.mubr.bf16.mxu0 0
    %382 = vmatmul.mubr.bf16.gmra.mxu0 %v292
    %v383 = vpop.f32.mrf.mxu0
    %v384 = vadd.f32 %v191, %v383
    %v385 = vpop.f32.mrf.mxu0
    %v386 = vpop.f32.mrf.mxu0
    %v387 = vadd.f32 %v191, %v386
    %v388 = vpop.f32.mrf.mxu0
    %389 = vmatprep.mubr.bf16.mxu0 0
    %390 = vmatmul.mubr.bf16.gmra.mxu0 %v295
    %v391 = vpop.f32.mrf.mxu0
    %v392 = vadd.f32 %v191, %v391
    %v393 = vpop.f32.mrf.mxu0
    %v394 = vpop.f32.mrf.mxu0
    %v395 = vadd.f32 %v191, %v394
    %v396 = vpop.f32.mrf.mxu0
    %397 = vmatprep.mubr.bf16.mxu0 0
    %398 = vmatmul.mubr.bf16.gmra.mxu0 %v298
    %v399 = vpop.f32.mrf.mxu0
    %v400 = vadd.f32 %v191, %v399
    %v401 = vpop.f32.mrf.mxu0
    %v402 = vpop.f32.mrf.mxu0
    %v403 = vadd.f32 %v191, %v402
    %v404 = vpop.f32.mrf.mxu0
    %405 = vmatprep.mubr.bf16.mxu0 0
    %406 = vmatmul.mubr.bf16.gmra.mxu0 %v301
    %v407 = vpop.f32.mrf.mxu0
    %v408 = vadd.f32 %v191, %v407
    %v409 = vpop.f32.mrf.mxu0
    %v410 = vpop.f32.mrf.mxu0
    %v411 = vadd.f32 %v191, %v410
    %v412 = vpop.f32.mrf.mxu0
    %413 = vmatprep.mubr.bf16.mxu0 0
    %414 = vmatmul.mubr.bf16.gmra.mxu0 %v304
    %v415 = vpop.f32.mrf.mxu0
    %v416 = vadd.f32 %v191, %v415
    %v417 = vpop.f32.mrf.mxu0
    %v418 = vpop.f32.mrf.mxu0
    %v419 = vadd.f32 %v191, %v418
    %v420 = vpop.f32.mrf.mxu0
    %421 = vmatprep.mubr.bf16.mxu0 0
    %422 = vmatmul.mubr.bf16.gmra.mxu0 %v307
    %v423 = vpop.f32.mrf.mxu0
    %v424 = vadd.f32 %v191, %v423
    %v425 = vpop.f32.mrf.mxu0
    %v426 = vpop.f32.mrf.mxu0
    %v427 = vadd.f32 %v191, %v426
    %v428 = vpop.f32.mrf.mxu0
    %429 = vmatprep.mubr.bf16.mxu0 0
    %430 = vmatmul.mubr.bf16.gmra.mxu0 %v310
    %v431 = vpop.f32.mrf.mxu0
    %v432 = vadd.f32 %v191, %v431
    %v433 = vpop.f32.mrf.mxu0
    %v434 = vpop.f32.mrf.mxu0
    %v435 = vadd.f32 %v191, %v434
    %v436 = vpop.f32.mrf.mxu0
    %437 = vmatprep.mubr.bf16.mxu0 0
    %438 = vmatmul.mubr.bf16.gmra.mxu0 %v313
    %v439 = vpop.f32.mrf.mxu0
    %v440 = vadd.f32 %v191, %v439
    %v441 = vpop.f32.mrf.mxu0
    %v442 = vpop.f32.mrf.mxu0
    %v443 = vadd.f32 %v191, %v442
    %v444 = vpop.f32.mrf.mxu0
    %445 = vmatprep.mubr.bf16.mxu0 0
    %446 = vmatmul.mubr.bf16.gmra.mxu0 %v316
    %v447 = vpop.f32.mrf.mxu0
    %v448 = vadd.f32 %v191, %v447
    %v449 = vpop.f32.mrf.mxu0
    %v450 = vpop.f32.mrf.mxu0
    %v451 = vadd.f32 %v191, %v450
    %v452 = vpop.f32.mrf.mxu0
    %453 = vmatprep.mubr.bf16.mxu0 0
    %454 = vmatmul.mubr.bf16.gmra.mxu0 %v319
    %v455 = vpop.f32.mrf.mxu0
    %v456 = vadd.f32 %v191, %v455
    %v457 = vpop.f32.mrf.mxu0
    %v458 = vpop.f32.mrf.mxu0
    %v459 = vadd.f32 %v191, %v458
    %v460 = vpop.f32.mrf.mxu0
    %461 = vmatprep.mubr.bf16.mxu0 0
    %462 = vmatmul.mubr.bf16.gmra.mxu0 %v322
    %v463 = vpop.f32.mrf.mxu0
    %v464 = vadd.f32 %v191, %v463
    %v465 = vpop.f32.mrf.mxu0
    %v466 = vpop.f32.mrf.mxu0
    %v467 = vadd.f32 %v191, %v466
    %v468 = vpop.f32.mrf.mxu0
    %469 = vmatprep.mubr.bf16.mxu0 0
    %470 = vmatmul.mubr.bf16.gmra.mxu0 %v325
    %v471 = vpop.f32.mrf.mxu0
    %v472 = vadd.f32 %v191, %v471
    %v473 = vpop.f32.mrf.mxu0
    %v474 = vpop.f32.mrf.mxu0
    %v475 = vadd.f32 %v191, %v474
    %v476 = vpop.f32.mrf.mxu0
    %477 = vmatprep.mubr.bf16.mxu0 0
    %478 = vmatmul.mubr.bf16.gmra.mxu0 %v328
    %v479 = vpop.f32.mrf.mxu0
    %v480 = vadd.f32 %v191, %v479
    %v481 = vpop.f32.mrf.mxu0
    %v482 = vpop.f32.mrf.mxu0
    %v483 = vadd.f32 %v191, %v482
    %v484 = vpop.f32.mrf.mxu0
    %485 = vmatprep.mubr.bf16.mxu0 0
    %486 = vmatmul.mubr.bf16.gmra.mxu0 %v331
    %v487 = vpop.f32.mrf.mxu0
    %v488 = vadd.f32 %v191, %v487
    %v489 = vpop.f32.mrf.mxu0
    %v490 = vpop.f32.mrf.mxu0
    %v491 = vadd.f32 %v191, %v490
    %v492 = vpop.f32.mrf.mxu0
    %493 = vdwg.mxu0
    %v494 = vpack.c.bf16 %v371, %v368
    %v495 = vpack.c.bf16 %v379, %v376
    %v496 = vpack.c.bf16 %v387, %v384
    %v497 = vpack.c.bf16 %v395, %v392
    %v498 = vpack.c.bf16 %v403, %v400
    %v499 = vpack.c.bf16 %v411, %v408
    %v500 = vpack.c.bf16 %v419, %v416
    %v501 = vpack.c.bf16 %v427, %v424
    %v502 = vpack.c.bf16 %v435, %v432
    %v503 = vpack.c.bf16 %v443, %v440
    %v504 = vpack.c.bf16 %v451, %v448
    %v505 = vpack.c.bf16 %v459, %v456
    %v506 = vpack.c.bf16 %v467, %v464
    %v507 = vpack.c.bf16 %v475, %v472
    %v508 = vpack.c.bf16 %v483, %v480
    %v509 = vpack.c.bf16 %v491, %v488
    %v510 = vld [vmem:[%s5] sm:$0xf]
    %v511 = vld [vmem:[%s5 + $0x4] sm:$0xf]
    %v512 = vld [vmem:[%s5 + $0x8] sm:$0xf]
    %v513 = vld [vmem:[%s5 + $0xc] sm:$0xf]
    %v514 = vld [vmem:[%s9] sm:$0x1]
    %v516 = vlaneseq
    %v517 = vshrl.u32 %v516, 7
    %v518 = vsub.s32 0, %v517
    %v519 = vrot.slane %v514, %v518
    %v553 = vunpack.c.l.b16 %v76
    %v554 = vunpack.c.l.b16 %v77
    %v555 = vunpack.c.l.b16 %v78
    %v556 = vunpack.c.l.b16 %v79
    %v557 = vunpack.c.l.b16 %v80
    %v558 = vunpack.c.l.b16 %v81
    %v559 = vunpack.c.l.b16 %v82
    %v560 = vunpack.c.l.b16 %v83
    %v561 = vunpack.c.l.b16 %v84
    %v562 = vunpack.c.l.b16 %v85
    %v563 = vunpack.c.l.b16 %v86
    %v564 = vunpack.c.l.b16 %v87
    %v565 = vunpack.c.l.b16 %v88
    %v566 = vunpack.c.l.b16 %v89
    %v567 = vunpack.c.l.b16 %v90
    %v568 = vunpack.c.l.b16 %v91
    %v569 = vunpack.c.l.b16 %v92
    %v570 = vunpack.c.l.b16 %v93
    %v571 = vunpack.c.l.b16 %v94
    %v572 = vunpack.c.l.b16 %v95
    %v573 = vunpack.c.l.b16 %v96
    %v574 = vunpack.c.l.b16 %v97
    %v575 = vunpack.c.l.b16 %v98
    %v576 = vunpack.c.l.b16 %v99
    %v577 = vunpack.c.l.b16 %v100
    %v578 = vunpack.c.l.b16 %v101
    %v579 = vunpack.c.l.b16 %v102
    %v580 = vunpack.c.l.b16 %v103
    %v581 = vunpack.c.l.b16 %v104
    %v582 = vunpack.c.l.b16 %v105
    %v583 = vunpack.c.l.b16 %v106
    %v584 = vunpack.c.l.b16 %v107
    %v585 = vpack.c.b16 %v554, %v553
    %v586 = vpack.c.b16 %v556, %v555
    %v587 = vpack.c.b16 %v558, %v557
    %v588 = vpack.c.b16 %v560, %v559
    %v589 = vpack.c.b16 %v562, %v561
    %v590 = vpack.c.b16 %v564, %v563
    %v591 = vpack.c.b16 %v566, %v565
    %v592 = vpack.c.b16 %v568, %v567
    %v593 = vpack.c.b16 %v570, %v569
    %v594 = vpack.c.b16 %v572, %v571
    %v595 = vpack.c.b16 %v574, %v573
    %v596 = vpack.c.b16 %v576, %v575
    %v597 = vpack.c.b16 %v578, %v577
    %v598 = vpack.c.b16 %v580, %v579
    %v599 = vpack.c.b16 %v582, %v581
    %v600 = vpack.c.b16 %v584, %v583
    %v605 = vunpack.c.l.b16 %v510
    %v606 = vunpack.c.l.b16 %v511
    %v607 = vunpack.c.l.b16 %v512
    %v608 = vunpack.c.l.b16 %v513
    %v609 = vpack.c.b16 %v606, %v605
    %v610 = vpack.c.b16 %v608, %v607
    %v614 = vsel %vm136, %v585, 0
    %v617 = vsel %vm136, %v586, 0
    %v620 = vsel %vm136, %v587, 0
    %v623 = vsel %vm136, %v588, 0
    %v626 = vsel %vm136, %v589, 0
    %v629 = vsel %vm136, %v590, 0
    %v632 = vsel %vm136, %v591, 0
    %v635 = vsel %vm136, %v592, 0
    %v638 = vsel %vm136, %v593, 0
    %v641 = vsel %vm136, %v594, 0
    %v644 = vsel %vm136, %v595, 0
    %v647 = vsel %vm136, %v596, 0
    %v650 = vsel %vm136, %v597, 0
    %v653 = vsel %vm136, %v598, 0
    %v656 = vsel %vm136, %v599, 0
    %v659 = vsel %vm136, %v600, 0
    %661 = vmatprep.subr.bf16.mxu0 0
    %662 = vmatpush1.bf16.msra.mxu0 0
    %663 = vmatprep.subr.bf16.mxu0 0
    %664 = vmatpush1.bf16.msra.mxu0 0
    %665 = vmatprep.subr.bf16.mxu0 0
    %666 = vmatpush1.bf16.msra.mxu0 0
    %667 = vmatprep.subr.bf16.mxu0 0
    %668 = vmatpush1.bf16.msra.mxu0 0
    %669 = vmatprep.subr.bf16.mxu0 0
    %670 = vmatpush1.bf16.msra.mxu0 0
    %671 = vmatprep.subr.bf16.mxu0 0
    %672 = vmatpush1.bf16.msra.mxu0 0
    %673 = vmatprep.subr.bf16.mxu0 0
    %674 = vmatpush1.bf16.msra.mxu0 %v610
    %675 = vmatprep.subr.bf16.mxu0 0
    %676 = vmatpush1.bf16.msra.mxu0 %v609
    %677 = vmatprep.subr.bf16.mxu0 0
    %678 = vmatpush2.bf16.msra.mxu0 0
    %679 = vmatprep.subr.bf16.mxu0 0
    %680 = vmatpush2.bf16.msra.mxu0 0
    %681 = vmatprep.subr.bf16.mxu0 0
    %682 = vmatpush2.bf16.msra.mxu0 0
    %683 = vmatprep.subr.bf16.mxu0 0
    %684 = vmatpush2.bf16.msra.mxu0 0
    %685 = vmatprep.subr.bf16.mxu0 0
    %686 = vmatpush2.bf16.msra.mxu0 0
    %687 = vmatprep.subr.bf16.mxu0 0
    %688 = vmatpush2.bf16.msra.mxu0 0
    %689 = vmatprep.subr.bf16.mxu0 0
    %690 = vmatpush2.bf16.msra.mxu0 0
    %691 = vmatprep.subr.bf16.mxu0 0
    %692 = vmatpush2.bf16.msra.mxu0 0
    %693 = vmatprep.mubr.bf16.mxu0 0
    %694 = vmatmul.mubr.bf16.gmra.mxu0 %v614
    %v695 = vpop.f32.mrf.mxu0
    %v696 = vadd.f32 %v519, %v695
    %v697 = vpop.f32.mrf.mxu0
    %v698 = vpop.f32.mrf.mxu0
    %v699 = vadd.f32 %v519, %v698
    %v700 = vpop.f32.mrf.mxu0
    %701 = vmatprep.mubr.bf16.mxu0 0
    %702 = vmatmul.mubr.bf16.gmra.mxu0 %v617
    %v703 = vpop.f32.mrf.mxu0
    %v704 = vadd.f32 %v519, %v703
    %v705 = vpop.f32.mrf.mxu0
    %v706 = vpop.f32.mrf.mxu0
    %v707 = vadd.f32 %v519, %v706
    %v708 = vpop.f32.mrf.mxu0
    %709 = vmatprep.mubr.bf16.mxu0 0
    %710 = vmatmul.mubr.bf16.gmra.mxu0 %v620
    %v711 = vpop.f32.mrf.mxu0
    %v712 = vadd.f32 %v519, %v711
    %v713 = vpop.f32.mrf.mxu0
    %v714 = vpop.f32.mrf.mxu0
    %v715 = vadd.f32 %v519, %v714
    %v716 = vpop.f32.mrf.mxu0
    %717 = vmatprep.mubr.bf16.mxu0 0
    %718 = vmatmul.mubr.bf16.gmra.mxu0 %v623
    %v719 = vpop.f32.mrf.mxu0
    %v720 = vadd.f32 %v519, %v719
    %v721 = vpop.f32.mrf.mxu0
    %v722 = vpop.f32.mrf.mxu0
    %v723 = vadd.f32 %v519, %v722
    %v724 = vpop.f32.mrf.mxu0
    %725 = vmatprep.mubr.bf16.mxu0 0
    %726 = vmatmul.mubr.bf16.gmra.mxu0 %v626
    %v727 = vpop.f32.mrf.mxu0
    %v728 = vadd.f32 %v519, %v727
    %v729 = vpop.f32.mrf.mxu0
    %v730 = vpop.f32.mrf.mxu0
    %v731 = vadd.f32 %v519, %v730
    %v732 = vpop.f32.mrf.mxu0
    %733 = vmatprep.mubr.bf16.mxu0 0
    %734 = vmatmul.mubr.bf16.gmra.mxu0 %v629
    %v735 = vpop.f32.mrf.mxu0
    %v736 = vadd.f32 %v519, %v735
    %v737 = vpop.f32.mrf.mxu0
    %v738 = vpop.f32.mrf.mxu0
    %v739 = vadd.f32 %v519, %v738
    %v740 = vpop.f32.mrf.mxu0
    %741 = vmatprep.mubr.bf16.mxu0 0
    %742 = vmatmul.mubr.bf16.gmra.mxu0 %v632
    %v743 = vpop.f32.mrf.mxu0
    %v744 = vadd.f32 %v519, %v743
    %v745 = vpop.f32.mrf.mxu0
    %v746 = vpop.f32.mrf.mxu0
    %v747 = vadd.f32 %v519, %v746
    %v748 = vpop.f32.mrf.mxu0
    %749 = vmatprep.mubr.bf16.mxu0 0
    %750 = vmatmul.mubr.bf16.gmra.mxu0 %v635
    %v751 = vpop.f32.mrf.mxu0
    %v752 = vadd.f32 %v519, %v751
    %v753 = vpop.f32.mrf.mxu0
    %v754 = vpop.f32.mrf.mxu0
    %v755 = vadd.f32 %v519, %v754
    %v756 = vpop.f32.mrf.mxu0
    %757 = vmatprep.mubr.bf16.mxu0 0
    %758 = vmatmul.mubr.bf16.gmra.mxu0 %v638
    %v759 = vpop.f32.mrf.mxu0
    %v760 = vadd.f32 %v519, %v759
    %v761 = vpop.f32.mrf.mxu0
    %v762 = vpop.f32.mrf.mxu0
    %v763 = vadd.f32 %v519, %v762
    %v764 = vpop.f32.mrf.mxu0
    %765 = vmatprep.mubr.bf16.mxu0 0
    %766 = vmatmul.mubr.bf16.gmra.mxu0 %v641
    %v767 = vpop.f32.mrf.mxu0
    %v768 = vadd.f32 %v519, %v767
    %v769 = vpop.f32.mrf.mxu0
    %v770 = vpop.f32.mrf.mxu0
    %v771 = vadd.f32 %v519, %v770
    %v772 = vpop.f32.mrf.mxu0
    %773 = vmatprep.mubr.bf16.mxu0 0
    %774 = vmatmul.mubr.bf16.gmra.mxu0 %v644
    %v775 = vpop.f32.mrf.mxu0
    %v776 = vadd.f32 %v519, %v775
    %v777 = vpop.f32.mrf.mxu0
    %v778 = vpop.f32.mrf.mxu0
    %v779 = vadd.f32 %v519, %v778
    %v780 = vpop.f32.mrf.mxu0
    %781 = vmatprep.mubr.bf16.mxu0 0
    %782 = vmatmul.mubr.bf16.gmra.mxu0 %v647
    %v783 = vpop.f32.mrf.mxu0
    %v784 = vadd.f32 %v519, %v783
    %v785 = vpop.f32.mrf.mxu0
    %v786 = vpop.f32.mrf.mxu0
    %v787 = vadd.f32 %v519, %v786
    %v788 = vpop.f32.mrf.mxu0
    %789 = vmatprep.mubr.bf16.mxu0 0
    %790 = vmatmul.mubr.bf16.gmra.mxu0 %v650
    %v791 = vpop.f32.mrf.mxu0
    %v792 = vadd.f32 %v519, %v791
    %v793 = vpop.f32.mrf.mxu0
    %v794 = vpop.f32.mrf.mxu0
    %v795 = vadd.f32 %v519, %v794
    %v796 = vpop.f32.mrf.mxu0
    %797 = vmatprep.mubr.bf16.mxu0 0
    %798 = vmatmul.mubr.bf16.gmra.mxu0 %v653
    %v799 = vpop.f32.mrf.mxu0
    %v800 = vadd.f32 %v519, %v799
    %v801 = vpop.f32.mrf.mxu0
    %v802 = vpop.f32.mrf.mxu0
    %v803 = vadd.f32 %v519, %v802
    %v804 = vpop.f32.mrf.mxu0
    %805 = vmatprep.mubr.bf16.mxu0 0
    %806 = vmatmul.mubr.bf16.gmra.mxu0 %v656
    %v807 = vpop.f32.mrf.mxu0
    %v808 = vadd.f32 %v519, %v807
    %v809 = vpop.f32.mrf.mxu0
    %v810 = vpop.f32.mrf.mxu0
    %v811 = vadd.f32 %v519, %v810
    %v812 = vpop.f32.mrf.mxu0
    %813 = vmatprep.mubr.bf16.mxu0 0
    %814 = vmatmul.mubr.bf16.gmra.mxu0 %v659
    %v815 = vpop.f32.mrf.mxu0
    %v816 = vadd.f32 %v519, %v815
    %v817 = vpop.f32.mrf.mxu0
    %v818 = vpop.f32.mrf.mxu0
    %v819 = vadd.f32 %v519, %v818
    %v820 = vpop.f32.mrf.mxu0
    %821 = vdwg.mxu0
    %v822 = vpack.c.bf16 %v699, %v696
    %v823 = vpack.c.bf16 %v707, %v704
    %v824 = vpack.c.bf16 %v715, %v712
    %v825 = vpack.c.bf16 %v723, %v720
    %v826 = vpack.c.bf16 %v731, %v728
    %v827 = vpack.c.bf16 %v739, %v736
    %v828 = vpack.c.bf16 %v747, %v744
    %v829 = vpack.c.bf16 %v755, %v752
    %v830 = vpack.c.bf16 %v763, %v760
    %v831 = vpack.c.bf16 %v771, %v768
    %v832 = vpack.c.bf16 %v779, %v776
    %v833 = vpack.c.bf16 %v787, %v784
    %v834 = vpack.c.bf16 %v795, %v792
    %v835 = vpack.c.bf16 %v803, %v800
    %v836 = vpack.c.bf16 %v811, %v808
    %v837 = vpack.c.bf16 %v819, %v816
    %v838 = vld [vmem:[%s6] sm:$0xf]
    %s839 = scalar_lea.vmem %s3, 16
    %v840 = vld [vmem:[%s839] sm:$0xf]
    %v841 = vld [vmem:[%s839 + $0x4] sm:$0xf]
    %v842 = vld [vmem:[%s839 + $0x8] sm:$0xf]
    %v843 = vld [vmem:[%s839 + $0xc] sm:$0xf]
    %s844 = scalar_lea.vmem %s7, 1
    %v845 = vld [vmem:[%s844] sm:$0x1]
    %v847 = vlaneseq
    %v848 = vshrl.u32 %v847, 7
    %v849 = vsub.s32 0, %v848
    %v850 = vrot.slane %v845, %v849
    %v856 = vunpack.c.l.b16 %v840
    %v857 = vunpack.c.l.b16 %v841
    %v858 = vunpack.c.l.b16 %v842
    %v859 = vunpack.c.l.b16 %v843
    %v860 = vpack.c.b16 %v857, %v856
    %v861 = vpack.c.b16 %v859, %v858
    %864 = vmatprep.subr.bf16.mxu0 0
    %865 = vmatpush1.bf16.msra.mxu0 0
    %866 = vmatprep.subr.bf16.mxu0 0
    %867 = vmatpush1.bf16.msra.mxu0 0
    %868 = vmatprep.subr.bf16.mxu0 0
    %869 = vmatpush1.bf16.msra.mxu0 0
    %870 = vmatprep.subr.bf16.mxu0 0
    %871 = vmatpush1.bf16.msra.mxu0 0
    %872 = vmatprep.subr.bf16.mxu0 0
    %873 = vmatpush1.bf16.msra.mxu0 0
    %874 = vmatprep.subr.bf16.mxu0 0
    %875 = vmatpush1.bf16.msra.mxu0 0
    %876 = vmatprep.subr.bf16.mxu0 0
    %877 = vmatpush1.bf16.msra.mxu0 %v861
    %878 = vmatprep.subr.bf16.mxu0 0
    %879 = vmatpush1.bf16.msra.mxu0 %v860
    %880 = vmatprep.subr.bf16.mxu0 0
    %881 = vmatpush2.bf16.msra.mxu0 0
    %882 = vmatprep.subr.bf16.mxu0 0
    %883 = vmatpush2.bf16.msra.mxu0 0
    %884 = vmatprep.subr.bf16.mxu0 0
    %885 = vmatpush2.bf16.msra.mxu0 0
    %886 = vmatprep.subr.bf16.mxu0 0
    %887 = vmatpush2.bf16.msra.mxu0 0
    %888 = vmatprep.subr.bf16.mxu0 0
    %889 = vmatpush2.bf16.msra.mxu0 0
    %890 = vmatprep.subr.bf16.mxu0 0
    %891 = vmatpush2.bf16.msra.mxu0 0
    %892 = vmatprep.subr.bf16.mxu0 0
    %893 = vmatpush2.bf16.msra.mxu0 0
    %894 = vmatprep.subr.bf16.mxu0 0
    %895 = vmatpush2.bf16.msra.mxu0 0
    %896 = vmatprep.mubr.bf16.mxu0 0
    %897 = vmatmul.mubr.bf16.gmra.mxu0 %v138
    %v898 = vpop.f32.mrf.mxu0
    %v899 = vadd.f32 %v850, %v898
    %v900 = vpop.f32.mrf.mxu0
    %v901 = vpop.f32.mrf.mxu0
    %v902 = vadd.f32 %v850, %v901
    %v903 = vpop.f32.mrf.mxu0
    %904 = vdwg.mxu0
    %v905 = vpack.c.bf16 %v902, %v899
    %s906 = scalar_lea.vmem %s4, 16
    %v907 = vld [vmem:[%s906] sm:$0xf]
    %v908 = vld [vmem:[%s906 + $0x4] sm:$0xf]
    %v909 = vld [vmem:[%s906 + $0x8] sm:$0xf]
    %v910 = vld [vmem:[%s906 + $0xc] sm:$0xf]
    %s911 = scalar_lea.vmem %s8, 1
    %v912 = vld [vmem:[%s911] sm:$0x1]
    %v914 = vlaneseq
    %v915 = vshrl.u32 %v914, 7
    %v916 = vsub.s32 0, %v915
    %v917 = vrot.slane %v912, %v916
    %v923 = vunpack.c.l.b16 %v907
    %v924 = vunpack.c.l.b16 %v908
    %v925 = vunpack.c.l.b16 %v909
    %v926 = vunpack.c.l.b16 %v910
    %v927 = vpack.c.b16 %v924, %v923
    %v928 = vpack.c.b16 %v926, %v925
    %931 = vmatprep.subr.bf16.mxu0 0
    %932 = vmatpush1.bf16.msra.mxu0 0
    %933 = vmatprep.subr.bf16.mxu0 0
    %934 = vmatpush1.bf16.msra.mxu0 0
    %935 = vmatprep.subr.bf16.mxu0 0
    %936 = vmatpush1.bf16.msra.mxu0 0
    %937 = vmatprep.subr.bf16.mxu0 0
    %938 = vmatpush1.bf16.msra.mxu0 0
    %939 = vmatprep.subr.bf16.mxu0 0
    %940 = vmatpush1.bf16.msra.mxu0 0
    %941 = vmatprep.subr.bf16.mxu0 0
    %942 = vmatpush1.bf16.msra.mxu0 0
    %943 = vmatprep.subr.bf16.mxu0 0
    %944 = vmatpush1.bf16.msra.mxu0 %v928
    %945 = vmatprep.subr.bf16.mxu0 0
    %946 = vmatpush1.bf16.msra.mxu0 %v927
    %947 = vmatprep.subr.bf16.mxu0 0
    %948 = vmatpush2.bf16.msra.mxu0 0
    %949 = vmatprep.subr.bf16.mxu0 0
    %950 = vmatpush2.bf16.msra.mxu0 0
    %951 = vmatprep.subr.bf16.mxu0 0
    %952 = vmatpush2.bf16.msra.mxu0 0
    %953 = vmatprep.subr.bf16.mxu0 0
    %954 = vmatpush2.bf16.msra.mxu0 0
    %955 = vmatprep.subr.bf16.mxu0 0
    %956 = vmatpush2.bf16.msra.mxu0 0
    %957 = vmatprep.subr.bf16.mxu0 0
    %958 = vmatpush2.bf16.msra.mxu0 0
    %959 = vmatprep.subr.bf16.mxu0 0
    %960 = vmatpush2.bf16.msra.mxu0 0
    %961 = vmatprep.subr.bf16.mxu0 0
    %962 = vmatpush2.bf16.msra.mxu0 0
    %963 = vmatprep.mubr.bf16.mxu0 0
    %964 = vmatmul.mubr.bf16.gmra.mxu0 %v286
    %v965 = vpop.f32.mrf.mxu0
    %v966 = vadd.f32 %v917, %v965
    %v967 = vpop.f32.mrf.mxu0
    %v968 = vpop.f32.mrf.mxu0
    %v969 = vadd.f32 %v917, %v968
    %v970 = vpop.f32.mrf.mxu0
    %971 = vmatprep.mubr.bf16.mxu0 0
    %972 = vmatmul.mubr.bf16.gmra.mxu0 %v289
    %v973 = vpop.f32.mrf.mxu0
    %v974 = vadd.f32 %v917, %v973
    %v975 = vpop.f32.mrf.mxu0
    %v976 = vpop.f32.mrf.mxu0
    %v977 = vadd.f32 %v917, %v976
    %v978 = vpop.f32.mrf.mxu0
    %979 = vmatprep.mubr.bf16.mxu0 0
    %980 = vmatmul.mubr.bf16.gmra.mxu0 %v292
    %v981 = vpop.f32.mrf.mxu0
    %v982 = vadd.f32 %v917, %v981
    %v983 = vpop.f32.mrf.mxu0
    %v984 = vpop.f32.mrf.mxu0
    %v985 = vadd.f32 %v917, %v984
    %v986 = vpop.f32.mrf.mxu0
    %987 = vmatprep.mubr.bf16.mxu0 0
    %988 = vmatmul.mubr.bf16.gmra.mxu0 %v295
    %v989 = vpop.f32.mrf.mxu0
    %v990 = vadd.f32 %v917, %v989
    %v991 = vpop.f32.mrf.mxu0
    %v992 = vpop.f32.mrf.mxu0
    %v993 = vadd.f32 %v917, %v992
    %v994 = vpop.f32.mrf.mxu0
    %995 = vmatprep.mubr.bf16.mxu0 0
    %996 = vmatmul.mubr.bf16.gmra.mxu0 %v298
    %v997 = vpop.f32.mrf.mxu0
    %v998 = vadd.f32 %v917, %v997
    %v999 = vpop.f32.mrf.mxu0
    %v1000 = vpop.f32.mrf.mxu0
    %v1001 = vadd.f32 %v917, %v1000
    %v1002 = vpop.f32.mrf.mxu0
    %1003 = vmatprep.mubr.bf16.mxu0 0
    %1004 = vmatmul.mubr.bf16.gmra.mxu0 %v301
    %v1005 = vpop.f32.mrf.mxu0
    %v1006 = vadd.f32 %v917, %v1005
    %v1007 = vpop.f32.mrf.mxu0
    %v1008 = vpop.f32.mrf.mxu0
    %v1009 = vadd.f32 %v917, %v1008
    %v1010 = vpop.f32.mrf.mxu0
    %1011 = vmatprep.mubr.bf16.mxu0 0
    %1012 = vmatmul.mubr.bf16.gmra.mxu0 %v304
    %v1013 = vpop.f32.mrf.mxu0
    %v1014 = vadd.f32 %v917, %v1013
    %v1015 = vpop.f32.mrf.mxu0
    %v1016 = vpop.f32.mrf.mxu0
    %v1017 = vadd.f32 %v917, %v1016
    %v1018 = vpop.f32.mrf.mxu0
    %1019 = vmatprep.mubr.bf16.mxu0 0
    %1020 = vmatmul.mubr.bf16.gmra.mxu0 %v307
    %v1021 = vpop.f32.mrf.mxu0
    %v1022 = vadd.f32 %v917, %v1021
    %v1023 = vpop.f32.mrf.mxu0
    %v1024 = vpop.f32.mrf.mxu0
    %v1025 = vadd.f32 %v917, %v1024
    %v1026 = vpop.f32.mrf.mxu0
    %1027 = vmatprep.mubr.bf16.mxu0 0
    %1028 = vmatmul.mubr.bf16.gmra.mxu0 %v310
    %v1029 = vpop.f32.mrf.mxu0
    %v1030 = vadd.f32 %v917, %v1029
    %v1031 = vpop.f32.mrf.mxu0
    %v1032 = vpop.f32.mrf.mxu0
    %v1033 = vadd.f32 %v917, %v1032
    %v1034 = vpop.f32.mrf.mxu0
    %1035 = vmatprep.mubr.bf16.mxu0 0
    %1036 = vmatmul.mubr.bf16.gmra.mxu0 %v313
    %v1037 = vpop.f32.mrf.mxu0
    %v1038 = vadd.f32 %v917, %v1037
    %v1039 = vpop.f32.mrf.mxu0
    %v1040 = vpop.f32.mrf.mxu0
    %v1041 = vadd.f32 %v917, %v1040
    %v1042 = vpop.f32.mrf.mxu0
    %1043 = vmatprep.mubr.bf16.mxu0 0
    %1044 = vmatmul.mubr.bf16.gmra.mxu0 %v316
    %v1045 = vpop.f32.mrf.mxu0
    %v1046 = vadd.f32 %v917, %v1045
    %v1047 = vpop.f32.mrf.mxu0
    %v1048 = vpop.f32.mrf.mxu0
    %v1049 = vadd.f32 %v917, %v1048
    %v1050 = vpop.f32.mrf.mxu0
    %1051 = vmatprep.mubr.bf16.mxu0 0
    %1052 = vmatmul.mubr.bf16.gmra.mxu0 %v319
    %v1053 = vpop.f32.mrf.mxu0
    %v1054 = vadd.f32 %v917, %v1053
    %v1055 = vpop.f32.mrf.mxu0
    %v1056 = vpop.f32.mrf.mxu0
    %v1057 = vadd.f32 %v917, %v1056
    %v1058 = vpop.f32.mrf.mxu0
    %1059 = vmatprep.mubr.bf16.mxu0 0
    %1060 = vmatmul.mubr.bf16.gmra.mxu0 %v322
    %v1061 = vpop.f32.mrf.mxu0
    %v1062 = vadd.f32 %v917, %v1061
    %v1063 = vpop.f32.mrf.mxu0
    %v1064 = vpop.f32.mrf.mxu0
    %v1065 = vadd.f32 %v917, %v1064
    %v1066 = vpop.f32.mrf.mxu0
    %1067 = vmatprep.mubr.bf16.mxu0 0
    %1068 = vmatmul.mubr.bf16.gmra.mxu0 %v325
    %v1069 = vpop.f32.mrf.mxu0
    %v1070 = vadd.f32 %v917, %v1069
    %v1071 = vpop.f32.mrf.mxu0
    %v1072 = vpop.f32.mrf.mxu0
    %v1073 = vadd.f32 %v917, %v1072
    %v1074 = vpop.f32.mrf.mxu0
    %1075 = vmatprep.mubr.bf16.mxu0 0
    %1076 = vmatmul.mubr.bf16.gmra.mxu0 %v328
    %v1077 = vpop.f32.mrf.mxu0
    %v1078 = vadd.f32 %v917, %v1077
    %v1079 = vpop.f32.mrf.mxu0
    %v1080 = vpop.f32.mrf.mxu0
    %v1081 = vadd.f32 %v917, %v1080
    %v1082 = vpop.f32.mrf.mxu0
    %1083 = vmatprep.mubr.bf16.mxu0 0
    %1084 = vmatmul.mubr.bf16.gmra.mxu0 %v331
    %v1085 = vpop.f32.mrf.mxu0
    %v1086 = vadd.f32 %v917, %v1085
    %v1087 = vpop.f32.mrf.mxu0
    %v1088 = vpop.f32.mrf.mxu0
    %v1089 = vadd.f32 %v917, %v1088
    %v1090 = vpop.f32.mrf.mxu0
    %1091 = vdwg.mxu0
    %v1092 = vpack.c.bf16 %v969, %v966
    %v1093 = vpack.c.bf16 %v977, %v974
    %v1094 = vpack.c.bf16 %v985, %v982
    %v1095 = vpack.c.bf16 %v993, %v990
    %v1096 = vpack.c.bf16 %v1001, %v998
    %v1097 = vpack.c.bf16 %v1009, %v1006
    %v1098 = vpack.c.bf16 %v1017, %v1014
    %v1099 = vpack.c.bf16 %v1025, %v1022
    %v1100 = vpack.c.bf16 %v1033, %v1030
    %v1101 = vpack.c.bf16 %v1041, %v1038
    %v1102 = vpack.c.bf16 %v1049, %v1046
    %v1103 = vpack.c.bf16 %v1057, %v1054
    %v1104 = vpack.c.bf16 %v1065, %v1062
    %v1105 = vpack.c.bf16 %v1073, %v1070
    %v1106 = vpack.c.bf16 %v1081, %v1078
    %v1107 = vpack.c.bf16 %v1089, %v1086
    %s1108 = scalar_lea.vmem %s5, 16
    %v1109 = vld [vmem:[%s1108] sm:$0xf]
    %v1110 = vld [vmem:[%s1108 + $0x4] sm:$0xf]
    %v1111 = vld [vmem:[%s1108 + $0x8] sm:$0xf]
    %v1112 = vld [vmem:[%s1108 + $0xc] sm:$0xf]
    %s1113 = scalar_lea.vmem %s9, 1
    %v1114 = vld [vmem:[%s1113] sm:$0x1]
    %v1116 = vlaneseq
    %v1117 = vshrl.u32 %v1116, 7
    %v1118 = vsub.s32 0, %v1117
    %v1119 = vrot.slane %v1114, %v1118
    %v1125 = vunpack.c.l.b16 %v1109
    %v1126 = vunpack.c.l.b16 %v1110
    %v1127 = vunpack.c.l.b16 %v1111
    %v1128 = vunpack.c.l.b16 %v1112
    %v1129 = vpack.c.b16 %v1126, %v1125
    %v1130 = vpack.c.b16 %v1128, %v1127
    %1133 = vmatprep.subr.bf16.mxu0 0
    %1134 = vmatpush1.bf16.msra.mxu0 0
    %1135 = vmatprep.subr.bf16.mxu0 0
    %1136 = vmatpush1.bf16.msra.mxu0 0
    %1137 = vmatprep.subr.bf16.mxu0 0
    %1138 = vmatpush1.bf16.msra.mxu0 0
    %1139 = vmatprep.subr.bf16.mxu0 0
    %1140 = vmatpush1.bf16.msra.mxu0 0
    %1141 = vmatprep.subr.bf16.mxu0 0
    %1142 = vmatpush1.bf16.msra.mxu0 0
    %1143 = vmatprep.subr.bf16.mxu0 0
    %1144 = vmatpush1.bf16.msra.mxu0 0
    %1145 = vmatprep.subr.bf16.mxu0 0
    %1146 = vmatpush1.bf16.msra.mxu0 %v1130
    %1147 = vmatprep.subr.bf16.mxu0 0
    %1148 = vmatpush1.bf16.msra.mxu0 %v1129
    %1149 = vmatprep.subr.bf16.mxu0 0
    %1150 = vmatpush2.bf16.msra.mxu0 0
    %1151 = vmatprep.subr.bf16.mxu0 0
    %1152 = vmatpush2.bf16.msra.mxu0 0
    %1153 = vmatprep.subr.bf16.mxu0 0
    %1154 = vmatpush2.bf16.msra.mxu0 0
    %1155 = vmatprep.subr.bf16.mxu0 0
    %1156 = vmatpush2.bf16.msra.mxu0 0
    %1157 = vmatprep.subr.bf16.mxu0 0
    %1158 = vmatpush2.bf16.msra.mxu0 0
    %1159 = vmatprep.subr.bf16.mxu0 0
    %1160 = vmatpush2.bf16.msra.mxu0 0
    %1161 = vmatprep.subr.bf16.mxu0 0
    %1162 = vmatpush2.bf16.msra.mxu0 0
    %1163 = vmatprep.subr.bf16.mxu0 0
    %1164 = vmatpush2.bf16.msra.mxu0 0
    %1165 = vmatprep.mubr.bf16.mxu0 0
    %1166 = vmatmul.mubr.bf16.gmra.mxu0 %v614
    %v1167 = vpop.f32.mrf.mxu0
    %v1168 = vadd.f32 %v1119, %v1167
    %v1169 = vpop.f32.mrf.mxu0
    %v1170 = vpop.f32.mrf.mxu0
    %v1171 = vadd.f32 %v1119, %v1170
    %v1172 = vpop.f32.mrf.mxu0
    %1173 = vmatprep.mubr.bf16.mxu0 0
    %1174 = vmatmul.mubr.bf16.gmra.mxu0 %v617
    %v1175 = vpop.f32.mrf.mxu0
    %v1176 = vadd.f32 %v1119, %v1175
    %v1177 = vpop.f32.mrf.mxu0
    %v1178 = vpop.f32.mrf.mxu0
    %v1179 = vadd.f32 %v1119, %v1178
    %v1180 = vpop.f32.mrf.mxu0
    %1181 = vmatprep.mubr.bf16.mxu0 0
    %1182 = vmatmul.mubr.bf16.gmra.mxu0 %v620
    %v1183 = vpop.f32.mrf.mxu0
    %v1184 = vadd.f32 %v1119, %v1183
    %v1185 = vpop.f32.mrf.mxu0
    %v1186 = vpop.f32.mrf.mxu0
    %v1187 = vadd.f32 %v1119, %v1186
    %v1188 = vpop.f32.mrf.mxu0
    %1189 = vmatprep.mubr.bf16.mxu0 0
    %1190 = vmatmul.mubr.bf16.gmra.mxu0 %v623
    %v1191 = vpop.f32.mrf.mxu0
    %v1192 = vadd.f32 %v1119, %v1191
    %v1193 = vpop.f32.mrf.mxu0
    %v1194 = vpop.f32.mrf.mxu0
    %v1195 = vadd.f32 %v1119, %v1194
    %v1196 = vpop.f32.mrf.mxu0
    %1197 = vmatprep.mubr.bf16.mxu0 0
    %1198 = vmatmul.mubr.bf16.gmra.mxu0 %v626
    %v1199 = vpop.f32.mrf.mxu0
    %v1200 = vadd.f32 %v1119, %v1199
    %v1201 = vpop.f32.mrf.mxu0
    %v1202 = vpop.f32.mrf.mxu0
    %v1203 = vadd.f32 %v1119, %v1202
    %v1204 = vpop.f32.mrf.mxu0
    %1205 = vmatprep.mubr.bf16.mxu0 0
    %1206 = vmatmul.mubr.bf16.gmra.mxu0 %v629
    %v1207 = vpop.f32.mrf.mxu0
    %v1208 = vadd.f32 %v1119, %v1207
    %v1209 = vpop.f32.mrf.mxu0
    %v1210 = vpop.f32.mrf.mxu0
    %v1211 = vadd.f32 %v1119, %v1210
    %v1212 = vpop.f32.mrf.mxu0
    %1213 = vmatprep.mubr.bf16.mxu0 0
    %1214 = vmatmul.mubr.bf16.gmra.mxu0 %v632
    %v1215 = vpop.f32.mrf.mxu0
    %v1216 = vadd.f32 %v1119, %v1215
    %v1217 = vpop.f32.mrf.mxu0
    %v1218 = vpop.f32.mrf.mxu0
    %v1219 = vadd.f32 %v1119, %v1218
    %v1220 = vpop.f32.mrf.mxu0
    %1221 = vmatprep.mubr.bf16.mxu0 0
    %1222 = vmatmul.mubr.bf16.gmra.mxu0 %v635
    %v1223 = vpop.f32.mrf.mxu0
    %v1224 = vadd.f32 %v1119, %v1223
    %v1225 = vpop.f32.mrf.mxu0
    %v1226 = vpop.f32.mrf.mxu0
    %v1227 = vadd.f32 %v1119, %v1226
    %v1228 = vpop.f32.mrf.mxu0
    %1229 = vmatprep.mubr.bf16.mxu0 0
    %1230 = vmatmul.mubr.bf16.gmra.mxu0 %v638
    %v1231 = vpop.f32.mrf.mxu0
    %v1232 = vadd.f32 %v1119, %v1231
    %v1233 = vpop.f32.mrf.mxu0
    %v1234 = vpop.f32.mrf.mxu0
    %v1235 = vadd.f32 %v1119, %v1234
    %v1236 = vpop.f32.mrf.mxu0
    %1237 = vmatprep.mubr.bf16.mxu0 0
    %1238 = vmatmul.mubr.bf16.gmra.mxu0 %v641
    %v1239 = vpop.f32.mrf.mxu0
    %v1240 = vadd.f32 %v1119, %v1239
    %v1241 = vpop.f32.mrf.mxu0
    %v1242 = vpop.f32.mrf.mxu0
    %v1243 = vadd.f32 %v1119, %v1242
    %v1244 = vpop.f32.mrf.mxu0
    %1245 = vmatprep.mubr.bf16.mxu0 0
    %1246 = vmatmul.mubr.bf16.gmra.mxu0 %v644
    %v1247 = vpop.f32.mrf.mxu0
    %v1248 = vadd.f32 %v1119, %v1247
    %v1249 = vpop.f32.mrf.mxu0
    %v1250 = vpop.f32.mrf.mxu0
    %v1251 = vadd.f32 %v1119, %v1250
    %v1252 = vpop.f32.mrf.mxu0
    %1253 = vmatprep.mubr.bf16.mxu0 0
    %1254 = vmatmul.mubr.bf16.gmra.mxu0 %v647
    %v1255 = vpop.f32.mrf.mxu0
    %v1256 = vadd.f32 %v1119, %v1255
    %v1257 = vpop.f32.mrf.mxu0
    %v1258 = vpop.f32.mrf.mxu0
    %v1259 = vadd.f32 %v1119, %v1258
    %v1260 = vpop.f32.mrf.mxu0
    %1261 = vmatprep.mubr.bf16.mxu0 0
    %1262 = vmatmul.mubr.bf16.gmra.mxu0 %v650
    %v1263 = vpop.f32.mrf.mxu0
    %v1264 = vadd.f32 %v1119, %v1263
    %v1265 = vpop.f32.mrf.mxu0
    %v1266 = vpop.f32.mrf.mxu0
    %v1267 = vadd.f32 %v1119, %v1266
    %v1268 = vpop.f32.mrf.mxu0
    %1269 = vmatprep.mubr.bf16.mxu0 0
    %1270 = vmatmul.mubr.bf16.gmra.mxu0 %v653
    %v1271 = vpop.f32.mrf.mxu0
    %v1272 = vadd.f32 %v1119, %v1271
    %v1273 = vpop.f32.mrf.mxu0
    %v1274 = vpop.f32.mrf.mxu0
    %v1275 = vadd.f32 %v1119, %v1274
    %v1276 = vpop.f32.mrf.mxu0
    %1277 = vmatprep.mubr.bf16.mxu0 0
    %1278 = vmatmul.mubr.bf16.gmra.mxu0 %v656
    %v1279 = vpop.f32.mrf.mxu0
    %v1280 = vadd.f32 %v1119, %v1279
    %v1281 = vpop.f32.mrf.mxu0
    %v1282 = vpop.f32.mrf.mxu0
    %v1283 = vadd.f32 %v1119, %v1282
    %v1284 = vpop.f32.mrf.mxu0
    %1285 = vmatprep.mubr.bf16.mxu0 0
    %1286 = vmatmul.mubr.bf16.gmra.mxu0 %v659
    %v1287 = vpop.f32.mrf.mxu0
    %v1288 = vadd.f32 %v1119, %v1287
    %v1289 = vpop.f32.mrf.mxu0
    %v1290 = vpop.f32.mrf.mxu0
    %v1291 = vadd.f32 %v1119, %v1290
    %v1292 = vpop.f32.mrf.mxu0
    %1293 = vdwg.mxu0
    %v1294 = vpack.c.bf16 %v1171, %v1168
    %v1295 = vpack.c.bf16 %v1179, %v1176
    %v1296 = vpack.c.bf16 %v1187, %v1184
    %v1297 = vpack.c.bf16 %v1195, %v1192
    %v1298 = vpack.c.bf16 %v1203, %v1200
    %v1299 = vpack.c.bf16 %v1211, %v1208
    %v1300 = vpack.c.bf16 %v1219, %v1216
    %v1301 = vpack.c.bf16 %v1227, %v1224
    %v1302 = vpack.c.bf16 %v1235, %v1232
    %v1303 = vpack.c.bf16 %v1243, %v1240
    %v1304 = vpack.c.bf16 %v1251, %v1248
    %v1305 = vpack.c.bf16 %v1259, %v1256
    %v1306 = vpack.c.bf16 %v1267, %v1264
    %v1307 = vpack.c.bf16 %v1275, %v1272
    %v1308 = vpack.c.bf16 %v1283, %v1280
    %v1309 = vpack.c.bf16 %v1291, %v1288
    %s1310 = scalar_lea.vmem %s6, 4
    %v1311 = vld [vmem:[%s1310] sm:$0xf]
    %s1312 = scalar_lea.vmem %s3, 32
    %v1313 = vld [vmem:[%s1312] sm:$0xf]
    %v1314 = vld [vmem:[%s1312 + $0x4] sm:$0xf]
    %v1315 = vld [vmem:[%s1312 + $0x8] sm:$0xf]
    %v1316 = vld [vmem:[%s1312 + $0xc] sm:$0xf]
    %s1317 = scalar_lea.vmem %s7, 2
    %v1318 = vld [vmem:[%s1317] sm:$0x1]
    %v1320 = vlaneseq
    %v1321 = vshrl.u32 %v1320, 7
    %v1322 = vsub.s32 0, %v1321
    %v1323 = vrot.slane %v1318, %v1322
    %v1329 = vunpack.c.l.b16 %v1313
    %v1330 = vunpack.c.l.b16 %v1314
    %v1331 = vunpack.c.l.b16 %v1315
    %v1332 = vunpack.c.l.b16 %v1316
    %v1333 = vpack.c.b16 %v1330, %v1329
    %v1334 = vpack.c.b16 %v1332, %v1331
    %1337 = vmatprep.subr.bf16.mxu0 0
    %1338 = vmatpush1.bf16.msra.mxu0 0
    %1339 = vmatprep.subr.bf16.mxu0 0
    %1340 = vmatpush1.bf16.msra.mxu0 0
    %1341 = vmatprep.subr.bf16.mxu0 0
    %1342 = vmatpush1.bf16.msra.mxu0 0
    %1343 = vmatprep.subr.bf16.mxu0 0
    %1344 = vmatpush1.bf16.msra.mxu0 0
    %1345 = vmatprep.subr.bf16.mxu0 0
    %1346 = vmatpush1.bf16.msra.mxu0 0
    %1347 = vmatprep.subr.bf16.mxu0 0
    %1348 = vmatpush1.bf16.msra.mxu0 0
    %1349 = vmatprep.subr.bf16.mxu0 0
    %1350 = vmatpush1.bf16.msra.mxu0 %v1334
    %1351 = vmatprep.subr.bf16.mxu0 0
    %1352 = vmatpush1.bf16.msra.mxu0 %v1333
    %1353 = vmatprep.subr.bf16.mxu0 0
    %1354 = vmatpush2.bf16.msra.mxu0 0
    %1355 = vmatprep.subr.bf16.mxu0 0
    %1356 = vmatpush2.bf16.msra.mxu0 0
    %1357 = vmatprep.subr.bf16.mxu0 0
    %1358 = vmatpush2.bf16.msra.mxu0 0
    %1359 = vmatprep.subr.bf16.mxu0 0
    %1360 = vmatpush2.bf16.msra.mxu0 0
    %1361 = vmatprep.subr.bf16.mxu0 0
    %1362 = vmatpush2.bf16.msra.mxu0 0
    %1363 = vmatprep.subr.bf16.mxu0 0
    %1364 = vmatpush2.bf16.msra.mxu0 0
    %1365 = vmatprep.subr.bf16.mxu0 0
    %1366 = vmatpush2.bf16.msra.mxu0 0
    %1367 = vmatprep.subr.bf16.mxu0 0
    %1368 = vmatpush2.bf16.msra.mxu0 0
    %1369 = vmatprep.mubr.bf16.mxu0 0
    %1370 = vmatmul.mubr.bf16.gmra.mxu0 %v138
    %v1371 = vpop.f32.mrf.mxu0
    %v1372 = vadd.f32 %v1323, %v1371
    %v1373 = vpop.f32.mrf.mxu0
    %v1374 = vpop.f32.mrf.mxu0
    %v1375 = vadd.f32 %v1323, %v1374
    %v1376 = vpop.f32.mrf.mxu0
    %1377 = vdwg.mxu0
    %v1378 = vpack.c.bf16 %v1375, %v1372
    %s1379 = scalar_lea.vmem %s4, 32
    %v1380 = vld [vmem:[%s1379] sm:$0xf]
    %v1381 = vld [vmem:[%s1379 + $0x4] sm:$0xf]
    %v1382 = vld [vmem:[%s1379 + $0x8] sm:$0xf]
    %v1383 = vld [vmem:[%s1379 + $0xc] sm:$0xf]
    %s1384 = scalar_lea.vmem %s8, 2
    %v1385 = vld [vmem:[%s1384] sm:$0x1]
    %v1387 = vlaneseq
    %v1388 = vshrl.u32 %v1387, 7
    %v1389 = vsub.s32 0, %v1388
    %v1390 = vrot.slane %v1385, %v1389
    %v1396 = vunpack.c.l.b16 %v1380
    %v1397 = vunpack.c.l.b16 %v1381
    %v1398 = vunpack.c.l.b16 %v1382
    %v1399 = vunpack.c.l.b16 %v1383
    %v1400 = vpack.c.b16 %v1397, %v1396
    %v1401 = vpack.c.b16 %v1399, %v1398
    %1404 = vmatprep.subr.bf16.mxu0 0
    %1405 = vmatpush1.bf16.msra.mxu0 0
    %1406 = vmatprep.subr.bf16.mxu0 0
    %1407 = vmatpush1.bf16.msra.mxu0 0
    %1408 = vmatprep.subr.bf16.mxu0 0
    %1409 = vmatpush1.bf16.msra.mxu0 0
    %1410 = vmatprep.subr.bf16.mxu0 0
    %1411 = vmatpush1.bf16.msra.mxu0 0
    %1412 = vmatprep.subr.bf16.mxu0 0
    %1413 = vmatpush1.bf16.msra.mxu0 0
    %1414 = vmatprep.subr.bf16.mxu0 0
    %1415 = vmatpush1.bf16.msra.mxu0 0
    %1416 = vmatprep.subr.bf16.mxu0 0
    %1417 = vmatpush1.bf16.msra.mxu0 %v1401
    %1418 = vmatprep.subr.bf16.mxu0 0
    %1419 = vmatpush1.bf16.msra.mxu0 %v1400
    %1420 = vmatprep.subr.bf16.mxu0 0
    %1421 = vmatpush2.bf16.msra.mxu0 0
    %1422 = vmatprep.subr.bf16.mxu0 0
    %1423 = vmatpush2.bf16.msra.mxu0 0
    %1424 = vmatprep.subr.bf16.mxu0 0
    %1425 = vmatpush2.bf16.msra.mxu0 0
    %1426 = vmatprep.subr.bf16.mxu0 0
    %1427 = vmatpush2.bf16.msra.mxu0 0
    %1428 = vmatprep.subr.bf16.mxu0 0
    %1429 = vmatpush2.bf16.msra.mxu0 0
    %1430 = vmatprep.subr.bf16.mxu0 0
    %1431 = vmatpush2.bf16.msra.mxu0 0
    %1432 = vmatprep.subr.bf16.mxu0 0
    %1433 = vmatpush2.bf16.msra.mxu0 0
    %1434 = vmatprep.subr.bf16.mxu0 0
    %1435 = vmatpush2.bf16.msra.mxu0 0
    %1436 = vmatprep.mubr.bf16.mxu0 0
    %1437 = vmatmul.mubr.bf16.gmra.mxu0 %v286
    %v1438 = vpop.f32.mrf.mxu0
    %v1439 = vadd.f32 %v1390, %v1438
    %v1440 = vpop.f32.mrf.mxu0
    %v1441 = vpop.f32.mrf.mxu0
    %v1442 = vadd.f32 %v1390, %v1441
    %v1443 = vpop.f32.mrf.mxu0
    %1444 = vmatprep.mubr.bf16.mxu0 0
    %1445 = vmatmul.mubr.bf16.gmra.mxu0 %v289
    %v1446 = vpop.f32.mrf.mxu0
    %v1447 = vadd.f32 %v1390, %v1446
    %v1448 = vpop.f32.mrf.mxu0
    %v1449 = vpop.f32.mrf.mxu0
    %v1450 = vadd.f32 %v1390, %v1449
    %v1451 = vpop.f32.mrf.mxu0
    %1452 = vmatprep.mubr.bf16.mxu0 0
    %1453 = vmatmul.mubr.bf16.gmra.mxu0 %v292
    %v1454 = vpop.f32.mrf.mxu0
    %v1455 = vadd.f32 %v1390, %v1454
    %v1456 = vpop.f32.mrf.mxu0
    %v1457 = vpop.f32.mrf.mxu0
    %v1458 = vadd.f32 %v1390, %v1457
    %v1459 = vpop.f32.mrf.mxu0
    %1460 = vmatprep.mubr.bf16.mxu0 0
    %1461 = vmatmul.mubr.bf16.gmra.mxu0 %v295
    %v1462 = vpop.f32.mrf.mxu0
    %v1463 = vadd.f32 %v1390, %v1462
    %v1464 = vpop.f32.mrf.mxu0
    %v1465 = vpop.f32.mrf.mxu0
    %v1466 = vadd.f32 %v1390, %v1465
    %v1467 = vpop.f32.mrf.mxu0
    %1468 = vmatprep.mubr.bf16.mxu0 0
    %1469 = vmatmul.mubr.bf16.gmra.mxu0 %v298
    %v1470 = vpop.f32.mrf.mxu0
    %v1471 = vadd.f32 %v1390, %v1470
    %v1472 = vpop.f32.mrf.mxu0
    %v1473 = vpop.f32.mrf.mxu0
    %v1474 = vadd.f32 %v1390, %v1473
    %v1475 = vpop.f32.mrf.mxu0
    %1476 = vmatprep.mubr.bf16.mxu0 0
    %1477 = vmatmul.mubr.bf16.gmra.mxu0 %v301
    %v1478 = vpop.f32.mrf.mxu0
    %v1479 = vadd.f32 %v1390, %v1478
    %v1480 = vpop.f32.mrf.mxu0
    %v1481 = vpop.f32.mrf.mxu0
    %v1482 = vadd.f32 %v1390, %v1481
    %v1483 = vpop.f32.mrf.mxu0
    %1484 = vmatprep.mubr.bf16.mxu0 0
    %1485 = vmatmul.mubr.bf16.gmra.mxu0 %v304
    %v1486 = vpop.f32.mrf.mxu0
    %v1487 = vadd.f32 %v1390, %v1486
    %v1488 = vpop.f32.mrf.mxu0
    %v1489 = vpop.f32.mrf.mxu0
    %v1490 = vadd.f32 %v1390, %v1489
    %v1491 = vpop.f32.mrf.mxu0
    %1492 = vmatprep.mubr.bf16.mxu0 0
    %1493 = vmatmul.mubr.bf16.gmra.mxu0 %v307
    %v1494 = vpop.f32.mrf.mxu0
    %v1495 = vadd.f32 %v1390, %v1494
    %v1496 = vpop.f32.mrf.mxu0
    %v1497 = vpop.f32.mrf.mxu0
    %v1498 = vadd.f32 %v1390, %v1497
    %v1499 = vpop.f32.mrf.mxu0
    %1500 = vmatprep.mubr.bf16.mxu0 0
    %1501 = vmatmul.mubr.bf16.gmra.mxu0 %v310
    %v1502 = vpop.f32.mrf.mxu0
    %v1503 = vadd.f32 %v1390, %v1502
    %v1504 = vpop.f32.mrf.mxu0
    %v1505 = vpop.f32.mrf.mxu0
    %v1506 = vadd.f32 %v1390, %v1505
    %v1507 = vpop.f32.mrf.mxu0
    %1508 = vmatprep.mubr.bf16.mxu0 0
    %1509 = vmatmul.mubr.bf16.gmra.mxu0 %v313
    %v1510 = vpop.f32.mrf.mxu0
    %v1511 = vadd.f32 %v1390, %v1510
    %v1512 = vpop.f32.mrf.mxu0
    %v1513 = vpop.f32.mrf.mxu0
    %v1514 = vadd.f32 %v1390, %v1513
    %v1515 = vpop.f32.mrf.mxu0
    %1516 = vmatprep.mubr.bf16.mxu0 0
    %1517 = vmatmul.mubr.bf16.gmra.mxu0 %v316
    %v1518 = vpop.f32.mrf.mxu0
    %v1519 = vadd.f32 %v1390, %v1518
    %v1520 = vpop.f32.mrf.mxu0
    %v1521 = vpop.f32.mrf.mxu0
    %v1522 = vadd.f32 %v1390, %v1521
    %v1523 = vpop.f32.mrf.mxu0
    %1524 = vmatprep.mubr.bf16.mxu0 0
    %1525 = vmatmul.mubr.bf16.gmra.mxu0 %v319
    %v1526 = vpop.f32.mrf.mxu0
    %v1527 = vadd.f32 %v1390, %v1526
    %v1528 = vpop.f32.mrf.mxu0
    %v1529 = vpop.f32.mrf.mxu0
    %v1530 = vadd.f32 %v1390, %v1529
    %v1531 = vpop.f32.mrf.mxu0
    %1532 = vmatprep.mubr.bf16.mxu0 0
    %1533 = vmatmul.mubr.bf16.gmra.mxu0 %v322
    %v1534 = vpop.f32.mrf.mxu0
    %v1535 = vadd.f32 %v1390, %v1534
    %v1536 = vpop.f32.mrf.mxu0
    %v1537 = vpop.f32.mrf.mxu0
    %v1538 = vadd.f32 %v1390, %v1537
    %v1539 = vpop.f32.mrf.mxu0
    %1540 = vmatprep.mubr.bf16.mxu0 0
    %1541 = vmatmul.mubr.bf16.gmra.mxu0 %v325
    %v1542 = vpop.f32.mrf.mxu0
    %v1543 = vadd.f32 %v1390, %v1542
    %v1544 = vpop.f32.mrf.mxu0
    %v1545 = vpop.f32.mrf.mxu0
    %v1546 = vadd.f32 %v1390, %v1545
    %v1547 = vpop.f32.mrf.mxu0
    %1548 = vmatprep.mubr.bf16.mxu0 0
    %1549 = vmatmul.mubr.bf16.gmra.mxu0 %v328
    %v1550 = vpop.f32.mrf.mxu0
    %v1551 = vadd.f32 %v1390, %v1550
    %v1552 = vpop.f32.mrf.mxu0
    %v1553 = vpop.f32.mrf.mxu0
    %v1554 = vadd.f32 %v1390, %v1553
    %v1555 = vpop.f32.mrf.mxu0
    %1556 = vmatprep.mubr.bf16.mxu0 0
    %1557 = vmatmul.mubr.bf16.gmra.mxu0 %v331
    %v1558 = vpop.f32.mrf.mxu0
    %v1559 = vadd.f32 %v1390, %v1558
    %v1560 = vpop.f32.mrf.mxu0
    %v1561 = vpop.f32.mrf.mxu0
    %v1562 = vadd.f32 %v1390, %v1561
    %v1563 = vpop.f32.mrf.mxu0
    %1564 = vdwg.mxu0
    %v1565 = vpack.c.bf16 %v1442, %v1439
    %v1566 = vpack.c.bf16 %v1450, %v1447
    %v1567 = vpack.c.bf16 %v1458, %v1455
    %v1568 = vpack.c.bf16 %v1466, %v1463
    %v1569 = vpack.c.bf16 %v1474, %v1471
    %v1570 = vpack.c.bf16 %v1482, %v1479
    %v1571 = vpack.c.bf16 %v1490, %v1487
    %v1572 = vpack.c.bf16 %v1498, %v1495
    %v1573 = vpack.c.bf16 %v1506, %v1503
    %v1574 = vpack.c.bf16 %v1514, %v1511
    %v1575 = vpack.c.bf16 %v1522, %v1519
    %v1576 = vpack.c.bf16 %v1530, %v1527
    %v1577 = vpack.c.bf16 %v1538, %v1535
    %v1578 = vpack.c.bf16 %v1546, %v1543
    %v1579 = vpack.c.bf16 %v1554, %v1551
    %v1580 = vpack.c.bf16 %v1562, %v1559
    %s1581 = scalar_lea.vmem %s5, 32
    %v1582 = vld [vmem:[%s1581] sm:$0xf]
    %v1583 = vld [vmem:[%s1581 + $0x4] sm:$0xf]
    %v1584 = vld [vmem:[%s1581 + $0x8] sm:$0xf]
    %v1585 = vld [vmem:[%s1581 + $0xc] sm:$0xf]
    %s1586 = scalar_lea.vmem %s9, 2
    %v1587 = vld [vmem:[%s1586] sm:$0x1]
    %v1589 = vlaneseq
    %v1590 = vshrl.u32 %v1589, 7
    %v1591 = vsub.s32 0, %v1590
    %v1592 = vrot.slane %v1587, %v1591
    %v1598 = vunpack.c.l.b16 %v1582
    %v1599 = vunpack.c.l.b16 %v1583
    %v1600 = vunpack.c.l.b16 %v1584
    %v1601 = vunpack.c.l.b16 %v1585
    %v1602 = vpack.c.b16 %v1599, %v1598
    %v1603 = vpack.c.b16 %v1601, %v1600
    %1606 = vmatprep.subr.bf16.mxu0 0
    %1607 = vmatpush1.bf16.msra.mxu0 0
    %1608 = vmatprep.subr.bf16.mxu0 0
    %1609 = vmatpush1.bf16.msra.mxu0 0
    %1610 = vmatprep.subr.bf16.mxu0 0
    %1611 = vmatpush1.bf16.msra.mxu0 0
    %1612 = vmatprep.subr.bf16.mxu0 0
    %1613 = vmatpush1.bf16.msra.mxu0 0
    %1614 = vmatprep.subr.bf16.mxu0 0
    %1615 = vmatpush1.bf16.msra.mxu0 0
    %1616 = vmatprep.subr.bf16.mxu0 0
    %1617 = vmatpush1.bf16.msra.mxu0 0
    %1618 = vmatprep.subr.bf16.mxu0 0
    %1619 = vmatpush1.bf16.msra.mxu0 %v1603
    %1620 = vmatprep.subr.bf16.mxu0 0
    %1621 = vmatpush1.bf16.msra.mxu0 %v1602
    %1622 = vmatprep.subr.bf16.mxu0 0
    %1623 = vmatpush2.bf16.msra.mxu0 0
    %1624 = vmatprep.subr.bf16.mxu0 0
    %1625 = vmatpush2.bf16.msra.mxu0 0
    %1626 = vmatprep.subr.bf16.mxu0 0
    %1627 = vmatpush2.bf16.msra.mxu0 0
    %1628 = vmatprep.subr.bf16.mxu0 0
    %1629 = vmatpush2.bf16.msra.mxu0 0
    %1630 = vmatprep.subr.bf16.mxu0 0
    %1631 = vmatpush2.bf16.msra.mxu0 0
    %1632 = vmatprep.subr.bf16.mxu0 0
    %1633 = vmatpush2.bf16.msra.mxu0 0
    %1634 = vmatprep.subr.bf16.mxu0 0
    %1635 = vmatpush2.bf16.msra.mxu0 0
    %1636 = vmatprep.subr.bf16.mxu0 0
    %1637 = vmatpush2.bf16.msra.mxu0 0
    %1638 = vmatprep.mubr.bf16.mxu0 0
    %1639 = vmatmul.mubr.bf16.gmra.mxu0 %v614
    %v1640 = vpop.f32.mrf.mxu0
    %v1641 = vadd.f32 %v1592, %v1640
    %v1642 = vpop.f32.mrf.mxu0
    %v1643 = vpop.f32.mrf.mxu0
    %v1644 = vadd.f32 %v1592, %v1643
    %v1645 = vpop.f32.mrf.mxu0
    %1646 = vmatprep.mubr.bf16.mxu0 0
    %1647 = vmatmul.mubr.bf16.gmra.mxu0 %v617
    %v1648 = vpop.f32.mrf.mxu0
    %v1649 = vadd.f32 %v1592, %v1648
    %v1650 = vpop.f32.mrf.mxu0
    %v1651 = vpop.f32.mrf.mxu0
    %v1652 = vadd.f32 %v1592, %v1651
    %v1653 = vpop.f32.mrf.mxu0
    %1654 = vmatprep.mubr.bf16.mxu0 0
    %1655 = vmatmul.mubr.bf16.gmra.mxu0 %v620
    %v1656 = vpop.f32.mrf.mxu0
    %v1657 = vadd.f32 %v1592, %v1656
    %v1658 = vpop.f32.mrf.mxu0
    %v1659 = vpop.f32.mrf.mxu0
    %v1660 = vadd.f32 %v1592, %v1659
    %v1661 = vpop.f32.mrf.mxu0
    %1662 = vmatprep.mubr.bf16.mxu0 0
    %1663 = vmatmul.mubr.bf16.gmra.mxu0 %v623
    %v1664 = vpop.f32.mrf.mxu0
    %v1665 = vadd.f32 %v1592, %v1664
    %v1666 = vpop.f32.mrf.mxu0
    %v1667 = vpop.f32.mrf.mxu0
    %v1668 = vadd.f32 %v1592, %v1667
    %v1669 = vpop.f32.mrf.mxu0
    %1670 = vmatprep.mubr.bf16.mxu0 0
    %1671 = vmatmul.mubr.bf16.gmra.mxu0 %v626
    %v1672 = vpop.f32.mrf.mxu0
    %v1673 = vadd.f32 %v1592, %v1672
    %v1674 = vpop.f32.mrf.mxu0
    %v1675 = vpop.f32.mrf.mxu0
    %v1676 = vadd.f32 %v1592, %v1675
    %v1677 = vpop.f32.mrf.mxu0
    %1678 = vmatprep.mubr.bf16.mxu0 0
    %1679 = vmatmul.mubr.bf16.gmra.mxu0 %v629
    %v1680 = vpop.f32.mrf.mxu0
    %v1681 = vadd.f32 %v1592, %v1680
    %v1682 = vpop.f32.mrf.mxu0
    %v1683 = vpop.f32.mrf.mxu0
    %v1684 = vadd.f32 %v1592, %v1683
    %v1685 = vpop.f32.mrf.mxu0
    %1686 = vmatprep.mubr.bf16.mxu0 0
    %1687 = vmatmul.mubr.bf16.gmra.mxu0 %v632
    %v1688 = vpop.f32.mrf.mxu0
    %v1689 = vadd.f32 %v1592, %v1688
    %v1690 = vpop.f32.mrf.mxu0
    %v1691 = vpop.f32.mrf.mxu0
    %v1692 = vadd.f32 %v1592, %v1691
    %v1693 = vpop.f32.mrf.mxu0
    %1694 = vmatprep.mubr.bf16.mxu0 0
    %1695 = vmatmul.mubr.bf16.gmra.mxu0 %v635
    %v1696 = vpop.f32.mrf.mxu0
    %v1697 = vadd.f32 %v1592, %v1696
    %v1698 = vpop.f32.mrf.mxu0
    %v1699 = vpop.f32.mrf.mxu0
    %v1700 = vadd.f32 %v1592, %v1699
    %v1701 = vpop.f32.mrf.mxu0
    %1702 = vmatprep.mubr.bf16.mxu0 0
    %1703 = vmatmul.mubr.bf16.gmra.mxu0 %v638
    %v1704 = vpop.f32.mrf.mxu0
    %v1705 = vadd.f32 %v1592, %v1704
    %v1706 = vpop.f32.mrf.mxu0
    %v1707 = vpop.f32.mrf.mxu0
    %v1708 = vadd.f32 %v1592, %v1707
    %v1709 = vpop.f32.mrf.mxu0
    %1710 = vmatprep.mubr.bf16.mxu0 0
    %1711 = vmatmul.mubr.bf16.gmra.mxu0 %v641
    %v1712 = vpop.f32.mrf.mxu0
    %v1713 = vadd.f32 %v1592, %v1712
    %v1714 = vpop.f32.mrf.mxu0
    %v1715 = vpop.f32.mrf.mxu0
    %v1716 = vadd.f32 %v1592, %v1715
    %v1717 = vpop.f32.mrf.mxu0
    %1718 = vmatprep.mubr.bf16.mxu0 0
    %1719 = vmatmul.mubr.bf16.gmra.mxu0 %v644
    %v1720 = vpop.f32.mrf.mxu0
    %v1721 = vadd.f32 %v1592, %v1720
    %v1722 = vpop.f32.mrf.mxu0
    %v1723 = vpop.f32.mrf.mxu0
    %v1724 = vadd.f32 %v1592, %v1723
    %v1725 = vpop.f32.mrf.mxu0
    %1726 = vmatprep.mubr.bf16.mxu0 0
    %1727 = vmatmul.mubr.bf16.gmra.mxu0 %v647
    %v1728 = vpop.f32.mrf.mxu0
    %v1729 = vadd.f32 %v1592, %v1728
    %v1730 = vpop.f32.mrf.mxu0
    %v1731 = vpop.f32.mrf.mxu0
    %v1732 = vadd.f32 %v1592, %v1731
    %v1733 = vpop.f32.mrf.mxu0
    %1734 = vmatprep.mubr.bf16.mxu0 0
    %1735 = vmatmul.mubr.bf16.gmra.mxu0 %v650
    %v1736 = vpop.f32.mrf.mxu0
    %v1737 = vadd.f32 %v1592, %v1736
    %v1738 = vpop.f32.mrf.mxu0
    %v1739 = vpop.f32.mrf.mxu0
    %v1740 = vadd.f32 %v1592, %v1739
    %v1741 = vpop.f32.mrf.mxu0
    %1742 = vmatprep.mubr.bf16.mxu0 0
    %1743 = vmatmul.mubr.bf16.gmra.mxu0 %v653
    %v1744 = vpop.f32.mrf.mxu0
    %v1745 = vadd.f32 %v1592, %v1744
    %v1746 = vpop.f32.mrf.mxu0
    %v1747 = vpop.f32.mrf.mxu0
    %v1748 = vadd.f32 %v1592, %v1747
    %v1749 = vpop.f32.mrf.mxu0
    %1750 = vmatprep.mubr.bf16.mxu0 0
    %1751 = vmatmul.mubr.bf16.gmra.mxu0 %v656
    %v1752 = vpop.f32.mrf.mxu0
    %v1753 = vadd.f32 %v1592, %v1752
    %v1754 = vpop.f32.mrf.mxu0
    %v1755 = vpop.f32.mrf.mxu0
    %v1756 = vadd.f32 %v1592, %v1755
    %v1757 = vpop.f32.mrf.mxu0
    %1758 = vmatprep.mubr.bf16.mxu0 0
    %1759 = vmatmul.mubr.bf16.gmra.mxu0 %v659
    %v1760 = vpop.f32.mrf.mxu0
    %v1761 = vadd.f32 %v1592, %v1760
    %v1762 = vpop.f32.mrf.mxu0
    %v1763 = vpop.f32.mrf.mxu0
    %v1764 = vadd.f32 %v1592, %v1763
    %v1765 = vpop.f32.mrf.mxu0
    %1766 = vdwg.mxu0
    %v1767 = vpack.c.bf16 %v1644, %v1641
    %v1768 = vpack.c.bf16 %v1652, %v1649
    %v1769 = vpack.c.bf16 %v1660, %v1657
    %v1770 = vpack.c.bf16 %v1668, %v1665
    %v1771 = vpack.c.bf16 %v1676, %v1673
    %v1772 = vpack.c.bf16 %v1684, %v1681
    %v1773 = vpack.c.bf16 %v1692, %v1689
    %v1774 = vpack.c.bf16 %v1700, %v1697
    %v1775 = vpack.c.bf16 %v1708, %v1705
    %v1776 = vpack.c.bf16 %v1716, %v1713
    %v1777 = vpack.c.bf16 %v1724, %v1721
    %v1778 = vpack.c.bf16 %v1732, %v1729
    %v1779 = vpack.c.bf16 %v1740, %v1737
    %v1780 = vpack.c.bf16 %v1748, %v1745
    %v1781 = vpack.c.bf16 %v1756, %v1753
    %v1782 = vpack.c.bf16 %v1764, %v1761
    %s1783 = scalar_lea.vmem %s6, 8
    %v1784 = vld [vmem:[%s1783] sm:$0xf]
    %s1785 = scalar_lea.vmem %s3, 48
    %v1786 = vld [vmem:[%s1785] sm:$0xf]
    %v1787 = vld [vmem:[%s1785 + $0x4] sm:$0xf]
    %v1788 = vld [vmem:[%s1785 + $0x8] sm:$0xf]
    %v1789 = vld [vmem:[%s1785 + $0xc] sm:$0xf]
    %s1790 = scalar_lea.vmem %s7, 3
    %v1791 = vld [vmem:[%s1790] sm:$0x1]
    %v1793 = vlaneseq
    %v1794 = vshrl.u32 %v1793, 7
    %v1795 = vsub.s32 0, %v1794
    %v1796 = vrot.slane %v1791, %v1795
    %v1802 = vunpack.c.l.b16 %v1786
    %v1803 = vunpack.c.l.b16 %v1787
    %v1804 = vunpack.c.l.b16 %v1788
    %v1805 = vunpack.c.l.b16 %v1789
    %v1806 = vpack.c.b16 %v1803, %v1802
    %v1807 = vpack.c.b16 %v1805, %v1804
    %1810 = vmatprep.subr.bf16.mxu0 0
    %1811 = vmatpush1.bf16.msra.mxu0 0
    %1812 = vmatprep.subr.bf16.mxu0 0
    %1813 = vmatpush1.bf16.msra.mxu0 0
    %1814 = vmatprep.subr.bf16.mxu0 0
    %1815 = vmatpush1.bf16.msra.mxu0 0
    %1816 = vmatprep.subr.bf16.mxu0 0
    %1817 = vmatpush1.bf16.msra.mxu0 0
    %1818 = vmatprep.subr.bf16.mxu0 0
    %1819 = vmatpush1.bf16.msra.mxu0 0
    %1820 = vmatprep.subr.bf16.mxu0 0
    %1821 = vmatpush1.bf16.msra.mxu0 0
    %1822 = vmatprep.subr.bf16.mxu0 0
    %1823 = vmatpush1.bf16.msra.mxu0 %v1807
    %1824 = vmatprep.subr.bf16.mxu0 0
    %1825 = vmatpush1.bf16.msra.mxu0 %v1806
    %1826 = vmatprep.subr.bf16.mxu0 0
    %1827 = vmatpush2.bf16.msra.mxu0 0
    %1828 = vmatprep.subr.bf16.mxu0 0
    %1829 = vmatpush2.bf16.msra.mxu0 0
    %1830 = vmatprep.subr.bf16.mxu0 0
    %1831 = vmatpush2.bf16.msra.mxu0 0
    %1832 = vmatprep.subr.bf16.mxu0 0
    %1833 = vmatpush2.bf16.msra.mxu0 0
    %1834 = vmatprep.subr.bf16.mxu0 0
    %1835 = vmatpush2.bf16.msra.mxu0 0
    %1836 = vmatprep.subr.bf16.mxu0 0
    %1837 = vmatpush2.bf16.msra.mxu0 0
    %1838 = vmatprep.subr.bf16.mxu0 0
    %1839 = vmatpush2.bf16.msra.mxu0 0
    %1840 = vmatprep.subr.bf16.mxu0 0
    %1841 = vmatpush2.bf16.msra.mxu0 0
    %1842 = vmatprep.mubr.bf16.mxu0 0
    %1843 = vmatmul.mubr.bf16.gmra.mxu0 %v138
    %v1844 = vpop.f32.mrf.mxu0
    %v1845 = vadd.f32 %v1796, %v1844
    %v1846 = vpop.f32.mrf.mxu0
    %v1847 = vpop.f32.mrf.mxu0
    %v1848 = vadd.f32 %v1796, %v1847
    %v1849 = vpop.f32.mrf.mxu0
    %1850 = vdwg.mxu0
    %v1851 = vpack.c.bf16 %v1848, %v1845
    %s1852 = scalar_lea.vmem %s4, 48
    %v1853 = vld [vmem:[%s1852] sm:$0xf]
    %v1854 = vld [vmem:[%s1852 + $0x4] sm:$0xf]
    %v1855 = vld [vmem:[%s1852 + $0x8] sm:$0xf]
    %v1856 = vld [vmem:[%s1852 + $0xc] sm:$0xf]
    %s1857 = scalar_lea.vmem %s8, 3
    %v1858 = vld [vmem:[%s1857] sm:$0x1]
    %v1860 = vlaneseq
    %v1861 = vshrl.u32 %v1860, 7
    %v1862 = vsub.s32 0, %v1861
    %v1863 = vrot.slane %v1858, %v1862
    %v1869 = vunpack.c.l.b16 %v1853
    %v1870 = vunpack.c.l.b16 %v1854
    %v1871 = vunpack.c.l.b16 %v1855
    %v1872 = vunpack.c.l.b16 %v1856
    %v1873 = vpack.c.b16 %v1870, %v1869
    %v1874 = vpack.c.b16 %v1872, %v1871
    %1877 = vmatprep.subr.bf16.mxu0 0
    %1878 = vmatpush1.bf16.msra.mxu0 0
    %1879 = vmatprep.subr.bf16.mxu0 0
    %1880 = vmatpush1.bf16.msra.mxu0 0
    %1881 = vmatprep.subr.bf16.mxu0 0
    %1882 = vmatpush1.bf16.msra.mxu0 0
    %1883 = vmatprep.subr.bf16.mxu0 0
    %1884 = vmatpush1.bf16.msra.mxu0 0
    %1885 = vmatprep.subr.bf16.mxu0 0
    %1886 = vmatpush1.bf16.msra.mxu0 0
    %1887 = vmatprep.subr.bf16.mxu0 0
    %1888 = vmatpush1.bf16.msra.mxu0 0
    %1889 = vmatprep.subr.bf16.mxu0 0
    %1890 = vmatpush1.bf16.msra.mxu0 %v1874
    %1891 = vmatprep.subr.bf16.mxu0 0
    %1892 = vmatpush1.bf16.msra.mxu0 %v1873
    %1893 = vmatprep.subr.bf16.mxu0 0
    %1894 = vmatpush2.bf16.msra.mxu0 0
    %1895 = vmatprep.subr.bf16.mxu0 0
    %1896 = vmatpush2.bf16.msra.mxu0 0
    %1897 = vmatprep.subr.bf16.mxu0 0
    %1898 = vmatpush2.bf16.msra.mxu0 0
    %1899 = vmatprep.subr.bf16.mxu0 0
    %1900 = vmatpush2.bf16.msra.mxu0 0
    %1901 = vmatprep.subr.bf16.mxu0 0
    %1902 = vmatpush2.bf16.msra.mxu0 0
    %1903 = vmatprep.subr.bf16.mxu0 0
    %1904 = vmatpush2.bf16.msra.mxu0 0
    %1905 = vmatprep.subr.bf16.mxu0 0
    %1906 = vmatpush2.bf16.msra.mxu0 0
    %1907 = vmatprep.subr.bf16.mxu0 0
    %1908 = vmatpush2.bf16.msra.mxu0 0
    %1909 = vmatprep.mubr.bf16.mxu0 0
    %1910 = vmatmul.mubr.bf16.gmra.mxu0 %v286
    %v1911 = vpop.f32.mrf.mxu0
    %v1912 = vadd.f32 %v1863, %v1911
    %v1913 = vpop.f32.mrf.mxu0
    %v1914 = vpop.f32.mrf.mxu0
    %v1915 = vadd.f32 %v1863, %v1914
    %v1916 = vpop.f32.mrf.mxu0
    %1917 = vmatprep.mubr.bf16.mxu0 0
    %1918 = vmatmul.mubr.bf16.gmra.mxu0 %v289
    %v1919 = vpop.f32.mrf.mxu0
    %v1920 = vadd.f32 %v1863, %v1919
    %v1921 = vpop.f32.mrf.mxu0
    %v1922 = vpop.f32.mrf.mxu0
    %v1923 = vadd.f32 %v1863, %v1922
    %v1924 = vpop.f32.mrf.mxu0
    %1925 = vmatprep.mubr.bf16.mxu0 0
    %1926 = vmatmul.mubr.bf16.gmra.mxu0 %v292
    %v1927 = vpop.f32.mrf.mxu0
    %v1928 = vadd.f32 %v1863, %v1927
    %v1929 = vpop.f32.mrf.mxu0
    %v1930 = vpop.f32.mrf.mxu0
    %v1931 = vadd.f32 %v1863, %v1930
    %v1932 = vpop.f32.mrf.mxu0
    %1933 = vmatprep.mubr.bf16.mxu0 0
    %1934 = vmatmul.mubr.bf16.gmra.mxu0 %v295
    %v1935 = vpop.f32.mrf.mxu0
    %v1936 = vadd.f32 %v1863, %v1935
    %v1937 = vpop.f32.mrf.mxu0
    %v1938 = vpop.f32.mrf.mxu0
    %v1939 = vadd.f32 %v1863, %v1938
    %v1940 = vpop.f32.mrf.mxu0
    %1941 = vmatprep.mubr.bf16.mxu0 0
    %1942 = vmatmul.mubr.bf16.gmra.mxu0 %v298
    %v1943 = vpop.f32.mrf.mxu0
    %v1944 = vadd.f32 %v1863, %v1943
    %v1945 = vpop.f32.mrf.mxu0
    %v1946 = vpop.f32.mrf.mxu0
    %v1947 = vadd.f32 %v1863, %v1946
    %v1948 = vpop.f32.mrf.mxu0
    %1949 = vmatprep.mubr.bf16.mxu0 0
    %1950 = vmatmul.mubr.bf16.gmra.mxu0 %v301
    %v1951 = vpop.f32.mrf.mxu0
    %v1952 = vadd.f32 %v1863, %v1951
    %v1953 = vpop.f32.mrf.mxu0
    %v1954 = vpop.f32.mrf.mxu0
    %v1955 = vadd.f32 %v1863, %v1954
    %v1956 = vpop.f32.mrf.mxu0
    %1957 = vmatprep.mubr.bf16.mxu0 0
    %1958 = vmatmul.mubr.bf16.gmra.mxu0 %v304
    %v1959 = vpop.f32.mrf.mxu0
    %v1960 = vadd.f32 %v1863, %v1959
    %v1961 = vpop.f32.mrf.mxu0
    %v1962 = vpop.f32.mrf.mxu0
    %v1963 = vadd.f32 %v1863, %v1962
    %v1964 = vpop.f32.mrf.mxu0
    %1965 = vmatprep.mubr.bf16.mxu0 0
    %1966 = vmatmul.mubr.bf16.gmra.mxu0 %v307
    %v1967 = vpop.f32.mrf.mxu0
    %v1968 = vadd.f32 %v1863, %v1967
    %v1969 = vpop.f32.mrf.mxu0
    %v1970 = vpop.f32.mrf.mxu0
    %v1971 = vadd.f32 %v1863, %v1970
    %v1972 = vpop.f32.mrf.mxu0
    %1973 = vmatprep.mubr.bf16.mxu0 0
    %1974 = vmatmul.mubr.bf16.gmra.mxu0 %v310
    %v1975 = vpop.f32.mrf.mxu0
    %v1976 = vadd.f32 %v1863, %v1975
    %v1977 = vpop.f32.mrf.mxu0
    %v1978 = vpop.f32.mrf.mxu0
    %v1979 = vadd.f32 %v1863, %v1978
    %v1980 = vpop.f32.mrf.mxu0
    %1981 = vmatprep.mubr.bf16.mxu0 0
    %1982 = vmatmul.mubr.bf16.gmra.mxu0 %v313
    %v1983 = vpop.f32.mrf.mxu0
    %v1984 = vadd.f32 %v1863, %v1983
    %v1985 = vpop.f32.mrf.mxu0
    %v1986 = vpop.f32.mrf.mxu0
    %v1987 = vadd.f32 %v1863, %v1986
    %v1988 = vpop.f32.mrf.mxu0
    %1989 = vmatprep.mubr.bf16.mxu0 0
    %1990 = vmatmul.mubr.bf16.gmra.mxu0 %v316
    %v1991 = vpop.f32.mrf.mxu0
    %v1992 = vadd.f32 %v1863, %v1991
    %v1993 = vpop.f32.mrf.mxu0
    %v1994 = vpop.f32.mrf.mxu0
    %v1995 = vadd.f32 %v1863, %v1994
    %v1996 = vpop.f32.mrf.mxu0
    %1997 = vmatprep.mubr.bf16.mxu0 0
    %1998 = vmatmul.mubr.bf16.gmra.mxu0 %v319
    %v1999 = vpop.f32.mrf.mxu0
    %v2000 = vadd.f32 %v1863, %v1999
    %v2001 = vpop.f32.mrf.mxu0
    %v2002 = vpop.f32.mrf.mxu0
    %v2003 = vadd.f32 %v1863, %v2002
    %v2004 = vpop.f32.mrf.mxu0
    %2005 = vmatprep.mubr.bf16.mxu0 0
    %2006 = vmatmul.mubr.bf16.gmra.mxu0 %v322
    %v2007 = vpop.f32.mrf.mxu0
    %v2008 = vadd.f32 %v1863, %v2007
    %v2009 = vpop.f32.mrf.mxu0
    %v2010 = vpop.f32.mrf.mxu0
    %v2011 = vadd.f32 %v1863, %v2010
    %v2012 = vpop.f32.mrf.mxu0
    %2013 = vmatprep.mubr.bf16.mxu0 0
    %2014 = vmatmul.mubr.bf16.gmra.mxu0 %v325
    %v2015 = vpop.f32.mrf.mxu0
    %v2016 = vadd.f32 %v1863, %v2015
    %v2017 = vpop.f32.mrf.mxu0
    %v2018 = vpop.f32.mrf.mxu0
    %v2019 = vadd.f32 %v1863, %v2018
    %v2020 = vpop.f32.mrf.mxu0
    %2021 = vmatprep.mubr.bf16.mxu0 0
    %2022 = vmatmul.mubr.bf16.gmra.mxu0 %v328
    %v2023 = vpop.f32.mrf.mxu0
    %v2024 = vadd.f32 %v1863, %v2023
    %v2025 = vpop.f32.mrf.mxu0
    %v2026 = vpop.f32.mrf.mxu0
    %v2027 = vadd.f32 %v1863, %v2026
    %v2028 = vpop.f32.mrf.mxu0
    %2029 = vmatprep.mubr.bf16.mxu0 0
    %2030 = vmatmul.mubr.bf16.gmra.mxu0 %v331
    %v2031 = vpop.f32.mrf.mxu0
    %v2032 = vadd.f32 %v1863, %v2031
    %v2033 = vpop.f32.mrf.mxu0
    %v2034 = vpop.f32.mrf.mxu0
    %v2035 = vadd.f32 %v1863, %v2034
    %v2036 = vpop.f32.mrf.mxu0
    %2037 = vdwg.mxu0
    %v2038 = vpack.c.bf16 %v1915, %v1912
    %v2039 = vpack.c.bf16 %v1923, %v1920
    %v2040 = vpack.c.bf16 %v1931, %v1928
    %v2041 = vpack.c.bf16 %v1939, %v1936
    %v2042 = vpack.c.bf16 %v1947, %v1944
    %v2043 = vpack.c.bf16 %v1955, %v1952
    %v2044 = vpack.c.bf16 %v1963, %v1960
    %v2045 = vpack.c.bf16 %v1971, %v1968
    %v2046 = vpack.c.bf16 %v1979, %v1976
    %v2047 = vpack.c.bf16 %v1987, %v1984
    %v2048 = vpack.c.bf16 %v1995, %v1992
    %v2049 = vpack.c.bf16 %v2003, %v2000
    %v2050 = vpack.c.bf16 %v2011, %v2008
    %v2051 = vpack.c.bf16 %v2019, %v2016
    %v2052 = vpack.c.bf16 %v2027, %v2024
    %v2053 = vpack.c.bf16 %v2035, %v2032
    %s2054 = scalar_lea.vmem %s5, 48
    %v2055 = vld [vmem:[%s2054] sm:$0xf]
    %v2056 = vld [vmem:[%s2054 + $0x4] sm:$0xf]
    %v2057 = vld [vmem:[%s2054 + $0x8] sm:$0xf]
    %v2058 = vld [vmem:[%s2054 + $0xc] sm:$0xf]
    %s2059 = scalar_lea.vmem %s9, 3
    %v2060 = vld [vmem:[%s2059] sm:$0x1]
    %v2062 = vlaneseq
    %v2063 = vshrl.u32 %v2062, 7
    %v2064 = vsub.s32 0, %v2063
    %v2065 = vrot.slane %v2060, %v2064
    %v2071 = vunpack.c.l.b16 %v2055
    %v2072 = vunpack.c.l.b16 %v2056
    %v2073 = vunpack.c.l.b16 %v2057
    %v2074 = vunpack.c.l.b16 %v2058
    %v2075 = vpack.c.b16 %v2072, %v2071
    %v2076 = vpack.c.b16 %v2074, %v2073
    %2079 = vmatprep.subr.bf16.mxu0 0
    %2080 = vmatpush1.bf16.msra.mxu0 0
    %2081 = vmatprep.subr.bf16.mxu0 0
    %2082 = vmatpush1.bf16.msra.mxu0 0
    %2083 = vmatprep.subr.bf16.mxu0 0
    %2084 = vmatpush1.bf16.msra.mxu0 0
    %2085 = vmatprep.subr.bf16.mxu0 0
    %2086 = vmatpush1.bf16.msra.mxu0 0
    %2087 = vmatprep.subr.bf16.mxu0 0
    %2088 = vmatpush1.bf16.msra.mxu0 0
    %2089 = vmatprep.subr.bf16.mxu0 0
    %2090 = vmatpush1.bf16.msra.mxu0 0
    %2091 = vmatprep.subr.bf16.mxu0 0
    %2092 = vmatpush1.bf16.msra.mxu0 %v2076
    %2093 = vmatprep.subr.bf16.mxu0 0
    %2094 = vmatpush1.bf16.msra.mxu0 %v2075
    %2095 = vmatprep.subr.bf16.mxu0 0
    %2096 = vmatpush2.bf16.msra.mxu0 0
    %2097 = vmatprep.subr.bf16.mxu0 0
    %2098 = vmatpush2.bf16.msra.mxu0 0
    %2099 = vmatprep.subr.bf16.mxu0 0
    %2100 = vmatpush2.bf16.msra.mxu0 0
    %2101 = vmatprep.subr.bf16.mxu0 0
    %2102 = vmatpush2.bf16.msra.mxu0 0
    %2103 = vmatprep.subr.bf16.mxu0 0
    %2104 = vmatpush2.bf16.msra.mxu0 0
    %2105 = vmatprep.subr.bf16.mxu0 0
    %2106 = vmatpush2.bf16.msra.mxu0 0
    %2107 = vmatprep.subr.bf16.mxu0 0
    %2108 = vmatpush2.bf16.msra.mxu0 0
    %2109 = vmatprep.subr.bf16.mxu0 0
    %2110 = vmatpush2.bf16.msra.mxu0 0
    %2111 = vmatprep.mubr.bf16.mxu0 0
    %2112 = vmatmul.mubr.bf16.gmra.mxu0 %v614
    %v2113 = vpop.f32.mrf.mxu0
    %v2114 = vadd.f32 %v2065, %v2113
    %v2115 = vpop.f32.mrf.mxu0
    %v2116 = vpop.f32.mrf.mxu0
    %v2117 = vadd.f32 %v2065, %v2116
    %v2118 = vpop.f32.mrf.mxu0
    %2119 = vmatprep.mubr.bf16.mxu0 0
    %2120 = vmatmul.mubr.bf16.gmra.mxu0 %v617
    %v2121 = vpop.f32.mrf.mxu0
    %v2122 = vadd.f32 %v2065, %v2121
    %v2123 = vpop.f32.mrf.mxu0
    %v2124 = vpop.f32.mrf.mxu0
    %v2125 = vadd.f32 %v2065, %v2124
    %v2126 = vpop.f32.mrf.mxu0
    %2127 = vmatprep.mubr.bf16.mxu0 0
    %2128 = vmatmul.mubr.bf16.gmra.mxu0 %v620
    %v2129 = vpop.f32.mrf.mxu0
    %v2130 = vadd.f32 %v2065, %v2129
    %v2131 = vpop.f32.mrf.mxu0
    %v2132 = vpop.f32.mrf.mxu0
    %v2133 = vadd.f32 %v2065, %v2132
    %v2134 = vpop.f32.mrf.mxu0
    %2135 = vmatprep.mubr.bf16.mxu0 0
    %2136 = vmatmul.mubr.bf16.gmra.mxu0 %v623
    %v2137 = vpop.f32.mrf.mxu0
    %v2138 = vadd.f32 %v2065, %v2137
    %v2139 = vpop.f32.mrf.mxu0
    %v2140 = vpop.f32.mrf.mxu0
    %v2141 = vadd.f32 %v2065, %v2140
    %v2142 = vpop.f32.mrf.mxu0
    %2143 = vmatprep.mubr.bf16.mxu0 0
    %2144 = vmatmul.mubr.bf16.gmra.mxu0 %v626
    %v2145 = vpop.f32.mrf.mxu0
    %v2146 = vadd.f32 %v2065, %v2145
    %v2147 = vpop.f32.mrf.mxu0
    %v2148 = vpop.f32.mrf.mxu0
    %v2149 = vadd.f32 %v2065, %v2148
    %v2150 = vpop.f32.mrf.mxu0
    %2151 = vmatprep.mubr.bf16.mxu0 0
    %2152 = vmatmul.mubr.bf16.gmra.mxu0 %v629
    %v2153 = vpop.f32.mrf.mxu0
    %v2154 = vadd.f32 %v2065, %v2153
    %v2155 = vpop.f32.mrf.mxu0
    %v2156 = vpop.f32.mrf.mxu0
    %v2157 = vadd.f32 %v2065, %v2156
    %v2158 = vpop.f32.mrf.mxu0
    %2159 = vmatprep.mubr.bf16.mxu0 0
    %2160 = vmatmul.mubr.bf16.gmra.mxu0 %v632
    %v2161 = vpop.f32.mrf.mxu0
    %v2162 = vadd.f32 %v2065, %v2161
    %v2163 = vpop.f32.mrf.mxu0
    %v2164 = vpop.f32.mrf.mxu0
    %v2165 = vadd.f32 %v2065, %v2164
    %v2166 = vpop.f32.mrf.mxu0
    %2167 = vmatprep.mubr.bf16.mxu0 0
    %2168 = vmatmul.mubr.bf16.gmra.mxu0 %v635
    %v2169 = vpop.f32.mrf.mxu0
    %v2170 = vadd.f32 %v2065, %v2169
    %v2171 = vpop.f32.mrf.mxu0
    %v2172 = vpop.f32.mrf.mxu0
    %v2173 = vadd.f32 %v2065, %v2172
    %v2174 = vpop.f32.mrf.mxu0
    %2175 = vmatprep.mubr.bf16.mxu0 0
    %2176 = vmatmul.mubr.bf16.gmra.mxu0 %v638
    %v2177 = vpop.f32.mrf.mxu0
    %v2178 = vadd.f32 %v2065, %v2177
    %v2179 = vpop.f32.mrf.mxu0
    %v2180 = vpop.f32.mrf.mxu0
    %v2181 = vadd.f32 %v2065, %v2180
    %v2182 = vpop.f32.mrf.mxu0
    %2183 = vmatprep.mubr.bf16.mxu0 0
    %2184 = vmatmul.mubr.bf16.gmra.mxu0 %v641
    %v2185 = vpop.f32.mrf.mxu0
    %v2186 = vadd.f32 %v2065, %v2185
    %v2187 = vpop.f32.mrf.mxu0
    %v2188 = vpop.f32.mrf.mxu0
    %v2189 = vadd.f32 %v2065, %v2188
    %v2190 = vpop.f32.mrf.mxu0
    %2191 = vmatprep.mubr.bf16.mxu0 0
    %2192 = vmatmul.mubr.bf16.gmra.mxu0 %v644
    %v2193 = vpop.f32.mrf.mxu0
    %v2194 = vadd.f32 %v2065, %v2193
    %v2195 = vpop.f32.mrf.mxu0
    %v2196 = vpop.f32.mrf.mxu0
    %v2197 = vadd.f32 %v2065, %v2196
    %v2198 = vpop.f32.mrf.mxu0
    %2199 = vmatprep.mubr.bf16.mxu0 0
    %2200 = vmatmul.mubr.bf16.gmra.mxu0 %v647
    %v2201 = vpop.f32.mrf.mxu0
    %v2202 = vadd.f32 %v2065, %v2201
    %v2203 = vpop.f32.mrf.mxu0
    %v2204 = vpop.f32.mrf.mxu0
    %v2205 = vadd.f32 %v2065, %v2204
    %v2206 = vpop.f32.mrf.mxu0
    %2207 = vmatprep.mubr.bf16.mxu0 0
    %2208 = vmatmul.mubr.bf16.gmra.mxu0 %v650
    %v2209 = vpop.f32.mrf.mxu0
    %v2210 = vadd.f32 %v2065, %v2209
    %v2211 = vpop.f32.mrf.mxu0
    %v2212 = vpop.f32.mrf.mxu0
    %v2213 = vadd.f32 %v2065, %v2212
    %v2214 = vpop.f32.mrf.mxu0
    %2215 = vmatprep.mubr.bf16.mxu0 0
    %2216 = vmatmul.mubr.bf16.gmra.mxu0 %v653
    %v2217 = vpop.f32.mrf.mxu0
    %v2218 = vadd.f32 %v2065, %v2217
    %v2219 = vpop.f32.mrf.mxu0
    %v2220 = vpop.f32.mrf.mxu0
    %v2221 = vadd.f32 %v2065, %v2220
    %v2222 = vpop.f32.mrf.mxu0
    %2223 = vmatprep.mubr.bf16.mxu0 0
    %2224 = vmatmul.mubr.bf16.gmra.mxu0 %v656
    %v2225 = vpop.f32.mrf.mxu0
    %v2226 = vadd.f32 %v2065, %v2225
    %v2227 = vpop.f32.mrf.mxu0
    %v2228 = vpop.f32.mrf.mxu0
    %v2229 = vadd.f32 %v2065, %v2228
    %v2230 = vpop.f32.mrf.mxu0
    %2231 = vmatprep.mubr.bf16.mxu0 0
    %2232 = vmatmul.mubr.bf16.gmra.mxu0 %v659
    %v2233 = vpop.f32.mrf.mxu0
    %v2234 = vadd.f32 %v2065, %v2233
    %v2235 = vpop.f32.mrf.mxu0
    %v2236 = vpop.f32.mrf.mxu0
    %v2237 = vadd.f32 %v2065, %v2236
    %v2238 = vpop.f32.mrf.mxu0
    %2239 = vdwg.mxu0
    %v2240 = vpack.c.bf16 %v2117, %v2114
    %v2241 = vpack.c.bf16 %v2125, %v2122
    %v2242 = vpack.c.bf16 %v2133, %v2130
    %v2243 = vpack.c.bf16 %v2141, %v2138
    %v2244 = vpack.c.bf16 %v2149, %v2146
    %v2245 = vpack.c.bf16 %v2157, %v2154
    %v2246 = vpack.c.bf16 %v2165, %v2162
    %v2247 = vpack.c.bf16 %v2173, %v2170
    %v2248 = vpack.c.bf16 %v2181, %v2178
    %v2249 = vpack.c.bf16 %v2189, %v2186
    %v2250 = vpack.c.bf16 %v2197, %v2194
    %v2251 = vpack.c.bf16 %v2205, %v2202
    %v2252 = vpack.c.bf16 %v2213, %v2210
    %v2253 = vpack.c.bf16 %v2221, %v2218
    %v2254 = vpack.c.bf16 %v2229, %v2226
    %v2255 = vpack.c.bf16 %v2237, %v2234
    %s2256 = scalar_lea.vmem %s6, 12
    %v2257 = vld [vmem:[%s2256] sm:$0xf]
    %v2258 = vlaneseq
    %v2259 = vand.u32 %v2258, 127
    %vm2260 = vcmp.ge.s32.totalorder %v2259, 8
    %v2261 = vld [vmem:[%s10] sm:$0x1]
    %vm2262 = vcmask 64512
    %v2264 = vsel %vm2262, %v181, 0
    %v2267 = vsel %vm2262, %v494, 0
    %v2270 = vsel %vm2262, %v495, 0
    %v2273 = vsel %vm2262, %v496, 0
    %v2276 = vsel %vm2262, %v497, 0
    %v2279 = vsel %vm2262, %v498, 0
    %v2282 = vsel %vm2262, %v499, 0
    %v2285 = vsel %vm2262, %v500, 0
    %v2288 = vsel %vm2262, %v501, 0
    %2290 = vmatprep.subr.bf16.mxu0 0
    %2291 = vmatpush1.bf16.xpose.msra.mxu0 %v2288
    %2292 = vmatprep.subr.bf16.mxu0 0
    %2293 = vmatpush1.bf16.xpose.msra.mxu0 %v2285
    %2294 = vmatprep.subr.bf16.mxu0 0
    %2295 = vmatpush1.bf16.xpose.msra.mxu0 %v2282
    %2296 = vmatprep.subr.bf16.mxu0 0
    %2297 = vmatpush1.bf16.xpose.msra.mxu0 %v2279
    %2298 = vmatprep.subr.bf16.mxu0 0
    %2299 = vmatpush1.bf16.xpose.msra.mxu0 %v2276
    %2300 = vmatprep.subr.bf16.mxu0 0
    %2301 = vmatpush1.bf16.xpose.msra.mxu0 %v2273
    %2302 = vmatprep.subr.bf16.mxu0 0
    %2303 = vmatpush1.bf16.xpose.msra.mxu0 %v2270
    %2304 = vmatprep.subr.bf16.mxu0 0
    %2305 = vmatpush1.bf16.xpose.msra.mxu0 %v2267
    %2306 = vmatprep.subr.bf16.mxu0 0
    %2307 = vmatpush2.bf16.xpose.msra.mxu0 0
    %2308 = vmatprep.subr.bf16.mxu0 0
    %2309 = vmatpush2.bf16.xpose.msra.mxu0 0
    %2310 = vmatprep.subr.bf16.mxu0 0
    %2311 = vmatpush2.bf16.xpose.msra.mxu0 0
    %2312 = vmatprep.subr.bf16.mxu0 0
    %2313 = vmatpush2.bf16.xpose.msra.mxu0 0
    %2314 = vmatprep.subr.bf16.mxu0 0
    %2315 = vmatpush2.bf16.xpose.msra.mxu0 0
    %2316 = vmatprep.subr.bf16.mxu0 0
    %2317 = vmatpush2.bf16.xpose.msra.mxu0 0
    %2318 = vmatprep.subr.bf16.mxu0 0
    %2319 = vmatpush2.bf16.xpose.msra.mxu0 0
    %2320 = vmatprep.subr.bf16.mxu0 0
    %2321 = vmatpush2.bf16.xpose.msra.mxu0 0
    %2322 = vmatprep.mubr.bf16.mxu0 0
    %2323 = vmatmul.mubr.bf16.gmra.mxu0 %v2264
    %v2324 = vpop.f32.mrf.mxu0
    %v2325 = vadd.f32 0.0, %v2324
    %v2326 = vpop.f32.mrf.mxu0
    %v2327 = vpop.f32.mrf.mxu0
    %v2328 = vpop.f32.mrf.mxu0
    %2329 = vdwg.mxu0
    %v2330 = vsel %vm2260, -1e+30, %v2325
    %2331 = vmax.xlane.f32.xlu0 %v2330
    %v2332 = vpop.xlane.xlu0 %2331
    %v2333 = vsub.f32 %v2330, %v2332
    %v2334 = vmul.f32 %v2333, 1.442695
    %v2335 = vpow.pop %v2334
    %2336 = vadd.xlane.f32.xlu0 %v2335
    %v2337 = vpop.xlane.xlu0 %2336
    %v2338 = vrcp.pop %v2337
    %v2339 = vmul.f32 1.0, %v2338
    %v2340 = vmul.f32 %v2335, %v2339
    %v2341 = vadd.f32 %v2340, 0.0
    %v2342 = vpack.c.bf16 %v2340, %v2340
    %2343 = vmatprep.subr.bf16.mxu0 0
    %2344 = vmatpush1.bf16.msra.mxu0 %v829
    %2345 = vmatprep.subr.bf16.mxu0 0
    %2346 = vmatpush1.bf16.msra.mxu0 %v828
    %2347 = vmatprep.subr.bf16.mxu0 0
    %2348 = vmatpush1.bf16.msra.mxu0 %v827
    %2349 = vmatprep.subr.bf16.mxu0 0
    %2350 = vmatpush1.bf16.msra.mxu0 %v826
    %2351 = vmatprep.subr.bf16.mxu0 0
    %2352 = vmatpush1.bf16.msra.mxu0 %v825
    %2353 = vmatprep.subr.bf16.mxu0 0
    %2354 = vmatpush1.bf16.msra.mxu0 %v824
    %2355 = vmatprep.subr.bf16.mxu0 0
    %2356 = vmatpush1.bf16.msra.mxu0 %v823
    %2357 = vmatprep.subr.bf16.mxu0 0
    %2358 = vmatpush1.bf16.msra.mxu0 %v822
    %2359 = vmatprep.subr.bf16.mxu0 0
    %2360 = vmatpush2.bf16.msra.mxu0 0
    %2361 = vmatprep.subr.bf16.mxu0 0
    %2362 = vmatpush2.bf16.msra.mxu0 0
    %2363 = vmatprep.subr.bf16.mxu0 0
    %2364 = vmatpush2.bf16.msra.mxu0 0
    %2365 = vmatprep.subr.bf16.mxu0 0
    %2366 = vmatpush2.bf16.msra.mxu0 0
    %2367 = vmatprep.subr.bf16.mxu0 0
    %2368 = vmatpush2.bf16.msra.mxu0 0
    %2369 = vmatprep.subr.bf16.mxu0 0
    %2370 = vmatpush2.bf16.msra.mxu0 0
    %2371 = vmatprep.subr.bf16.mxu0 0
    %2372 = vmatpush2.bf16.msra.mxu0 0
    %2373 = vmatprep.subr.bf16.mxu0 0
    %2374 = vmatpush2.bf16.msra.mxu0 0
    %2375 = vmatprep.mubr.bf16.mxu0 0
    %2376 = vmatmul.mubr.bf16.gmra.mxu0 %v2342
    %v2377 = vpop.f32.mrf.mxu0
    %v2378 = vadd.f32 0.0, %v2377
    %v2379 = vpop.f32.mrf.mxu0
    %v2380 = vpop.f32.mrf.mxu0
    %v2381 = vpop.f32.mrf.mxu0
    %2382 = vdwg.mxu0
    %v2383 = vpack.c.bf16 %v2378, %v2378
    %v2385 = vsel %vm2262, %v905, 0
    %v2388 = vsel %vm2262, %v1092, 0
    %v2391 = vsel %vm2262, %v1093, 0
    %v2394 = vsel %vm2262, %v1094, 0
    %v2397 = vsel %vm2262, %v1095, 0
    %v2400 = vsel %vm2262, %v1096, 0
    %v2403 = vsel %vm2262, %v1097, 0
    %v2406 = vsel %vm2262, %v1098, 0
    %v2409 = vsel %vm2262, %v1099, 0
    %2411 = vmatprep.subr.bf16.mxu0 0
    %2412 = vmatpush1.bf16.xpose.msra.mxu0 %v2409
    %2413 = vmatprep.subr.bf16.mxu0 0
    %2414 = vmatpush1.bf16.xpose.msra.mxu0 %v2406
    %2415 = vmatprep.subr.bf16.mxu0 0
    %2416 = vmatpush1.bf16.xpose.msra.mxu0 %v2403
    %2417 = vmatprep.subr.bf16.mxu0 0
    %2418 = vmatpush1.bf16.xpose.msra.mxu0 %v2400
    %2419 = vmatprep.subr.bf16.mxu0 0
    %2420 = vmatpush1.bf16.xpose.msra.mxu0 %v2397
    %2421 = vmatprep.subr.bf16.mxu0 0
    %2422 = vmatpush1.bf16.xpose.msra.mxu0 %v2394
    %2423 = vmatprep.subr.bf16.mxu0 0
    %2424 = vmatpush1.bf16.xpose.msra.mxu0 %v2391
    %2425 = vmatprep.subr.bf16.mxu0 0
    %2426 = vmatpush1.bf16.xpose.msra.mxu0 %v2388
    %2427 = vmatprep.subr.bf16.mxu0 0
    %2428 = vmatpush2.bf16.xpose.msra.mxu0 0
    %2429 = vmatprep.subr.bf16.mxu0 0
    %2430 = vmatpush2.bf16.xpose.msra.mxu0 0
    %2431 = vmatprep.subr.bf16.mxu0 0
    %2432 = vmatpush2.bf16.xpose.msra.mxu0 0
    %2433 = vmatprep.subr.bf16.mxu0 0
    %2434 = vmatpush2.bf16.xpose.msra.mxu0 0
    %2435 = vmatprep.subr.bf16.mxu0 0
    %2436 = vmatpush2.bf16.xpose.msra.mxu0 0
    %2437 = vmatprep.subr.bf16.mxu0 0
    %2438 = vmatpush2.bf16.xpose.msra.mxu0 0
    %2439 = vmatprep.subr.bf16.mxu0 0
    %2440 = vmatpush2.bf16.xpose.msra.mxu0 0
    %2441 = vmatprep.subr.bf16.mxu0 0
    %2442 = vmatpush2.bf16.xpose.msra.mxu0 0
    %2443 = vmatprep.mubr.bf16.mxu0 0
    %2444 = vmatmul.mubr.bf16.gmra.mxu0 %v2385
    %v2445 = vpop.f32.mrf.mxu0
    %v2446 = vadd.f32 0.0, %v2445
    %v2447 = vpop.f32.mrf.mxu0
    %v2448 = vpop.f32.mrf.mxu0
    %v2449 = vpop.f32.mrf.mxu0
    %2450 = vdwg.mxu0
    %v2451 = vsel %vm2260, -1e+30, %v2446
    %2452 = vmax.xlane.f32.xlu0 %v2451
    %v2453 = vpop.xlane.xlu0 %2452
    %v2454 = vsub.f32 %v2451, %v2453
    %v2455 = vmul.f32 %v2454, 1.442695
    %v2456 = vpow.pop %v2455
    %2457 = vadd.xlane.f32.xlu0 %v2456
    %v2458 = vpop.xlane.xlu0 %2457
    %v2459 = vrcp.pop %v2458
    %v2460 = vmul.f32 1.0, %v2459
    %v2461 = vmul.f32 %v2456, %v2460
    %v2462 = vadd.f32 %v2341, %v2461
    %v2463 = vpack.c.bf16 %v2461, %v2461
    %2464 = vmatprep.subr.bf16.mxu0 0
    %2465 = vmatpush1.bf16.msra.mxu0 %v1301
    %2466 = vmatprep.subr.bf16.mxu0 0
    %2467 = vmatpush1.bf16.msra.mxu0 %v1300
    %2468 = vmatprep.subr.bf16.mxu0 0
    %2469 = vmatpush1.bf16.msra.mxu0 %v1299
    %2470 = vmatprep.subr.bf16.mxu0 0
    %2471 = vmatpush1.bf16.msra.mxu0 %v1298
    %2472 = vmatprep.subr.bf16.mxu0 0
    %2473 = vmatpush1.bf16.msra.mxu0 %v1297
    %2474 = vmatprep.subr.bf16.mxu0 0
    %2475 = vmatpush1.bf16.msra.mxu0 %v1296
    %2476 = vmatprep.subr.bf16.mxu0 0
    %2477 = vmatpush1.bf16.msra.mxu0 %v1295
    %2478 = vmatprep.subr.bf16.mxu0 0
    %2479 = vmatpush1.bf16.msra.mxu0 %v1294
    %2480 = vmatprep.subr.bf16.mxu0 0
    %2481 = vmatpush2.bf16.msra.mxu0 0
    %2482 = vmatprep.subr.bf16.mxu0 0
    %2483 = vmatpush2.bf16.msra.mxu0 0
    %2484 = vmatprep.subr.bf16.mxu0 0
    %2485 = vmatpush2.bf16.msra.mxu0 0
    %2486 = vmatprep.subr.bf16.mxu0 0
    %2487 = vmatpush2.bf16.msra.mxu0 0
    %2488 = vmatprep.subr.bf16.mxu0 0
    %2489 = vmatpush2.bf16.msra.mxu0 0
    %2490 = vmatprep.subr.bf16.mxu0 0
    %2491 = vmatpush2.bf16.msra.mxu0 0
    %2492 = vmatprep.subr.bf16.mxu0 0
    %2493 = vmatpush2.bf16.msra.mxu0 0
    %2494 = vmatprep.subr.bf16.mxu0 0
    %2495 = vmatpush2.bf16.msra.mxu0 0
    %2496 = vmatprep.mubr.bf16.mxu0 0
    %2497 = vmatmul.mubr.bf16.gmra.mxu0 %v2463
    %v2498 = vpop.f32.mrf.mxu0
    %v2499 = vadd.f32 0.0, %v2498
    %v2500 = vpop.f32.mrf.mxu0
    %v2501 = vpop.f32.mrf.mxu0
    %v2502 = vpop.f32.mrf.mxu0
    %2503 = vdwg.mxu0
    %v2504 = vpack.c.bf16 %v2499, %v2499
    %v2506 = vsel %vm2262, %v2504, 0
    %vm2508 = vcmask 1043456
    %v2510 = vsel %vm2508, %v1311, 0
    %2512 = vmatprep.subr.bf16.mxu0 0
    %2513 = vmatpush1.bf16.msra.mxu0 0
    %2514 = vmatprep.subr.bf16.mxu0 0
    %2515 = vmatpush1.bf16.msra.mxu0 0
    %2516 = vmatprep.subr.bf16.mxu0 0
    %2517 = vmatpush1.bf16.msra.mxu0 0
    %2518 = vmatprep.subr.bf16.mxu0 0
    %2519 = vmatpush1.bf16.msra.mxu0 0
    %2520 = vmatprep.subr.bf16.mxu0 0
    %2521 = vmatpush1.bf16.msra.mxu0 0
    %2522 = vmatprep.subr.bf16.mxu0 0
    %2523 = vmatpush1.bf16.msra.mxu0 0
    %2524 = vmatprep.subr.bf16.mxu0 0
    %2525 = vmatpush1.bf16.msra.mxu0 0
    %2526 = vmatprep.subr.bf16.mxu0 0
    %2527 = vmatpush1.bf16.msra.mxu0 %v2510
    %2528 = vmatprep.subr.bf16.mxu0 0
    %2529 = vmatpush2.bf16.msra.mxu0 0
    %2530 = vmatprep.subr.bf16.mxu0 0
    %2531 = vmatpush2.bf16.msra.mxu0 0
    %2532 = vmatprep.subr.bf16.mxu0 0
    %2533 = vmatpush2.bf16.msra.mxu0 0
    %2534 = vmatprep.subr.bf16.mxu0 0
    %2535 = vmatpush2.bf16.msra.mxu0 0
    %2536 = vmatprep.subr.bf16.mxu0 0
    %2537 = vmatpush2.bf16.msra.mxu0 0
    %2538 = vmatprep.subr.bf16.mxu0 0
    %2539 = vmatpush2.bf16.msra.mxu0 0
    %2540 = vmatprep.subr.bf16.mxu0 0
    %2541 = vmatpush2.bf16.msra.mxu0 0
    %2542 = vmatprep.subr.bf16.mxu0 0
    %2543 = vmatpush2.bf16.msra.mxu0 0
    %2544 = vmatprep.mubr.bf16.mxu0 0
    %2545 = vmatmul.mubr.bf16.gmra.mxu0 %v2506
    %v2546 = vpop.f32.mrf.mxu0
    %v2547 = vadd.f32 0.0, %v2546
    %v2548 = vpop.f32.mrf.mxu0
    %v2549 = vpop.f32.mrf.mxu0
    %v2550 = vpop.f32.mrf.mxu0
    %2551 = vdwg.mxu0
    %v2553 = vsel %vm2262, %v2383, 0
    %v2556 = vsel %vm2508, %v838, 0
    %2558 = vmatprep.subr.bf16.mxu0 0
    %2559 = vmatpush1.bf16.msra.mxu0 0
    %2560 = vmatprep.subr.bf16.mxu0 0
    %2561 = vmatpush1.bf16.msra.mxu0 0
    %2562 = vmatprep.subr.bf16.mxu0 0
    %2563 = vmatpush1.bf16.msra.mxu0 0
    %2564 = vmatprep.subr.bf16.mxu0 0
    %2565 = vmatpush1.bf16.msra.mxu0 0
    %2566 = vmatprep.subr.bf16.mxu0 0
    %2567 = vmatpush1.bf16.msra.mxu0 0
    %2568 = vmatprep.subr.bf16.mxu0 0
    %2569 = vmatpush1.bf16.msra.mxu0 0
    %2570 = vmatprep.subr.bf16.mxu0 0
    %2571 = vmatpush1.bf16.msra.mxu0 0
    %2572 = vmatprep.subr.bf16.mxu0 0
    %2573 = vmatpush1.bf16.msra.mxu0 %v2556
    %2574 = vmatprep.subr.bf16.mxu0 0
    %2575 = vmatpush2.bf16.msra.mxu0 0
    %2576 = vmatprep.subr.bf16.mxu0 0
    %2577 = vmatpush2.bf16.msra.mxu0 0
    %2578 = vmatprep.subr.bf16.mxu0 0
    %2579 = vmatpush2.bf16.msra.mxu0 0
    %2580 = vmatprep.subr.bf16.mxu0 0
    %2581 = vmatpush2.bf16.msra.mxu0 0
    %2582 = vmatprep.subr.bf16.mxu0 0
    %2583 = vmatpush2.bf16.msra.mxu0 0
    %2584 = vmatprep.subr.bf16.mxu0 0
    %2585 = vmatpush2.bf16.msra.mxu0 0
    %2586 = vmatprep.subr.bf16.mxu0 0
    %2587 = vmatpush2.bf16.msra.mxu0 0
    %2588 = vmatprep.subr.bf16.mxu0 0
    %2589 = vmatpush2.bf16.msra.mxu0 0
    %2590 = vmatprep.mubr.bf16.mxu0 0
    %2591 = vmatmul.mubr.bf16.gmra.mxu0 %v2553
    %v2592 = vpop.f32.mrf.mxu0
    %v2593 = vadd.f32 %v2547, %v2592
    %v2594 = vpop.f32.mrf.mxu0
    %v2595 = vpop.f32.mrf.mxu0
    %v2596 = vpop.f32.mrf.mxu0
    %2597 = vdwg.mxu0
    %v2599 = vsel %vm2262, %v1378, 0
    %v2602 = vsel %vm2262, %v1565, 0
    %v2605 = vsel %vm2262, %v1566, 0
    %v2608 = vsel %vm2262, %v1567, 0
    %v2611 = vsel %vm2262, %v1568, 0
    %v2614 = vsel %vm2262, %v1569, 0
    %v2617 = vsel %vm2262, %v1570, 0
    %v2620 = vsel %vm2262, %v1571, 0
    %v2623 = vsel %vm2262, %v1572, 0
    %2625 = vmatprep.subr.bf16.mxu0 0
    %2626 = vmatpush1.bf16.xpose.msra.mxu0 %v2623
    %2627 = vmatprep.subr.bf16.mxu0 0
    %2628 = vmatpush1.bf16.xpose.msra.mxu0 %v2620
    %2629 = vmatprep.subr.bf16.mxu0 0
    %2630 = vmatpush1.bf16.xpose.msra.mxu0 %v2617
    %2631 = vmatprep.subr.bf16.mxu0 0
    %2632 = vmatpush1.bf16.xpose.msra.mxu0 %v2614
    %2633 = vmatprep.subr.bf16.mxu0 0
    %2634 = vmatpush1.bf16.xpose.msra.mxu0 %v2611
    %2635 = vmatprep.subr.bf16.mxu0 0
    %2636 = vmatpush1.bf16.xpose.msra.mxu0 %v2608
    %2637 = vmatprep.subr.bf16.mxu0 0
    %2638 = vmatpush1.bf16.xpose.msra.mxu0 %v2605
    %2639 = vmatprep.subr.bf16.mxu0 0
    %2640 = vmatpush1.bf16.xpose.msra.mxu0 %v2602
    %2641 = vmatprep.subr.bf16.mxu0 0
    %2642 = vmatpush2.bf16.xpose.msra.mxu0 0
    %2643 = vmatprep.subr.bf16.mxu0 0
    %2644 = vmatpush2.bf16.xpose.msra.mxu0 0
    %2645 = vmatprep.subr.bf16.mxu0 0
    %2646 = vmatpush2.bf16.xpose.msra.mxu0 0
    %2647 = vmatprep.subr.bf16.mxu0 0
    %2648 = vmatpush2.bf16.xpose.msra.mxu0 0
    %2649 = vmatprep.subr.bf16.mxu0 0
    %2650 = vmatpush2.bf16.xpose.msra.mxu0 0
    %2651 = vmatprep.subr.bf16.mxu0 0
    %2652 = vmatpush2.bf16.xpose.msra.mxu0 0
    %2653 = vmatprep.subr.bf16.mxu0 0
    %2654 = vmatpush2.bf16.xpose.msra.mxu0 0
    %2655 = vmatprep.subr.bf16.mxu0 0
    %2656 = vmatpush2.bf16.xpose.msra.mxu0 0
    %2657 = vmatprep.mubr.bf16.mxu0 0
    %2658 = vmatmul.mubr.bf16.gmra.mxu0 %v2599
    %v2659 = vpop.f32.mrf.mxu0
    %v2660 = vadd.f32 0.0, %v2659
    %v2661 = vpop.f32.mrf.mxu0
    %v2662 = vpop.f32.mrf.mxu0
    %v2663 = vpop.f32.mrf.mxu0
    %2664 = vdwg.mxu0
    %v2665 = vsel %vm2260, -1e+30, %v2660
    %2666 = vmax.xlane.f32.xlu0 %v2665
    %v2667 = vpop.xlane.xlu0 %2666
    %v2668 = vsub.f32 %v2665, %v2667
    %v2669 = vmul.f32 %v2668, 1.442695
    %v2670 = vpow.pop %v2669
    %2671 = vadd.xlane.f32.xlu0 %v2670
    %v2672 = vpop.xlane.xlu0 %2671
    %v2673 = vrcp.pop %v2672
    %v2674 = vmul.f32 1.0, %v2673
    %v2675 = vmul.f32 %v2670, %v2674
    %v2676 = vadd.f32 %v2462, %v2675
    %v2677 = vpack.c.bf16 %v2675, %v2675
    %2678 = vmatprep.subr.bf16.mxu0 0
    %2679 = vmatpush1.bf16.msra.mxu0 %v1774
    %2680 = vmatprep.subr.bf16.mxu0 0
    %2681 = vmatpush1.bf16.msra.mxu0 %v1773
    %2682 = vmatprep.subr.bf16.mxu0 0
    %2683 = vmatpush1.bf16.msra.mxu0 %v1772
    %2684 = vmatprep.subr.bf16.mxu0 0
    %2685 = vmatpush1.bf16.msra.mxu0 %v1771
    %2686 = vmatprep.subr.bf16.mxu0 0
    %2687 = vmatpush1.bf16.msra.mxu0 %v1770
    %2688 = vmatprep.subr.bf16.mxu0 0
    %2689 = vmatpush1.bf16.msra.mxu0 %v1769
    %2690 = vmatprep.subr.bf16.mxu0 0
    %2691 = vmatpush1.bf16.msra.mxu0 %v1768
    %2692 = vmatprep.subr.bf16.mxu0 0
    %2693 = vmatpush1.bf16.msra.mxu0 %v1767
    %2694 = vmatprep.subr.bf16.mxu0 0
    %2695 = vmatpush2.bf16.msra.mxu0 0
    %2696 = vmatprep.subr.bf16.mxu0 0
    %2697 = vmatpush2.bf16.msra.mxu0 0
    %2698 = vmatprep.subr.bf16.mxu0 0
    %2699 = vmatpush2.bf16.msra.mxu0 0
    %2700 = vmatprep.subr.bf16.mxu0 0
    %2701 = vmatpush2.bf16.msra.mxu0 0
    %2702 = vmatprep.subr.bf16.mxu0 0
    %2703 = vmatpush2.bf16.msra.mxu0 0
    %2704 = vmatprep.subr.bf16.mxu0 0
    %2705 = vmatpush2.bf16.msra.mxu0 0
    %2706 = vmatprep.subr.bf16.mxu0 0
    %2707 = vmatpush2.bf16.msra.mxu0 0
    %2708 = vmatprep.subr.bf16.mxu0 0
    %2709 = vmatpush2.bf16.msra.mxu0 0
    %2710 = vmatprep.mubr.bf16.mxu0 0
    %2711 = vmatmul.mubr.bf16.gmra.mxu0 %v2677
    %v2712 = vpop.f32.mrf.mxu0
    %v2713 = vadd.f32 0.0, %v2712
    %v2714 = vpop.f32.mrf.mxu0
    %v2715 = vpop.f32.mrf.mxu0
    %v2716 = vpop.f32.mrf.mxu0
    %2717 = vdwg.mxu0
    %v2718 = vpack.c.bf16 %v2713, %v2713
    %v2720 = vsel %vm2262, %v2718, 0
    %v2723 = vsel %vm2508, %v1784, 0
    %2725 = vmatprep.subr.bf16.mxu0 0
    %2726 = vmatpush1.bf16.msra.mxu0 0
    %2727 = vmatprep.subr.bf16.mxu0 0
    %2728 = vmatpush1.bf16.msra.mxu0 0
    %2729 = vmatprep.subr.bf16.mxu0 0
    %2730 = vmatpush1.bf16.msra.mxu0 0
    %2731 = vmatprep.subr.bf16.mxu0 0
    %2732 = vmatpush1.bf16.msra.mxu0 0
    %2733 = vmatprep.subr.bf16.mxu0 0
    %2734 = vmatpush1.bf16.msra.mxu0 0
    %2735 = vmatprep.subr.bf16.mxu0 0
    %2736 = vmatpush1.bf16.msra.mxu0 0
    %2737 = vmatprep.subr.bf16.mxu0 0
    %2738 = vmatpush1.bf16.msra.mxu0 0
    %2739 = vmatprep.subr.bf16.mxu0 0
    %2740 = vmatpush1.bf16.msra.mxu0 %v2723
    %2741 = vmatprep.subr.bf16.mxu0 0
    %2742 = vmatpush2.bf16.msra.mxu0 0
    %2743 = vmatprep.subr.bf16.mxu0 0
    %2744 = vmatpush2.bf16.msra.mxu0 0
    %2745 = vmatprep.subr.bf16.mxu0 0
    %2746 = vmatpush2.bf16.msra.mxu0 0
    %2747 = vmatprep.subr.bf16.mxu0 0
    %2748 = vmatpush2.bf16.msra.mxu0 0
    %2749 = vmatprep.subr.bf16.mxu0 0
    %2750 = vmatpush2.bf16.msra.mxu0 0
    %2751 = vmatprep.subr.bf16.mxu0 0
    %2752 = vmatpush2.bf16.msra.mxu0 0
    %2753 = vmatprep.subr.bf16.mxu0 0
    %2754 = vmatpush2.bf16.msra.mxu0 0
    %2755 = vmatprep.subr.bf16.mxu0 0
    %2756 = vmatpush2.bf16.msra.mxu0 0
    %2757 = vmatprep.mubr.bf16.mxu0 0
    %2758 = vmatmul.mubr.bf16.gmra.mxu0 %v2720
    %v2759 = vpop.f32.mrf.mxu0
    %v2760 = vadd.f32 0.0, %v2759
    %v2761 = vpop.f32.mrf.mxu0
    %v2762 = vpop.f32.mrf.mxu0
    %v2763 = vpop.f32.mrf.mxu0
    %2764 = vdwg.mxu0
    %v2765 = vadd.f32 %v2593, %v2760
    %v2767 = vsel %vm2262, %v1851, 0
    %v2770 = vsel %vm2262, %v2038, 0
    %v2773 = vsel %vm2262, %v2039, 0
    %v2776 = vsel %vm2262, %v2040, 0
    %v2779 = vsel %vm2262, %v2041, 0
    %v2782 = vsel %vm2262, %v2042, 0
    %v2785 = vsel %vm2262, %v2043, 0
    %v2788 = vsel %vm2262, %v2044, 0
    %v2791 = vsel %vm2262, %v2045, 0
    %2793 = vmatprep.subr.bf16.mxu0 0
    %2794 = vmatpush1.bf16.xpose.msra.mxu0 %v2791
    %2795 = vmatprep.subr.bf16.mxu0 0
    %2796 = vmatpush1.bf16.xpose.msra.mxu0 %v2788
    %2797 = vmatprep.subr.bf16.mxu0 0
    %2798 = vmatpush1.bf16.xpose.msra.mxu0 %v2785
    %2799 = vmatprep.subr.bf16.mxu0 0
    %2800 = vmatpush1.bf16.xpose.msra.mxu0 %v2782
    %2801 = vmatprep.subr.bf16.mxu0 0
    %2802 = vmatpush1.bf16.xpose.msra.mxu0 %v2779
    %2803 = vmatprep.subr.bf16.mxu0 0
    %2804 = vmatpush1.bf16.xpose.msra.mxu0 %v2776
    %2805 = vmatprep.subr.bf16.mxu0 0
    %2806 = vmatpush1.bf16.xpose.msra.mxu0 %v2773
    %2807 = vmatprep.subr.bf16.mxu0 0
    %2808 = vmatpush1.bf16.xpose.msra.mxu0 %v2770
    %2809 = vmatprep.subr.bf16.mxu0 0
    %2810 = vmatpush2.bf16.xpose.msra.mxu0 0
    %2811 = vmatprep.subr.bf16.mxu0 0
    %2812 = vmatpush2.bf16.xpose.msra.mxu0 0
    %2813 = vmatprep.subr.bf16.mxu0 0
    %2814 = vmatpush2.bf16.xpose.msra.mxu0 0
    %2815 = vmatprep.subr.bf16.mxu0 0
    %2816 = vmatpush2.bf16.xpose.msra.mxu0 0
    %2817 = vmatprep.subr.bf16.mxu0 0
    %2818 = vmatpush2.bf16.xpose.msra.mxu0 0
    %2819 = vmatprep.subr.bf16.mxu0 0
    %2820 = vmatpush2.bf16.xpose.msra.mxu0 0
    %2821 = vmatprep.subr.bf16.mxu0 0
    %2822 = vmatpush2.bf16.xpose.msra.mxu0 0
    %2823 = vmatprep.subr.bf16.mxu0 0
    %2824 = vmatpush2.bf16.xpose.msra.mxu0 0
    %2825 = vmatprep.mubr.bf16.mxu0 0
    %2826 = vmatmul.mubr.bf16.gmra.mxu0 %v2767
    %v2827 = vpop.f32.mrf.mxu0
    %v2828 = vadd.f32 0.0, %v2827
    %v2829 = vpop.f32.mrf.mxu0
    %v2830 = vpop.f32.mrf.mxu0
    %v2831 = vpop.f32.mrf.mxu0
    %2832 = vdwg.mxu0
    %v2833 = vsel %vm2260, -1e+30, %v2828
    %2834 = vmax.xlane.f32.xlu0 %v2833
    %v2835 = vpop.xlane.xlu0 %2834
    %v2836 = vsub.f32 %v2833, %v2835
    %v2837 = vmul.f32 %v2836, 1.442695
    %v2838 = vpow.pop %v2837
    %2839 = vadd.xlane.f32.xlu0 %v2838
    %v2840 = vpop.xlane.xlu0 %2839
    %v2841 = vrcp.pop %v2840
    %v2842 = vmul.f32 1.0, %v2841
    %v2843 = vmul.f32 %v2838, %v2842
    %v2844 = vadd.f32 %v2676, %v2843
    %v2845 = vpack.c.bf16 %v2843, %v2843
    %2846 = vmatprep.subr.bf16.mxu0 0
    %2847 = vmatpush1.bf16.msra.mxu0 %v2247
    %2848 = vmatprep.subr.bf16.mxu0 0
    %2849 = vmatpush1.bf16.msra.mxu0 %v2246
    %2850 = vmatprep.subr.bf16.mxu0 0
    %2851 = vmatpush1.bf16.msra.mxu0 %v2245
    %2852 = vmatprep.subr.bf16.mxu0 0
    %2853 = vmatpush1.bf16.msra.mxu0 %v2244
    %2854 = vmatprep.subr.bf16.mxu0 0
    %2855 = vmatpush1.bf16.msra.mxu0 %v2243
    %2856 = vmatprep.subr.bf16.mxu0 0
    %2857 = vmatpush1.bf16.msra.mxu0 %v2242
    %2858 = vmatprep.subr.bf16.mxu0 0
    %2859 = vmatpush1.bf16.msra.mxu0 %v2241
    %2860 = vmatprep.subr.bf16.mxu0 0
    %2861 = vmatpush1.bf16.msra.mxu0 %v2240
    %2862 = vmatprep.subr.bf16.mxu0 0
    %2863 = vmatpush2.bf16.msra.mxu0 0
    %2864 = vmatprep.subr.bf16.mxu0 0
    %2865 = vmatpush2.bf16.msra.mxu0 0
    %2866 = vmatprep.subr.bf16.mxu0 0
    %2867 = vmatpush2.bf16.msra.mxu0 0
    %2868 = vmatprep.subr.bf16.mxu0 0
    %2869 = vmatpush2.bf16.msra.mxu0 0
    %2870 = vmatprep.subr.bf16.mxu0 0
    %2871 = vmatpush2.bf16.msra.mxu0 0
    %2872 = vmatprep.subr.bf16.mxu0 0
    %2873 = vmatpush2.bf16.msra.mxu0 0
    %2874 = vmatprep.subr.bf16.mxu0 0
    %2875 = vmatpush2.bf16.msra.mxu0 0
    %2876 = vmatprep.subr.bf16.mxu0 0
    %2877 = vmatpush2.bf16.msra.mxu0 0
    %2878 = vmatprep.mubr.bf16.mxu0 0
    %2879 = vmatmul.mubr.bf16.gmra.mxu0 %v2845
    %v2880 = vpop.f32.mrf.mxu0
    %v2881 = vadd.f32 0.0, %v2880
    %v2882 = vpop.f32.mrf.mxu0
    %v2883 = vpop.f32.mrf.mxu0
    %v2884 = vpop.f32.mrf.mxu0
    %2885 = vdwg.mxu0
    %v2886 = vpack.c.bf16 %v2881, %v2881
    %v2888 = vsel %vm2262, %v2886, 0
    %v2891 = vsel %vm2508, %v2257, 0
    %2893 = vmatprep.subr.bf16.mxu0 0
    %2894 = vmatpush1.bf16.msra.mxu0 0
    %2895 = vmatprep.subr.bf16.mxu0 0
    %2896 = vmatpush1.bf16.msra.mxu0 0
    %2897 = vmatprep.subr.bf16.mxu0 0
    %2898 = vmatpush1.bf16.msra.mxu0 0
    %2899 = vmatprep.subr.bf16.mxu0 0
    %2900 = vmatpush1.bf16.msra.mxu0 0
    %2901 = vmatprep.subr.bf16.mxu0 0
    %2902 = vmatpush1.bf16.msra.mxu0 0
    %2903 = vmatprep.subr.bf16.mxu0 0
    %2904 = vmatpush1.bf16.msra.mxu0 0
    %2905 = vmatprep.subr.bf16.mxu0 0
    %2906 = vmatpush1.bf16.msra.mxu0 0
    %2907 = vmatprep.subr.bf16.mxu0 0
    %2908 = vmatpush1.bf16.msra.mxu0 %v2891
    %2909 = vmatprep.subr.bf16.mxu0 0
    %2910 = vmatpush2.bf16.msra.mxu0 0
    %2911 = vmatprep.subr.bf16.mxu0 0
    %2912 = vmatpush2.bf16.msra.mxu0 0
    %2913 = vmatprep.subr.bf16.mxu0 0
    %2914 = vmatpush2.bf16.msra.mxu0 0
    %2915 = vmatprep.subr.bf16.mxu0 0
    %2916 = vmatpush2.bf16.msra.mxu0 0
    %2917 = vmatprep.subr.bf16.mxu0 0
    %2918 = vmatpush2.bf16.msra.mxu0 0
    %2919 = vmatprep.subr.bf16.mxu0 0
    %2920 = vmatpush2.bf16.msra.mxu0 0
    %2921 = vmatprep.subr.bf16.mxu0 0
    %2922 = vmatpush2.bf16.msra.mxu0 0
    %2923 = vmatprep.subr.bf16.mxu0 0
    %2924 = vmatpush2.bf16.msra.mxu0 0
    %2925 = vmatprep.mubr.bf16.mxu0 0
    %2926 = vmatmul.mubr.bf16.gmra.mxu0 %v2888
    %v2927 = vpop.f32.mrf.mxu0
    %v2928 = vadd.f32 0.0, %v2927
    %v2929 = vpop.f32.mrf.mxu0
    %v2930 = vpop.f32.mrf.mxu0
    %v2931 = vpop.f32.mrf.mxu0
    %2932 = vdwg.mxu0
    %v2933 = vadd.f32 %v2765, %v2928
    %v2935 = vlaneseq
    %v2936 = vshrl.u32 %v2935, 7
    %v2937 = vsub.s32 0, %v2936
    %v2938 = vrot.slane %v2261, %v2937
    %v2940 = vadd.f32 %v2933, %v2938
    %2941 = vst [vmem:[%s11] sm:$0xff] %v2940
    %v2942 = vmul.f32 %v2844, 0.25
    %2943 = vst [vmem:[#allocation2] sm:$0xff] %v2942
    %v2945 = vrot.slane %v181, 4
    %v2947 = vsel %vm2262, %v2945, 0
    %v2950 = vsel %vm2262, %v502, 0
    %v2953 = vsel %vm2262, %v503, 0
    %v2956 = vsel %vm2262, %v504, 0
    %v2959 = vsel %vm2262, %v505, 0
    %v2962 = vsel %vm2262, %v506, 0
    %v2965 = vsel %vm2262, %v507, 0
    %v2968 = vsel %vm2262, %v508, 0
    %v2971 = vsel %vm2262, %v509, 0
    %2973 = vmatprep.subr.bf16.mxu0 0
    %2974 = vmatpush1.bf16.xpose.msra.mxu0 %v2971
    %2975 = vmatprep.subr.bf16.mxu0 0
    %2976 = vmatpush1.bf16.xpose.msra.mxu0 %v2968
    %2977 = vmatprep.subr.bf16.mxu0 0
    %2978 = vmatpush1.bf16.xpose.msra.mxu0 %v2965
    %2979 = vmatprep.subr.bf16.mxu0 0
    %2980 = vmatpush1.bf16.xpose.msra.mxu0 %v2962
    %2981 = vmatprep.subr.bf16.mxu0 0
    %2982 = vmatpush1.bf16.xpose.msra.mxu0 %v2959
    %2983 = vmatprep.subr.bf16.mxu0 0
    %2984 = vmatpush1.bf16.xpose.msra.mxu0 %v2956
    %2985 = vmatprep.subr.bf16.mxu0 0
    %2986 = vmatpush1.bf16.xpose.msra.mxu0 %v2953
    %2987 = vmatprep.subr.bf16.mxu0 0
    %2988 = vmatpush1.bf16.xpose.msra.mxu0 %v2950
    %2989 = vmatprep.subr.bf16.mxu0 0
    %2990 = vmatpush2.bf16.xpose.msra.mxu0 0
    %2991 = vmatprep.subr.bf16.mxu0 0
    %2992 = vmatpush2.bf16.xpose.msra.mxu0 0
    %2993 = vmatprep.subr.bf16.mxu0 0
    %2994 = vmatpush2.bf16.xpose.msra.mxu0 0
    %2995 = vmatprep.subr.bf16.mxu0 0
    %2996 = vmatpush2.bf16.xpose.msra.mxu0 0
    %2997 = vmatprep.subr.bf16.mxu0 0
    %2998 = vmatpush2.bf16.xpose.msra.mxu0 0
    %2999 = vmatprep.subr.bf16.mxu0 0
    %3000 = vmatpush2.bf16.xpose.msra.mxu0 0
    %3001 = vmatprep.subr.bf16.mxu0 0
    %3002 = vmatpush2.bf16.xpose.msra.mxu0 0
    %3003 = vmatprep.subr.bf16.mxu0 0
    %3004 = vmatpush2.bf16.xpose.msra.mxu0 0
    %3005 = vmatprep.mubr.bf16.mxu0 0
    %3006 = vmatmul.mubr.bf16.gmra.mxu0 %v2947
    %v3007 = vpop.f32.mrf.mxu0
    %v3008 = vadd.f32 0.0, %v3007
    %v3009 = vpop.f32.mrf.mxu0
    %v3010 = vpop.f32.mrf.mxu0
    %v3011 = vpop.f32.mrf.mxu0
    %3012 = vdwg.mxu0
    %v3013 = vsel %vm2260, -1e+30, %v3008
    %3014 = vmax.xlane.f32.xlu0 %v3013
    %v3015 = vpop.xlane.xlu0 %3014
    %v3016 = vsub.f32 %v3013, %v3015
    %v3017 = vmul.f32 %v3016, 1.442695
    %v3018 = vpow.pop %v3017
    %3019 = vadd.xlane.f32.xlu0 %v3018
    %v3020 = vpop.xlane.xlu0 %3019
    %v3021 = vrcp.pop %v3020
    %v3022 = vmul.f32 1.0, %v3021
    %v3023 = vmul.f32 %v3018, %v3022
    %v3024 = vadd.f32 %v3023, 0.0
    %v3025 = vpack.c.bf16 %v3023, %v3023
    %3026 = vmatprep.subr.bf16.mxu0 0
    %3027 = vmatpush1.bf16.msra.mxu0 %v837
    %3028 = vmatprep.subr.bf16.mxu0 0
    %3029 = vmatpush1.bf16.msra.mxu0 %v836
    %3030 = vmatprep.subr.bf16.mxu0 0
    %3031 = vmatpush1.bf16.msra.mxu0 %v835
    %3032 = vmatprep.subr.bf16.mxu0 0
    %3033 = vmatpush1.bf16.msra.mxu0 %v834
    %3034 = vmatprep.subr.bf16.mxu0 0
    %3035 = vmatpush1.bf16.msra.mxu0 %v833
    %3036 = vmatprep.subr.bf16.mxu0 0
    %3037 = vmatpush1.bf16.msra.mxu0 %v832
    %3038 = vmatprep.subr.bf16.mxu0 0
    %3039 = vmatpush1.bf16.msra.mxu0 %v831
    %3040 = vmatprep.subr.bf16.mxu0 0
    %3041 = vmatpush1.bf16.msra.mxu0 %v830
    %3042 = vmatprep.subr.bf16.mxu0 0
    %3043 = vmatpush2.bf16.msra.mxu0 0
    %3044 = vmatprep.subr.bf16.mxu0 0
    %3045 = vmatpush2.bf16.msra.mxu0 0
    %3046 = vmatprep.subr.bf16.mxu0 0
    %3047 = vmatpush2.bf16.msra.mxu0 0
    %3048 = vmatprep.subr.bf16.mxu0 0
    %3049 = vmatpush2.bf16.msra.mxu0 0
    %3050 = vmatprep.subr.bf16.mxu0 0
    %3051 = vmatpush2.bf16.msra.mxu0 0
    %3052 = vmatprep.subr.bf16.mxu0 0
    %3053 = vmatpush2.bf16.msra.mxu0 0
    %3054 = vmatprep.subr.bf16.mxu0 0
    %3055 = vmatpush2.bf16.msra.mxu0 0
    %3056 = vmatprep.subr.bf16.mxu0 0
    %3057 = vmatpush2.bf16.msra.mxu0 0
    %3058 = vmatprep.mubr.bf16.mxu0 0
    %3059 = vmatmul.mubr.bf16.gmra.mxu0 %v3025
    %v3060 = vpop.f32.mrf.mxu0
    %v3061 = vadd.f32 0.0, %v3060
    %v3062 = vpop.f32.mrf.mxu0
    %v3063 = vpop.f32.mrf.mxu0
    %v3064 = vpop.f32.mrf.mxu0
    %3065 = vdwg.mxu0
    %v3066 = vpack.c.bf16 %v3061, %v3061
    %v3068 = vrot.slane %v905, 4
    %v3070 = vsel %vm2262, %v3068, 0
    %v3073 = vsel %vm2262, %v1100, 0
    %v3076 = vsel %vm2262, %v1101, 0
    %v3079 = vsel %vm2262, %v1102, 0
    %v3082 = vsel %vm2262, %v1103, 0
    %v3085 = vsel %vm2262, %v1104, 0
    %v3088 = vsel %vm2262, %v1105, 0
    %v3091 = vsel %vm2262, %v1106, 0
    %v3094 = vsel %vm2262, %v1107, 0
    %3096 = vmatprep.subr.bf16.mxu0 0
    %3097 = vmatpush1.bf16.xpose.msra.mxu0 %v3094
    %3098 = vmatprep.subr.bf16.mxu0 0
    %3099 = vmatpush1.bf16.xpose.msra.mxu0 %v3091
    %3100 = vmatprep.subr.bf16.mxu0 0
    %3101 = vmatpush1.bf16.xpose.msra.mxu0 %v3088
    %3102 = vmatprep.subr.bf16.mxu0 0
    %3103 = vmatpush1.bf16.xpose.msra.mxu0 %v3085
    %3104 = vmatprep.subr.bf16.mxu0 0
    %3105 = vmatpush1.bf16.xpose.msra.mxu0 %v3082
    %3106 = vmatprep.subr.bf16.mxu0 0
    %3107 = vmatpush1.bf16.xpose.msra.mxu0 %v3079
    %3108 = vmatprep.subr.bf16.mxu0 0
    %3109 = vmatpush1.bf16.xpose.msra.mxu0 %v3076
    %3110 = vmatprep.subr.bf16.mxu0 0
    %3111 = vmatpush1.bf16.xpose.msra.mxu0 %v3073
    %3112 = vmatprep.subr.bf16.mxu0 0
    %3113 = vmatpush2.bf16.xpose.msra.mxu0 0
    %3114 = vmatprep.subr.bf16.mxu0 0
    %3115 = vmatpush2.bf16.xpose.msra.mxu0 0
    %3116 = vmatprep.subr.bf16.mxu0 0
    %3117 = vmatpush2.bf16.xpose.msra.mxu0 0
    %3118 = vmatprep.subr.bf16.mxu0 0
    %3119 = vmatpush2.bf16.xpose.msra.mxu0 0
    %3120 = vmatprep.subr.bf16.mxu0 0
    %3121 = vmatpush2.bf16.xpose.msra.mxu0 0
    %3122 = vmatprep.subr.bf16.mxu0 0
    %3123 = vmatpush2.bf16.xpose.msra.mxu0 0
    %3124 = vmatprep.subr.bf16.mxu0 0
    %3125 = vmatpush2.bf16.xpose.msra.mxu0 0
    %3126 = vmatprep.subr.bf16.mxu0 0
    %3127 = vmatpush2.bf16.xpose.msra.mxu0 0
    %3128 = vmatprep.mubr.bf16.mxu0 0
    %3129 = vmatmul.mubr.bf16.gmra.mxu0 %v3070
    %v3130 = vpop.f32.mrf.mxu0
    %v3131 = vadd.f32 0.0, %v3130
    %v3132 = vpop.f32.mrf.mxu0
    %v3133 = vpop.f32.mrf.mxu0
    %v3134 = vpop.f32.mrf.mxu0
    %3135 = vdwg.mxu0
    %v3136 = vsel %vm2260, -1e+30, %v3131
    %3137 = vmax.xlane.f32.xlu0 %v3136
    %v3138 = vpop.xlane.xlu0 %3137
    %v3139 = vsub.f32 %v3136, %v3138
    %v3140 = vmul.f32 %v3139, 1.442695
    %v3141 = vpow.pop %v3140
    %3142 = vadd.xlane.f32.xlu0 %v3141
    %v3143 = vpop.xlane.xlu0 %3142
    %v3144 = vrcp.pop %v3143
    %v3145 = vmul.f32 1.0, %v3144
    %v3146 = vmul.f32 %v3141, %v3145
    %v3147 = vadd.f32 %v3024, %v3146
    %v3148 = vpack.c.bf16 %v3146, %v3146
    %3149 = vmatprep.subr.bf16.mxu0 0
    %3150 = vmatpush1.bf16.msra.mxu0 %v1309
    %3151 = vmatprep.subr.bf16.mxu0 0
    %3152 = vmatpush1.bf16.msra.mxu0 %v1308
    %3153 = vmatprep.subr.bf16.mxu0 0
    %3154 = vmatpush1.bf16.msra.mxu0 %v1307
    %3155 = vmatprep.subr.bf16.mxu0 0
    %3156 = vmatpush1.bf16.msra.mxu0 %v1306
    %3157 = vmatprep.subr.bf16.mxu0 0
    %3158 = vmatpush1.bf16.msra.mxu0 %v1305
    %3159 = vmatprep.subr.bf16.mxu0 0
    %3160 = vmatpush1.bf16.msra.mxu0 %v1304
    %3161 = vmatprep.subr.bf16.mxu0 0
    %3162 = vmatpush1.bf16.msra.mxu0 %v1303
    %3163 = vmatprep.subr.bf16.mxu0 0
    %3164 = vmatpush1.bf16.msra.mxu0 %v1302
    %3165 = vmatprep.subr.bf16.mxu0 0
    %3166 = vmatpush2.bf16.msra.mxu0 0
    %3167 = vmatprep.subr.bf16.mxu0 0
    %3168 = vmatpush2.bf16.msra.mxu0 0
    %3169 = vmatprep.subr.bf16.mxu0 0
    %3170 = vmatpush2.bf16.msra.mxu0 0
    %3171 = vmatprep.subr.bf16.mxu0 0
    %3172 = vmatpush2.bf16.msra.mxu0 0
    %3173 = vmatprep.subr.bf16.mxu0 0
    %3174 = vmatpush2.bf16.msra.mxu0 0
    %3175 = vmatprep.subr.bf16.mxu0 0
    %3176 = vmatpush2.bf16.msra.mxu0 0
    %3177 = vmatprep.subr.bf16.mxu0 0
    %3178 = vmatpush2.bf16.msra.mxu0 0
    %3179 = vmatprep.subr.bf16.mxu0 0
    %3180 = vmatpush2.bf16.msra.mxu0 0
    %3181 = vmatprep.mubr.bf16.mxu0 0
    %3182 = vmatmul.mubr.bf16.gmra.mxu0 %v3148
    %v3183 = vpop.f32.mrf.mxu0
    %v3184 = vadd.f32 0.0, %v3183
    %v3185 = vpop.f32.mrf.mxu0
    %v3186 = vpop.f32.mrf.mxu0
    %v3187 = vpop.f32.mrf.mxu0
    %3188 = vdwg.mxu0
    %v3189 = vpack.c.bf16 %v3184, %v3184
    %v3191 = vsel %vm2262, %v3189, 0
    %3193 = vmatprep.subr.bf16.mxu0 0
    %3194 = vmatpush1.bf16.msra.mxu0 0
    %3195 = vmatprep.subr.bf16.mxu0 0
    %3196 = vmatpush1.bf16.msra.mxu0 0
    %3197 = vmatprep.subr.bf16.mxu0 0
    %3198 = vmatpush1.bf16.msra.mxu0 0
    %3199 = vmatprep.subr.bf16.mxu0 0
    %3200 = vmatpush1.bf16.msra.mxu0 0
    %3201 = vmatprep.subr.bf16.mxu0 0
    %3202 = vmatpush1.bf16.msra.mxu0 0
    %3203 = vmatprep.subr.bf16.mxu0 0
    %3204 = vmatpush1.bf16.msra.mxu0 0
    %3205 = vmatprep.subr.bf16.mxu0 0
    %3206 = vmatpush1.bf16.msra.mxu0 0
    %3207 = vmatprep.subr.bf16.mxu0 0
    %3208 = vmatpush1.bf16.msra.mxu0 %v2510
    %3209 = vmatprep.subr.bf16.mxu0 0
    %3210 = vmatpush2.bf16.msra.mxu0 0
    %3211 = vmatprep.subr.bf16.mxu0 0
    %3212 = vmatpush2.bf16.msra.mxu0 0
    %3213 = vmatprep.subr.bf16.mxu0 0
    %3214 = vmatpush2.bf16.msra.mxu0 0
    %3215 = vmatprep.subr.bf16.mxu0 0
    %3216 = vmatpush2.bf16.msra.mxu0 0
    %3217 = vmatprep.subr.bf16.mxu0 0
    %3218 = vmatpush2.bf16.msra.mxu0 0
    %3219 = vmatprep.subr.bf16.mxu0 0
    %3220 = vmatpush2.bf16.msra.mxu0 0
    %3221 = vmatprep.subr.bf16.mxu0 0
    %3222 = vmatpush2.bf16.msra.mxu0 0
    %3223 = vmatprep.subr.bf16.mxu0 0
    %3224 = vmatpush2.bf16.msra.mxu0 0
    %3225 = vmatprep.mubr.bf16.mxu0 0
    %3226 = vmatmul.mubr.bf16.gmra.mxu0 %v3191
    %v3227 = vpop.f32.mrf.mxu0
    %v3228 = vadd.f32 0.0, %v3227
    %v3229 = vpop.f32.mrf.mxu0
    %v3230 = vpop.f32.mrf.mxu0
    %v3231 = vpop.f32.mrf.mxu0
    %3232 = vdwg.mxu0
    %v3234 = vsel %vm2262, %v3066, 0
    %3236 = vmatprep.subr.bf16.mxu0 0
    %3237 = vmatpush1.bf16.msra.mxu0 0
    %3238 = vmatprep.subr.bf16.mxu0 0
    %3239 = vmatpush1.bf16.msra.mxu0 0
    %3240 = vmatprep.subr.bf16.mxu0 0
    %3241 = vmatpush1.bf16.msra.mxu0 0
    %3242 = vmatprep.subr.bf16.mxu0 0
    %3243 = vmatpush1.bf16.msra.mxu0 0
    %3244 = vmatprep.subr.bf16.mxu0 0
    %3245 = vmatpush1.bf16.msra.mxu0 0
    %3246 = vmatprep.subr.bf16.mxu0 0
    %3247 = vmatpush1.bf16.msra.mxu0 0
    %3248 = vmatprep.subr.bf16.mxu0 0
    %3249 = vmatpush1.bf16.msra.mxu0 0
    %3250 = vmatprep.subr.bf16.mxu0 0
    %3251 = vmatpush1.bf16.msra.mxu0 %v2556
    %3252 = vmatprep.subr.bf16.mxu0 0
    %3253 = vmatpush2.bf16.msra.mxu0 0
    %3254 = vmatprep.subr.bf16.mxu0 0
    %3255 = vmatpush2.bf16.msra.mxu0 0
    %3256 = vmatprep.subr.bf16.mxu0 0
    %3257 = vmatpush2.bf16.msra.mxu0 0
    %3258 = vmatprep.subr.bf16.mxu0 0
    %3259 = vmatpush2.bf16.msra.mxu0 0
    %3260 = vmatprep.subr.bf16.mxu0 0
    %3261 = vmatpush2.bf16.msra.mxu0 0
    %3262 = vmatprep.subr.bf16.mxu0 0
    %3263 = vmatpush2.bf16.msra.mxu0 0
    %3264 = vmatprep.subr.bf16.mxu0 0
    %3265 = vmatpush2.bf16.msra.mxu0 0
    %3266 = vmatprep.subr.bf16.mxu0 0
    %3267 = vmatpush2.bf16.msra.mxu0 0
    %3268 = vmatprep.mubr.bf16.mxu0 0
    %3269 = vmatmul.mubr.bf16.gmra.mxu0 %v3234
    %v3270 = vpop.f32.mrf.mxu0
    %v3271 = vadd.f32 %v3228, %v3270
    %v3272 = vpop.f32.mrf.mxu0
    %v3273 = vpop.f32.mrf.mxu0
    %v3274 = vpop.f32.mrf.mxu0
    %3275 = vdwg.mxu0
    %v3277 = vrot.slane %v1378, 4
    %v3279 = vsel %vm2262, %v3277, 0
    %v3282 = vsel %vm2262, %v1573, 0
    %v3285 = vsel %vm2262, %v1574, 0
    %v3288 = vsel %vm2262, %v1575, 0
    %v3291 = vsel %vm2262, %v1576, 0
    %v3294 = vsel %vm2262, %v1577, 0
    %v3297 = vsel %vm2262, %v1578, 0
    %v3300 = vsel %vm2262, %v1579, 0
    %v3303 = vsel %vm2262, %v1580, 0
    %3305 = vmatprep.subr.bf16.mxu0 0
    %3306 = vmatpush1.bf16.xpose.msra.mxu0 %v3303
    %3307 = vmatprep.subr.bf16.mxu0 0
    %3308 = vmatpush1.bf16.xpose.msra.mxu0 %v3300
    %3309 = vmatprep.subr.bf16.mxu0 0
    %3310 = vmatpush1.bf16.xpose.msra.mxu0 %v3297
    %3311 = vmatprep.subr.bf16.mxu0 0
    %3312 = vmatpush1.bf16.xpose.msra.mxu0 %v3294
    %3313 = vmatprep.subr.bf16.mxu0 0
    %3314 = vmatpush1.bf16.xpose.msra.mxu0 %v3291
    %3315 = vmatprep.subr.bf16.mxu0 0
    %3316 = vmatpush1.bf16.xpose.msra.mxu0 %v3288
    %3317 = vmatprep.subr.bf16.mxu0 0
    %3318 = vmatpush1.bf16.xpose.msra.mxu0 %v3285
    %3319 = vmatprep.subr.bf16.mxu0 0
    %3320 = vmatpush1.bf16.xpose.msra.mxu0 %v3282
    %3321 = vmatprep.subr.bf16.mxu0 0
    %3322 = vmatpush2.bf16.xpose.msra.mxu0 0
    %3323 = vmatprep.subr.bf16.mxu0 0
    %3324 = vmatpush2.bf16.xpose.msra.mxu0 0
    %3325 = vmatprep.subr.bf16.mxu0 0
    %3326 = vmatpush2.bf16.xpose.msra.mxu0 0
    %3327 = vmatprep.subr.bf16.mxu0 0
    %3328 = vmatpush2.bf16.xpose.msra.mxu0 0
    %3329 = vmatprep.subr.bf16.mxu0 0
    %3330 = vmatpush2.bf16.xpose.msra.mxu0 0
    %3331 = vmatprep.subr.bf16.mxu0 0
    %3332 = vmatpush2.bf16.xpose.msra.mxu0 0
    %3333 = vmatprep.subr.bf16.mxu0 0
    %3334 = vmatpush2.bf16.xpose.msra.mxu0 0
    %3335 = vmatprep.subr.bf16.mxu0 0
    %3336 = vmatpush2.bf16.xpose.msra.mxu0 0
    %3337 = vmatprep.mubr.bf16.mxu0 0
    %3338 = vmatmul.mubr.bf16.gmra.mxu0 %v3279
    %v3339 = vpop.f32.mrf.mxu0
    %v3340 = vadd.f32 0.0, %v3339
    %v3341 = vpop.f32.mrf.mxu0
    %v3342 = vpop.f32.mrf.mxu0
    %v3343 = vpop.f32.mrf.mxu0
    %3344 = vdwg.mxu0
    %v3345 = vsel %vm2260, -1e+30, %v3340
    %3346 = vmax.xlane.f32.xlu0 %v3345
    %v3347 = vpop.xlane.xlu0 %3346
    %v3348 = vsub.f32 %v3345, %v3347
    %v3349 = vmul.f32 %v3348, 1.442695
    %v3350 = vpow.pop %v3349
    %3351 = vadd.xlane.f32.xlu0 %v3350
    %v3352 = vpop.xlane.xlu0 %3351
    %v3353 = vrcp.pop %v3352
    %v3354 = vmul.f32 1.0, %v3353
    %v3355 = vmul.f32 %v3350, %v3354
    %v3356 = vadd.f32 %v3147, %v3355
    %v3357 = vpack.c.bf16 %v3355, %v3355
    %3358 = vmatprep.subr.bf16.mxu0 0
    %3359 = vmatpush1.bf16.msra.mxu0 %v1782
    %3360 = vmatprep.subr.bf16.mxu0 0
    %3361 = vmatpush1.bf16.msra.mxu0 %v1781
    %3362 = vmatprep.subr.bf16.mxu0 0
    %3363 = vmatpush1.bf16.msra.mxu0 %v1780
    %3364 = vmatprep.subr.bf16.mxu0 0
    %3365 = vmatpush1.bf16.msra.mxu0 %v1779
    %3366 = vmatprep.subr.bf16.mxu0 0
    %3367 = vmatpush1.bf16.msra.mxu0 %v1778
    %3368 = vmatprep.subr.bf16.mxu0 0
    %3369 = vmatpush1.bf16.msra.mxu0 %v1777
    %3370 = vmatprep.subr.bf16.mxu0 0
    %3371 = vmatpush1.bf16.msra.mxu0 %v1776
    %3372 = vmatprep.subr.bf16.mxu0 0
    %3373 = vmatpush1.bf16.msra.mxu0 %v1775
    %3374 = vmatprep.subr.bf16.mxu0 0
    %3375 = vmatpush2.bf16.msra.mxu0 0
    %3376 = vmatprep.subr.bf16.mxu0 0
    %3377 = vmatpush2.bf16.msra.mxu0 0
    %3378 = vmatprep.subr.bf16.mxu0 0
    %3379 = vmatpush2.bf16.msra.mxu0 0
    %3380 = vmatprep.subr.bf16.mxu0 0
    %3381 = vmatpush2.bf16.msra.mxu0 0
    %3382 = vmatprep.subr.bf16.mxu0 0
    %3383 = vmatpush2.bf16.msra.mxu0 0
    %3384 = vmatprep.subr.bf16.mxu0 0
    %3385 = vmatpush2.bf16.msra.mxu0 0
    %3386 = vmatprep.subr.bf16.mxu0 0
    %3387 = vmatpush2.bf16.msra.mxu0 0
    %3388 = vmatprep.subr.bf16.mxu0 0
    %3389 = vmatpush2.bf16.msra.mxu0 0
    %3390 = vmatprep.mubr.bf16.mxu0 0
    %3391 = vmatmul.mubr.bf16.gmra.mxu0 %v3357
    %v3392 = vpop.f32.mrf.mxu0
    %v3393 = vadd.f32 0.0, %v3392
    %v3394 = vpop.f32.mrf.mxu0
    %v3395 = vpop.f32.mrf.mxu0
    %v3396 = vpop.f32.mrf.mxu0
    %3397 = vdwg.mxu0
    %v3398 = vpack.c.bf16 %v3393, %v3393
    %v3400 = vsel %vm2262, %v3398, 0
    %3402 = vmatprep.subr.bf16.mxu0 0
    %3403 = vmatpush1.bf16.msra.mxu0 0
    %3404 = vmatprep.subr.bf16.mxu0 0
    %3405 = vmatpush1.bf16.msra.mxu0 0
    %3406 = vmatprep.subr.bf16.mxu0 0
    %3407 = vmatpush1.bf16.msra.mxu0 0
    %3408 = vmatprep.subr.bf16.mxu0 0
    %3409 = vmatpush1.bf16.msra.mxu0 0
    %3410 = vmatprep.subr.bf16.mxu0 0
    %3411 = vmatpush1.bf16.msra.mxu0 0
    %3412 = vmatprep.subr.bf16.mxu0 0
    %3413 = vmatpush1.bf16.msra.mxu0 0
    %3414 = vmatprep.subr.bf16.mxu0 0
    %3415 = vmatpush1.bf16.msra.mxu0 0
    %3416 = vmatprep.subr.bf16.mxu0 0
    %3417 = vmatpush1.bf16.msra.mxu0 %v2723
    %3418 = vmatprep.subr.bf16.mxu0 0
    %3419 = vmatpush2.bf16.msra.mxu0 0
    %3420 = vmatprep.subr.bf16.mxu0 0
    %3421 = vmatpush2.bf16.msra.mxu0 0
    %3422 = vmatprep.subr.bf16.mxu0 0
    %3423 = vmatpush2.bf16.msra.mxu0 0
    %3424 = vmatprep.subr.bf16.mxu0 0
    %3425 = vmatpush2.bf16.msra.mxu0 0
    %3426 = vmatprep.subr.bf16.mxu0 0
    %3427 = vmatpush2.bf16.msra.mxu0 0
    %3428 = vmatprep.subr.bf16.mxu0 0
    %3429 = vmatpush2.bf16.msra.mxu0 0
    %3430 = vmatprep.subr.bf16.mxu0 0
    %3431 = vmatpush2.bf16.msra.mxu0 0
    %3432 = vmatprep.subr.bf16.mxu0 0
    %3433 = vmatpush2.bf16.msra.mxu0 0
    %3434 = vmatprep.mubr.bf16.mxu0 0
    %3435 = vmatmul.mubr.bf16.gmra.mxu0 %v3400
    %v3436 = vpop.f32.mrf.mxu0
    %v3437 = vadd.f32 0.0, %v3436
    %v3438 = vpop.f32.mrf.mxu0
    %v3439 = vpop.f32.mrf.mxu0
    %v3440 = vpop.f32.mrf.mxu0
    %3441 = vdwg.mxu0
    %v3442 = vadd.f32 %v3271, %v3437
    %v3444 = vrot.slane %v1851, 4
    %v3446 = vsel %vm2262, %v3444, 0
    %v3449 = vsel %vm2262, %v2046, 0
    %v3452 = vsel %vm2262, %v2047, 0
    %v3455 = vsel %vm2262, %v2048, 0
    %v3458 = vsel %vm2262, %v2049, 0
    %v3461 = vsel %vm2262, %v2050, 0
    %v3464 = vsel %vm2262, %v2051, 0
    %v3467 = vsel %vm2262, %v2052, 0
    %v3470 = vsel %vm2262, %v2053, 0
    %3472 = vmatprep.subr.bf16.mxu0 0
    %3473 = vmatpush1.bf16.xpose.msra.mxu0 %v3470
    %3474 = vmatprep.subr.bf16.mxu0 0
    %3475 = vmatpush1.bf16.xpose.msra.mxu0 %v3467
    %3476 = vmatprep.subr.bf16.mxu0 0
    %3477 = vmatpush1.bf16.xpose.msra.mxu0 %v3464
    %3478 = vmatprep.subr.bf16.mxu0 0
    %3479 = vmatpush1.bf16.xpose.msra.mxu0 %v3461
    %3480 = vmatprep.subr.bf16.mxu0 0
    %3481 = vmatpush1.bf16.xpose.msra.mxu0 %v3458
    %3482 = vmatprep.subr.bf16.mxu0 0
    %3483 = vmatpush1.bf16.xpose.msra.mxu0 %v3455
    %3484 = vmatprep.subr.bf16.mxu0 0
    %3485 = vmatpush1.bf16.xpose.msra.mxu0 %v3452
    %3486 = vmatprep.subr.bf16.mxu0 0
    %3487 = vmatpush1.bf16.xpose.msra.mxu0 %v3449
    %3488 = vmatprep.subr.bf16.mxu0 0
    %3489 = vmatpush2.bf16.xpose.msra.mxu0 0
    %3490 = vmatprep.subr.bf16.mxu0 0
    %3491 = vmatpush2.bf16.xpose.msra.mxu0 0
    %3492 = vmatprep.subr.bf16.mxu0 0
    %3493 = vmatpush2.bf16.xpose.msra.mxu0 0
    %3494 = vmatprep.subr.bf16.mxu0 0
    %3495 = vmatpush2.bf16.xpose.msra.mxu0 0
    %3496 = vmatprep.subr.bf16.mxu0 0
    %3497 = vmatpush2.bf16.xpose.msra.mxu0 0
    %3498 = vmatprep.subr.bf16.mxu0 0
    %3499 = vmatpush2.bf16.xpose.msra.mxu0 0
    %3500 = vmatprep.subr.bf16.mxu0 0
    %3501 = vmatpush2.bf16.xpose.msra.mxu0 0
    %3502 = vmatprep.subr.bf16.mxu0 0
    %3503 = vmatpush2.bf16.xpose.msra.mxu0 0
    %3504 = vmatprep.mubr.bf16.mxu0 0
    %3505 = vmatmul.mubr.bf16.gmra.mxu0 %v3446
    %v3506 = vpop.f32.mrf.mxu0
    %v3507 = vadd.f32 0.0, %v3506
    %v3508 = vpop.f32.mrf.mxu0
    %v3509 = vpop.f32.mrf.mxu0
    %v3510 = vpop.f32.mrf.mxu0
    %3511 = vdwg.mxu0
    %v3512 = vsel %vm2260, -1e+30, %v3507
    %3513 = vmax.xlane.f32.xlu0 %v3512
    %v3514 = vpop.xlane.xlu0 %3513
    %v3515 = vsub.f32 %v3512, %v3514
    %v3516 = vmul.f32 %v3515, 1.442695
    %v3517 = vpow.pop %v3516
    %3518 = vadd.xlane.f32.xlu0 %v3517
    %v3519 = vpop.xlane.xlu0 %3518
    %v3520 = vrcp.pop %v3519
    %v3521 = vmul.f32 1.0, %v3520
    %v3522 = vmul.f32 %v3517, %v3521
    %v3523 = vadd.f32 %v3356, %v3522
    %v3524 = vpack.c.bf16 %v3522, %v3522
    %3525 = vmatprep.subr.bf16.mxu0 0
    %3526 = vmatpush1.bf16.msra.mxu0 %v2255
    %3527 = vmatprep.subr.bf16.mxu0 0
    %3528 = vmatpush1.bf16.msra.mxu0 %v2254
    %3529 = vmatprep.subr.bf16.mxu0 0
    %3530 = vmatpush1.bf16.msra.mxu0 %v2253
    %3531 = vmatprep.subr.bf16.mxu0 0
    %3532 = vmatpush1.bf16.msra.mxu0 %v2252
    %3533 = vmatprep.subr.bf16.mxu0 0
    %3534 = vmatpush1.bf16.msra.mxu0 %v2251
    %3535 = vmatprep.subr.bf16.mxu0 0
    %3536 = vmatpush1.bf16.msra.mxu0 %v2250
    %3537 = vmatprep.subr.bf16.mxu0 0
    %3538 = vmatpush1.bf16.msra.mxu0 %v2249
    %3539 = vmatprep.subr.bf16.mxu0 0
    %3540 = vmatpush1.bf16.msra.mxu0 %v2248
    %3541 = vmatprep.subr.bf16.mxu0 0
    %3542 = vmatpush2.bf16.msra.mxu0 0
    %3543 = vmatprep.subr.bf16.mxu0 0
    %3544 = vmatpush2.bf16.msra.mxu0 0
    %3545 = vmatprep.subr.bf16.mxu0 0
    %3546 = vmatpush2.bf16.msra.mxu0 0
    %3547 = vmatprep.subr.bf16.mxu0 0
    %3548 = vmatpush2.bf16.msra.mxu0 0
    %3549 = vmatprep.subr.bf16.mxu0 0
    %3550 = vmatpush2.bf16.msra.mxu0 0
    %3551 = vmatprep.subr.bf16.mxu0 0
    %3552 = vmatpush2.bf16.msra.mxu0 0
    %3553 = vmatprep.subr.bf16.mxu0 0
    %3554 = vmatpush2.bf16.msra.mxu0 0
    %3555 = vmatprep.subr.bf16.mxu0 0
    %3556 = vmatpush2.bf16.msra.mxu0 0
    %3557 = vmatprep.mubr.bf16.mxu0 0
    %3558 = vmatmul.mubr.bf16.gmra.mxu0 %v3524
    %v3559 = vpop.f32.mrf.mxu0
    %v3560 = vadd.f32 0.0, %v3559
    %v3561 = vpop.f32.mrf.mxu0
    %v3562 = vpop.f32.mrf.mxu0
    %v3563 = vpop.f32.mrf.mxu0
    %3564 = vdwg.mxu0
    %v3565 = vpack.c.bf16 %v3560, %v3560
    %v3567 = vsel %vm2262, %v3565, 0
    %3569 = vmatprep.subr.bf16.mxu0 0
    %3570 = vmatpush1.bf16.msra.mxu0 0
    %3571 = vmatprep.subr.bf16.mxu0 0
    %3572 = vmatpush1.bf16.msra.mxu0 0
    %3573 = vmatprep.subr.bf16.mxu0 0
    %3574 = vmatpush1.bf16.msra.mxu0 0
    %3575 = vmatprep.subr.bf16.mxu0 0
    %3576 = vmatpush1.bf16.msra.mxu0 0
    %3577 = vmatprep.subr.bf16.mxu0 0
    %3578 = vmatpush1.bf16.msra.mxu0 0
    %3579 = vmatprep.subr.bf16.mxu0 0
    %3580 = vmatpush1.bf16.msra.mxu0 0
    %3581 = vmatprep.subr.bf16.mxu0 0
    %3582 = vmatpush1.bf16.msra.mxu0 0
    %3583 = vmatprep.subr.bf16.mxu0 0
    %3584 = vmatpush1.bf16.msra.mxu0 %v2891
    %3585 = vmatprep.subr.bf16.mxu0 0
    %3586 = vmatpush2.bf16.msra.mxu0 0
    %3587 = vmatprep.subr.bf16.mxu0 0
    %3588 = vmatpush2.bf16.msra.mxu0 0
    %3589 = vmatprep.subr.bf16.mxu0 0
    %3590 = vmatpush2.bf16.msra.mxu0 0
    %3591 = vmatprep.subr.bf16.mxu0 0
    %3592 = vmatpush2.bf16.msra.mxu0 0
    %3593 = vmatprep.subr.bf16.mxu0 0
    %3594 = vmatpush2.bf16.msra.mxu0 0
    %3595 = vmatprep.subr.bf16.mxu0 0
    %3596 = vmatpush2.bf16.msra.mxu0 0
    %3597 = vmatprep.subr.bf16.mxu0 0
    %3598 = vmatpush2.bf16.msra.mxu0 0
    %3599 = vmatprep.subr.bf16.mxu0 0
    %3600 = vmatpush2.bf16.msra.mxu0 0
    %3601 = vmatprep.mubr.bf16.mxu0 0
    %3602 = vmatmul.mubr.bf16.gmra.mxu0 %v3567
    %v3603 = vpop.f32.mrf.mxu0
    %v3604 = vadd.f32 0.0, %v3603
    %v3605 = vpop.f32.mrf.mxu0
    %v3606 = vpop.f32.mrf.mxu0
    %v3607 = vpop.f32.mrf.mxu0
    %3608 = vdwg.mxu0
    %v3609 = vadd.f32 %v3442, %v3604
    %v3610 = vadd.f32 %v3609, %v2938
    %s3611 = scalar_lea.vmem %s11, 8
    %3612 = vst [vmem:[%s3611] sm:$0xff] %v3610
    %v3613 = vmul.f32 %v3523, 0.25
    %s3614 = scalar_lea.vmem [#allocation2], 8
    %3615 = vst [vmem:[%s3614] sm:$0xff] %v3613
    // Predicated region
    $region46: #{lora_mha_forward.1} parent=1 // pred_check
      _
    $region47: #{lora_mha_forward.1} parent=1 // pred_check_branch
      %3617 = sbr.rel (0) target = $region49
    $region48: #{lora_mha_forward.1} parent=1 // pred_region
      _
    $region49: #{lora_mha_forward.1} parent=1 // pred_fallthru
      _
    // Predicated region
    $region50: #{lora_mha_forward.1} parent=1 // pred_check
      _
    $region51: #{lora_mha_forward.1} parent=1 // pred_check_branch
      %3619 = sbr.rel (0) target = $region53
    $region52: #{lora_mha_forward.1} parent=1 // pred_region
      %s3621 = ssub.s32 256, 256
      %3622 = vsyncadd [#allocation3], %s3621
      %s3623 = sshll.u32 [#allocation2], 4
      %s3624 = int_to_ptr.vmem [resolvable:$true] %s3623
      %3629 = dma.vmem_to_hbm [thread:$0]  %s3624, 256, %s12, [#allocation3], 128, 128, 8
    $region53: #{lora_mha_forward.1} parent=1 // pred_fallthru
      _
    // Predicated region
    $region54: #{lora_mha_forward.1} parent=1 // pred_check
      _
    $region55: #{lora_mha_forward.1} parent=1 // pred_check_branch
      %3631 = sbr.rel (0) target = $region57
    $region56: #{lora_mha_forward.1} parent=1 // pred_region
      _
    $region57: #{lora_mha_forward.1} parent=1 // pred_fallthru
      _
    // Predicated region
    $region58: #{lora_mha_forward.1} parent=1 // pred_check
      _
    $region59: #{lora_mha_forward.1} parent=1 // pred_check_branch
      %3633 = sbr.rel (0) target = $region61
    $region60: #{lora_mha_forward.1} parent=1 // pred_region
      %3634 = dma.done [#allocation3], 256
    $region61: #{lora_mha_forward.1} parent=1 // pred_fallthru
      _
    %3635 = vsyncpa [#allocation3], 1

</llo_original>
